<compile_context>
chip_gen: v5e
topology: v5e:2x2
jax: 0.10.0
libtpu: 0.0.40
codegen_flags: <defaults>
</compile_context>

<pallas_src>
import functools

import jax
import jax.numpy as jnp
from jax.experimental import pallas as pl
from jax.experimental.pallas import tpu as pltpu


# ---------------------------------------------------------------------------
# Fused Tree kernel — one grid step == one batch element
# ---------------------------------------------------------------------------
def _tree_kernel(x_ref, w11_ref, w12_ref, w21_ref, w22_ref, wpr_ref,
                 wr2_ref, wr1_ref, wrb_ref, b_ref, o_ref,
                 xpad_ref, apad_ref, *, level_root, root_residual, has_project):
    """x_ref:     (4, Ho, Wo, Cin)  parity planes of the input (p = 2*py + px)
       w11_ref:   (9, Cin, Co)      tree1.conv1 (3x3, stride 2), bf16, BN folded
       w12/21/22: (9, Co, Co)       stride-1 3x3 convs, bf16, BN folded
       wpr_ref:   (Cin, Co)         project 1x1, bf16
       wr2/wr1:   (Co, Co)          root 1x1 weight rows for x2 / x1, bf16
       wrb_ref:   (Cin, Co)         root 1x1 weight rows for `bottom`, bf16
       b_ref:     (6, Co) f32       biases [t1.bn1, t1.bn2, t2.bn1, t2.bn2, proj, root]
       o_ref:     (Ho*Wo, Co) f32   NHWC-flattened output for this batch element
       xpad_ref:  VMEM (4, Ho+1, Wo+1, Cin)  top/left zero-padded parity planes
       apad_ref:  VMEM (Ho+2, Wo+2, Co)      zero-padded stride-1 conv staging"""
    _, Ho, Wo, Cin = x_ref.shape
    Co = o_ref.shape[-1]
    M = Ho * Wo
    f32, bf16 = jnp.float32, jnp.bfloat16

    def bias(k):                                    # (1, Co) f32
        return b_ref[k:k + 1, :]

    def mm(a, w):                                   # bf16 MXU dot, f32 acc
        return jnp.dot(a.astype(bf16), w, preferred_element_type=f32)

    # Zero the padded scratch once; only the interiors are rewritten below.
    xpad_ref[...] = jnp.zeros_like(xpad_ref)
    apad_ref[...] = jnp.zeros_like(apad_ref)
    for p in range(4):
        xpad_ref[p, 1:, 1:, :] = x_ref[p]

    # ---- MaxPool2d(2, 2): elementwise max of the four parity planes -------
    bottom = jnp.maximum(
        jnp.maximum(x_ref[0].reshape(M, Cin), x_ref[1].reshape(M, Cin)),
        jnp.maximum(x_ref[2].reshape(M, Cin), x_ref[3].reshape(M, Cin)))

    # ---- project: 1x1 conv + BN (no ReLU)  ->  residual for tree1 ---------
    if has_project:
        residual = mm(bottom, wpr_ref[...]) + bias(4)
    else:
        residual = bottom                           # only valid when Cin == Co

    # ---- tree1.conv1: 3x3 / stride-2 conv + BN + ReLU ----------------------
    # Tap (dy, dx) of a stride-2, pad-1 conv reads parity plane (dy&1, dx&1)
    # at row offset 0 (dy == -1, touches the zero pad) or 1 (dy >= 0); ditto dx.
    acc = jnp.zeros((M, Co), f32)
    t = 0
    for dy in (-1, 0, 1):
        py, r0 = dy & 1, (0 if dy < 0 else 1)
        for dx in (-1, 0, 1):
            px, c0 = dx & 1, (0 if dx < 0 else 1)
            patch = xpad_ref[2 * py + px, r0:r0 + Ho, c0:c0 + Wo, :]
            acc = acc + mm(patch.reshape(M, Cin), w11_ref[t])
            t += 1
    t1a = jnp.maximum(acc + bias(0), 0.0)

    # ---- shared stride-1 3x3 conv (+ folded-BN bias), VMEM resident --------
    def conv3x3_s1(a2d, w_ref, b):
        apad_ref[1:Ho + 1, 1:Wo + 1, :] = a2d.reshape(Ho, Wo, Co)
        s = jnp.zeros((M, Co), f32)
        for tt in range(9):
            ky, kx = tt // 3, tt % 3
            patch = apad_ref[ky:ky + Ho, kx:kx + Wo, :]
            s = s + mm(patch.reshape(M, Co), w_ref[tt])
        return s + b

    # ---- tree1 (BasicBlock, residual = projected bottom) -------------------
    x1 = jnp.maximum(conv3x3_s1(t1a, w12_ref, bias(1)) + residual, 0.0)

    # ---- tree2 (BasicBlock, residual = its own input x1) -------------------
    t2a = jnp.maximum(conv3x3_s1(x1, w21_ref, bias(2)), 0.0)
    x2 = jnp.maximum(conv3x3_s1(t2a, w22_ref, bias(3)) + x1, 0.0)

    # ---- root: 1x1 conv over cat([x2, x1, bottom]) + BN (+x2) + ReLU -------
    # The channel concat is avoided by splitting the root weight matrix rows.
    out = mm(x2, wr2_ref[...]) + mm(x1, wr1_ref[...]) + bias(5)
    if level_root:
        out = out + mm(bottom, wrb_ref[...])
    if root_residual:
        out = out + x2
    o_ref[...] = jnp.maximum(out, 0.0).astype(o_ref.dtype)


# ---------------------------------------------------------------------------
# Weight prep: fold eval-mode BN into conv weights, convert layouts
# ---------------------------------------------------------------------------
def _fold3x3(w_oihw, scale):
    """PyTorch OIHW 3x3 weight -> (9, Cin, Cout) bf16 with BN scale folded."""
    w = jnp.transpose(w_oihw, (2, 3, 1, 0)) * scale            # (3,3,Ci,Co)
    return w.reshape(9, w.shape[2], w.shape[3]).astype(jnp.bfloat16)


def _fold1x1(w_oihw, scale):
    """PyTorch OIHW 1x1 weight -> (Cin, Cout) bf16 with BN scale folded."""
    return (w_oihw[:, :, 0, 0].T * scale).astype(jnp.bfloat16)


# ---------------------------------------------------------------------------
# Public forward: Tree(levels=1, BasicBlock, stride=2) — NCHW in, NCHW out
# ---------------------------------------------------------------------------
def tree_forward(params, x_nchw, *, level_root=True, root_residual=False):
    N, Cin, H, W = x_nchw.shape
    Co = params['root_w'].shape[0]                             # planes
    assert H % 2 == 0 and W % 2 == 0
    Ho, Wo, M = H // 2, W // 2, (H // 2) * (W // 2)
    has_project = 'proj_w' in params

    # input: NCHW -> parity planes (N, 2*py+px, Ho, Wo, Cin)  (one transpose)
    xp = x_nchw.reshape(N, Cin, Ho, 2, Wo, 2)
    xp = jnp.transpose(xp, (0, 3, 5, 2, 4, 1)).reshape(N, 4, Ho, Wo, Cin)

    # fold BN into weights, cast to bf16, pre-split the root weight rows
    w11 = _fold3x3(params['tree1']['w1'], params['tree1']['bn1'][0])
    w12 = _fold3x3(params['tree1']['w2'], params['tree1']['bn2'][0])
    w21 = _fold3x3(params['tree2']['w1'], params['tree2']['bn1'][0])
    w22 = _fold3x3(params['tree2']['w2'], params['tree2']['bn2'][0])
    wrt = _fold1x1(params['root_w'], params['root_bn'][0])     # (root_dim, Co)
    wr2, wr1 = wrt[:Co], wrt[Co:2 * Co]
    wrb = (wrt[2 * Co:2 * Co + Cin] if level_root
           else jnp.zeros((Cin, Co), jnp.bfloat16))
    wpr = (_fold1x1(params['proj_w'], params['proj_bn'][0]) if has_project
           else jnp.zeros((Cin, Co), jnp.bfloat16))
    zeros_b = jnp.zeros((Co,), jnp.float32)
    biases = jnp.stack([
        params['tree1']['bn1'][1], params['tree1']['bn2'][1],
        params['tree2']['bn1'][1], params['tree2']['bn2'][1],
        params['proj_bn'][1] if has_project else zeros_b,
        params['root_bn'][1]]).astype(jnp.float32)             # (6, Co)

    kern = functools.partial(_tree_kernel, level_root=level_root,
                             root_residual=root_residual,
                             has_project=has_project)
    b2 = lambda i: (0, 0)
    b3 = lambda i: (0, 0, 0)
    out = pl.pallas_call(
        kern,
        out_shape=jax.ShapeDtypeStruct((N, M, Co), jnp.float32),
        grid=(N,),
        in_specs=[
            pl.BlockSpec((None, 4, Ho, Wo, Cin), lambda i: (i, 0, 0, 0, 0)),
            pl.BlockSpec((9, Cin, Co), b3),
            pl.BlockSpec((9, Co, Co), b3),
            pl.BlockSpec((9, Co, Co), b3),
            pl.BlockSpec((9, Co, Co), b3),
            pl.BlockSpec((Cin, Co), b2),
            pl.BlockSpec((Co, Co), b2),
            pl.BlockSpec((Co, Co), b2),
            pl.BlockSpec((Cin, Co), b2),
            pl.BlockSpec((6, Co), b2),
        ],
        out_specs=pl.BlockSpec((None, M, Co), lambda i: (i, 0, 0)),
        scratch_shapes=[pltpu.VMEM((4, Ho + 1, Wo + 1, Cin), jnp.float32),
                        pltpu.VMEM((Ho + 2, Wo + 2, Co), jnp.float32)],
        compiler_params=pltpu.CompilerParams(
            dimension_semantics=("parallel",)),
    )(xp, w11, w12, w21, w22, wpr, wr2, wr1, wrb, biases)

    return jnp.transpose(out.reshape(N, Ho, Wo, Co), (0, 3, 1, 2))  # NCHW


# ---------------------------------------------------------------------------
# Deterministic parameter init (synthetic — no checkpoint loading)
# ---------------------------------------------------------------------------
def _init_conv(key, cout, cin, k):
    fan_in = cin * k * k
    return jax.random.normal(key, (cout, cin, k, k), jnp.float32) / jnp.sqrt(fan_in)


def _init_bn(key, c, eps=1e-5):
    k1, k2, k3, k4 = jax.random.split(key, 4)
    gamma = 1.0 + 0.1 * jax.random.normal(k1, (c,), jnp.float32)
    beta = 0.1 * jax.random.normal(k2, (c,), jnp.float32)
    mean = 0.1 * jax.random.normal(k3, (c,), jnp.float32)
    var = jnp.abs(jax.random.normal(k4, (c,), jnp.float32)) * 0.1 + 1.0
    scale = gamma * jax.lax.rsqrt(var + eps)        # folded eval-mode BN
    bias = beta - mean * scale
    return scale, bias


def init_basic_block(key, cin, cout):
    ks = jax.random.split(key, 4)
    return dict(w1=_init_conv(ks[0], cout, cin, 3), bn1=_init_bn(ks[1], cout),
                w2=_init_conv(ks[2], cout, cout, 3), bn2=_init_bn(ks[3], cout))


def init_tree(key, inplanes, planes, level_root):
    root_dim = 2 * planes + (inplanes if level_root else 0)
    ks = jax.random.split(key, 6)
    params = dict(
        tree1=init_basic_block(ks[0], inplanes, planes),
        tree2=init_basic_block(ks[1], planes, planes),
        root_w=_init_conv(ks[2], planes, root_dim, 1),
        root_bn=_init_bn(ks[3], planes),
    )
    if inplanes != planes:
        params['proj_w'] = _init_conv(ks[4], planes, inplanes, 1)
        params['proj_bn'] = _init_bn(ks[5], planes)
    return params


# ---------------------------------------------------------------------------
# Independent pure-XLA reference (f32) mirroring the PyTorch Tree exactly
# ---------------------------------------------------------------------------
def _ref_conv(x, w_oihw, scale, bias, stride=1, relu=True, residual=None):
    w = jnp.transpose(w_oihw, (2, 3, 1, 0))          # HWIO
    pad = (w.shape[0] - 1) // 2
    y = jax.lax.conv_general_dilated(
        x, w, window_strides=(stride, stride),
        padding=((pad, pad), (pad, pad)),
        dimension_numbers=('NHWC', 'HWIO', 'NHWC'))
    y = y * scale + bias
    if residual is not None:
        y = y + residual
    return jnp.maximum(y, 0.0) if relu else y


def tree_forward_ref(params, x_nchw, *, level_root=True, root_residual=False):
    x = jnp.transpose(x_nchw, (0, 2, 3, 1))          # NHWC
    N, H, W, Cin = x.shape
    bottom = jnp.max(x.reshape(N, H // 2, 2, W // 2, 2, Cin), axis=(2, 4))
    if 'proj_w' in params:
        residual = _ref_conv(bottom, params['proj_w'], *params['proj_bn'],
                             stride=1, relu=False)
    else:
        residual = bottom
    t1, t2 = params['tree1'], params['tree2']
    a = _ref_conv(x, t1['w1'], *t1['bn1'], stride=2, relu=True)
    x1 = _ref_conv(a, t1['w2'], *t1['bn2'], stride=1, relu=True, residual=residual)
    a = _ref_conv(x1, t2['w1'], *t2['bn1'], stride=1, relu=True)
    x2 = _ref_conv(a, t2['w2'], *t2['bn2'], stride=1, relu=True, residual=x1)
    cat = jnp.concatenate([x2, x1] + ([bottom] if level_root else []), axis=-1)
    out = _ref_conv(cat, params['root_w'], *params['root_bn'], stride=1,
                    relu=True, residual=x2 if root_residual else None)
    return jnp.transpose(out, (0, 3, 1, 2))


# ---------------------------------------------------------------------------
if __name__ == "__main__":
    key = jax.random.PRNGKey(0)
    kx, kp = jax.random.split(key)

    # Tree(levels=1, BasicBlock, inplanes=4, planes=8, stride=2, level_root=True)
    inplanes, planes = 4, 8
    x_nchw = jax.random.normal(kx, (2, inplanes, 16, 16), jnp.float32)
    params = init_tree(kp, inplanes, planes, level_root=True)

    fwd = jax.jit(functools.partial(tree_forward, level_root=True,
                                    root_residual=False))
    out = fwd(params, x_nchw)
    jax.block_until_ready(out)
    assert out.shape == (2, planes, 8, 8)

    # sanity-check the fused kernel against the independent XLA reference
    ref = tree_forward_ref(params, x_nchw, level_root=True, root_residual=False)
    max_err = float(jnp.max(jnp.abs(out - ref)))
    assert max_err < 0.2, f"kernel/reference mismatch: max abs err {max_err}"

    print("KERNEL_OK")
</pallas_src>

<mosaic_0001>
module attributes {stable_mosaic.version = 11 : i64} {
  func.func @_tree_kernel(%arg0: i32, %arg1: memref<1x4x8x8x4xf32, #tpu.memory_space<vmem>>, %arg2: memref<9x4x8xbf16, #tpu.memory_space<vmem>>, %arg3: memref<9x8x8xbf16, #tpu.memory_space<vmem>>, %arg4: memref<9x8x8xbf16, #tpu.memory_space<vmem>>, %arg5: memref<9x8x8xbf16, #tpu.memory_space<vmem>>, %arg6: memref<4x8xbf16, #tpu.memory_space<vmem>>, %arg7: memref<8x8xbf16, #tpu.memory_space<vmem>>, %arg8: memref<8x8xbf16, #tpu.memory_space<vmem>>, %arg9: memref<4x8xbf16, #tpu.memory_space<vmem>>, %arg10: memref<6x8xf32, #tpu.memory_space<vmem>>, %arg11: memref<1x64x8xf32, #tpu.memory_space<vmem>>, %arg12: memref<4x9x9x4xf32, #tpu.memory_space<vmem>>, %arg13: memref<10x10x8xf32, #tpu.memory_space<vmem>>) attributes {dimension_semantics = [#tpu.dimension_semantics<parallel>], iteration_bounds = array<i64: 2>, scalar_prefetch = 0 : i64, scratch_operands = 2 : i64, tpu.core_type = #tpu.core_type<tc>, window_params = [{transform_indices = @transform_0, window_bounds = array<i64: 1, 4, 8, 8, 4>}, {pipeline_mode = #tpu.pipeline_mode<synchronous>, transform_indices = @transform_1, window_bounds = array<i64: 9, 4, 8>}, {pipeline_mode = #tpu.pipeline_mode<synchronous>, transform_indices = @transform_2, window_bounds = array<i64: 9, 8, 8>}, {pipeline_mode = #tpu.pipeline_mode<synchronous>, transform_indices = @transform_3, window_bounds = array<i64: 9, 8, 8>}, {pipeline_mode = #tpu.pipeline_mode<synchronous>, transform_indices = @transform_4, window_bounds = array<i64: 9, 8, 8>}, {pipeline_mode = #tpu.pipeline_mode<synchronous>, transform_indices = @transform_5, window_bounds = array<i64: 4, 8>}, {pipeline_mode = #tpu.pipeline_mode<synchronous>, transform_indices = @transform_6, window_bounds = array<i64: 8, 8>}, {pipeline_mode = #tpu.pipeline_mode<synchronous>, transform_indices = @transform_7, window_bounds = array<i64: 8, 8>}, {pipeline_mode = #tpu.pipeline_mode<synchronous>, transform_indices = @transform_8, window_bounds = array<i64: 4, 8>}, {pipeline_mode = #tpu.pipeline_mode<synchronous>, transform_indices = @transform_9, window_bounds = array<i64: 6, 8>}, {transform_indices = @transform_10, window_bounds = array<i64: 1, 64, 8>}]} {
    %cst = arith.constant 0.000000e+00 : f32
    %0 = vector.broadcast %cst : f32 to vector<4x9x9x4xf32>
    %c0 = arith.constant 0 : index
    %c0_0 = arith.constant 0 : index
    %c0_1 = arith.constant 0 : index
    %c0_2 = arith.constant 0 : index
    %1 = vector.load %arg12[%c0, %c0_0, %c0_1, %c0_2] : memref<4x9x9x4xf32, #tpu.memory_space<vmem>>, vector<4x9x9x4xf32>
    tpu.vector_store %arg12[%c0, %c0_0, %c0_1, %c0_2], %0 {strides = array<i32>} : memref<4x9x9x4xf32, #tpu.memory_space<vmem>>, vector<4x9x9x4xf32>,
    %cst_3 = arith.constant 0.000000e+00 : f32
    %2 = vector.broadcast %cst_3 : f32 to vector<10x10x8xf32>
    %c0_4 = arith.constant 0 : index
    %c0_5 = arith.constant 0 : index
    %c0_6 = arith.constant 0 : index
    %3 = vector.load %arg13[%c0_4, %c0_5, %c0_6] : memref<10x10x8xf32, #tpu.memory_space<vmem>>, vector<10x10x8xf32>
    tpu.vector_store %arg13[%c0_4, %c0_5, %c0_6], %2 {strides = array<i32>} : memref<10x10x8xf32, #tpu.memory_space<vmem>>, vector<10x10x8xf32>,
    %c0_7 = arith.constant 0 : index
    %c0_8 = arith.constant 0 : index
    %c0_9 = arith.constant 0 : index
    %c0_10 = arith.constant 0 : index
    %c0_11 = arith.constant 0 : index
    %4 = vector.load %arg1[%c0_7, %c0_8, %c0_9, %c0_10, %c0_11] : memref<1x4x8x8x4xf32, #tpu.memory_space<vmem>>, vector<1x1x8x8x4xf32>
    %5 = vector.shape_cast %4 : vector<1x1x8x8x4xf32> to vector<8x8x4xf32>
    %c0_12 = arith.constant 0 : index
    %c1 = arith.constant 1 : index
    %c1_13 = arith.constant 1 : index
    %c0_14 = arith.constant 0 : index
    %6 = vector.load %arg12[%c0_12, %c1, %c1_13, %c0_14] : memref<4x9x9x4xf32, #tpu.memory_space<vmem>>, vector<1x8x8x4xf32>
    %7 = vector.shape_cast %6 : vector<1x8x8x4xf32> to vector<8x8x4xf32>
    %8 = vector.shape_cast %5 : vector<8x8x4xf32> to vector<1x8x8x4xf32>
    tpu.vector_store %arg12[%c0_12, %c1, %c1_13, %c0_14], %8 {strides = array<i32>} : memref<4x9x9x4xf32, #tpu.memory_space<vmem>>, vector<1x8x8x4xf32>,
    %c0_15 = arith.constant 0 : index
    %c1_16 = arith.constant 1 : index
    %c0_17 = arith.constant 0 : index
    %c0_18 = arith.constant 0 : index
    %c0_19 = arith.constant 0 : index
    %9 = vector.load %arg1[%c0_15, %c1_16, %c0_17, %c0_18, %c0_19] : memref<1x4x8x8x4xf32, #tpu.memory_space<vmem>>, vector<1x1x8x8x4xf32>
    %10 = vector.shape_cast %9 : vector<1x1x8x8x4xf32> to vector<8x8x4xf32>
    %c1_20 = arith.constant 1 : index
    %c1_21 = arith.constant 1 : index
    %c1_22 = arith.constant 1 : index
    %c0_23 = arith.constant 0 : index
    %11 = vector.load %arg12[%c1_20, %c1_21, %c1_22, %c0_23] : memref<4x9x9x4xf32, #tpu.memory_space<vmem>>, vector<1x8x8x4xf32>
    %12 = vector.shape_cast %11 : vector<1x8x8x4xf32> to vector<8x8x4xf32>
    %13 = vector.shape_cast %10 : vector<8x8x4xf32> to vector<1x8x8x4xf32>
    tpu.vector_store %arg12[%c1_20, %c1_21, %c1_22, %c0_23], %13 {strides = array<i32>} : memref<4x9x9x4xf32, #tpu.memory_space<vmem>>, vector<1x8x8x4xf32>,
    %c0_24 = arith.constant 0 : index
    %c2 = arith.constant 2 : index
    %c0_25 = arith.constant 0 : index
    %c0_26 = arith.constant 0 : index
    %c0_27 = arith.constant 0 : index
    %14 = vector.load %arg1[%c0_24, %c2, %c0_25, %c0_26, %c0_27] : memref<1x4x8x8x4xf32, #tpu.memory_space<vmem>>, vector<1x1x8x8x4xf32>
    %15 = vector.shape_cast %14 : vector<1x1x8x8x4xf32> to vector<8x8x4xf32>
    %c2_28 = arith.constant 2 : index
    %c1_29 = arith.constant 1 : index
    %c1_30 = arith.constant 1 : index
    %c0_31 = arith.constant 0 : index
    %16 = vector.load %arg12[%c2_28, %c1_29, %c1_30, %c0_31] : memref<4x9x9x4xf32, #tpu.memory_space<vmem>>, vector<1x8x8x4xf32>
    %17 = vector.shape_cast %16 : vector<1x8x8x4xf32> to vector<8x8x4xf32>
    %18 = vector.shape_cast %15 : vector<8x8x4xf32> to vector<1x8x8x4xf32>
    tpu.vector_store %arg12[%c2_28, %c1_29, %c1_30, %c0_31], %18 {strides = array<i32>} : memref<4x9x9x4xf32, #tpu.memory_space<vmem>>, vector<1x8x8x4xf32>,
    %c0_32 = arith.constant 0 : index
    %c3 = arith.constant 3 : index
    %c0_33 = arith.constant 0 : index
    %c0_34 = arith.constant 0 : index
    %c0_35 = arith.constant 0 : index
    %19 = vector.load %arg1[%c0_32, %c3, %c0_33, %c0_34, %c0_35] : memref<1x4x8x8x4xf32, #tpu.memory_space<vmem>>, vector<1x1x8x8x4xf32>
    %20 = vector.shape_cast %19 : vector<1x1x8x8x4xf32> to vector<8x8x4xf32>
    %c3_36 = arith.constant 3 : index
    %c1_37 = arith.constant 1 : index
    %c1_38 = arith.constant 1 : index
    %c0_39 = arith.constant 0 : index
    %21 = vector.load %arg12[%c3_36, %c1_37, %c1_38, %c0_39] : memref<4x9x9x4xf32, #tpu.memory_space<vmem>>, vector<1x8x8x4xf32>
    %22 = vector.shape_cast %21 : vector<1x8x8x4xf32> to vector<8x8x4xf32>
    %23 = vector.shape_cast %20 : vector<8x8x4xf32> to vector<1x8x8x4xf32>
    tpu.vector_store %arg12[%c3_36, %c1_37, %c1_38, %c0_39], %23 {strides = array<i32>} : memref<4x9x9x4xf32, #tpu.memory_space<vmem>>, vector<1x8x8x4xf32>,
    %c0_40 = arith.constant 0 : index
    %c0_41 = arith.constant 0 : index
    %c0_42 = arith.constant 0 : index
    %c0_43 = arith.constant 0 : index
    %c0_44 = arith.constant 0 : index
    %24 = vector.load %arg1[%c0_40, %c0_41, %c0_42, %c0_43, %c0_44] : memref<1x4x8x8x4xf32, #tpu.memory_space<vmem>>, vector<1x1x8x8x4xf32>
    %25 = vector.shape_cast %24 : vector<1x1x8x8x4xf32> to vector<8x8x4xf32>
    %26 = vector.shape_cast %25 : vector<8x8x4xf32> to vector<64x4xf32>
    %c0_45 = arith.constant 0 : index
    %c1_46 = arith.constant 1 : index
    %c0_47 = arith.constant 0 : index
    %c0_48 = arith.constant 0 : index
    %c0_49 = arith.constant 0 : index
    %27 = vector.load %arg1[%c0_45, %c1_46, %c0_47, %c0_48, %c0_49] : memref<1x4x8x8x4xf32, #tpu.memory_space<vmem>>, vector<1x1x8x8x4xf32>
    %28 = vector.shape_cast %27 : vector<1x1x8x8x4xf32> to vector<8x8x4xf32>
    %29 = vector.shape_cast %28 : vector<8x8x4xf32> to vector<64x4xf32>
    %30 = arith.maximumf %26, %29 : vector<64x4xf32>
    %c0_50 = arith.constant 0 : index
    %c2_51 = arith.constant 2 : index
    %c0_52 = arith.constant 0 : index
    %c0_53 = arith.constant 0 : index
    %c0_54 = arith.constant 0 : index
    %31 = vector.load %arg1[%c0_50, %c2_51, %c0_52, %c0_53, %c0_54] : memref<1x4x8x8x4xf32, #tpu.memory_space<vmem>>, vector<1x1x8x8x4xf32>
    %32 = vector.shape_cast %31 : vector<1x1x8x8x4xf32> to vector<8x8x4xf32>
    %33 = vector.shape_cast %32 : vector<8x8x4xf32> to vector<64x4xf32>
    %c0_55 = arith.constant 0 : index
    %c3_56 = arith.constant 3 : index
    %c0_57 = arith.constant 0 : index
    %c0_58 = arith.constant 0 : index
    %c0_59 = arith.constant 0 : index
    %34 = vector.load %arg1[%c0_55, %c3_56, %c0_57, %c0_58, %c0_59] : memref<1x4x8x8x4xf32, #tpu.memory_space<vmem>>, vector<1x1x8x8x4xf32>
    %35 = vector.shape_cast %34 : vector<1x1x8x8x4xf32> to vector<8x8x4xf32>
    %36 = vector.shape_cast %35 : vector<8x8x4xf32> to vector<64x4xf32>
    %37 = arith.maximumf %33, %36 : vector<64x4xf32>
    %38 = arith.maximumf %30, %37 : vector<64x4xf32>
    %c0_60 = arith.constant 0 : index
    %c0_61 = arith.constant 0 : index
    %39 = vector.load %arg6[%c0_60, %c0_61] : memref<4x8xbf16, #tpu.memory_space<vmem>>, vector<4x8xbf16>
    %40 = arith.truncf %38 : vector<64x4xf32> to vector<64x4xbf16>
    %cst_62 = arith.constant dense<0.000000e+00> : vector<64x8xf32>
    %41 = tpu.matmul %40, %39, %cst_62 {dimension_numbers = #tpu.dot_dimension_numbers<[1], [0], [0], [1], [0, 0, 1, 1], [], []>} : vector<64x4xbf16>, vector<4x8xbf16>, vector<64x8xf32> -> vector<64x8xf32>
    %c4 = arith.constant 4 : index
    %c0_63 = arith.constant 0 : index
    %42 = vector.load %arg10[%c4, %c0_63] : memref<6x8xf32, #tpu.memory_space<vmem>>, vector<1x8xf32>
    %43 = vector.broadcast %42 : vector<1x8xf32> to vector<64x8xf32>
    %44 = arith.addf %41, %43 : vector<64x8xf32>
    %cst_64 = arith.constant 0.000000e+00 : f32
    %45 = vector.broadcast %cst_64 : f32 to vector<64x8xf32>
    %c3_65 = arith.constant 3 : index
    %c0_66 = arith.constant 0 : index
    %c0_67 = arith.constant 0 : index
    %c0_68 = arith.constant 0 : index
    %46 = vector.load %arg12[%c3_65, %c0_66, %c0_67, %c0_68] : memref<4x9x9x4xf32, #tpu.memory_space<vmem>>, vector<1x8x8x4xf32>
    %47 = vector.shape_cast %46 : vector<1x8x8x4xf32> to vector<8x8x4xf32>
    %48 = vector.shape_cast %47 : vector<8x8x4xf32> to vector<64x4xf32>
    %c0_69 = arith.constant 0 : index
    %c0_70 = arith.constant 0 : index
    %c0_71 = arith.constant 0 : index
    %49 = vector.load %arg2[%c0_69, %c0_70, %c0_71] : memref<9x4x8xbf16, #tpu.memory_space<vmem>>, vector<1x4x8xbf16>
    %50 = vector.shape_cast %49 : vector<1x4x8xbf16> to vector<4x8xbf16>
    %51 = arith.truncf %48 : vector<64x4xf32> to vector<64x4xbf16>
    %cst_72 = arith.constant dense<0.000000e+00> : vector<64x8xf32>
    %52 = tpu.matmul %51, %50, %cst_72 {dimension_numbers = #tpu.dot_dimension_numbers<[1], [0], [0], [1], [0, 0, 1, 1], [], []>} : vector<64x4xbf16>, vector<4x8xbf16>, vector<64x8xf32> -> vector<64x8xf32>
    %53 = arith.addf %45, %52 : vector<64x8xf32>
    %c2_73 = arith.constant 2 : index
    %c0_74 = arith.constant 0 : index
    %c1_75 = arith.constant 1 : index
    %c0_76 = arith.constant 0 : index
    %54 = vector.load %arg12[%c2_73, %c0_74, %c1_75, %c0_76] : memref<4x9x9x4xf32, #tpu.memory_space<vmem>>, vector<1x8x8x4xf32>
    %55 = vector.shape_cast %54 : vector<1x8x8x4xf32> to vector<8x8x4xf32>
    %56 = vector.shape_cast %55 : vector<8x8x4xf32> to vector<64x4xf32>
    %c1_77 = arith.constant 1 : index
    %c0_78 = arith.constant 0 : index
    %c0_79 = arith.constant 0 : index
    %57 = vector.load %arg2[%c1_77, %c0_78, %c0_79] : memref<9x4x8xbf16, #tpu.memory_space<vmem>>, vector<1x4x8xbf16>
    %58 = vector.shape_cast %57 : vector<1x4x8xbf16> to vector<4x8xbf16>
    %59 = arith.truncf %56 : vector<64x4xf32> to vector<64x4xbf16>
    %cst_80 = arith.constant dense<0.000000e+00> : vector<64x8xf32>
    %60 = tpu.matmul %59, %58, %cst_80 {dimension_numbers = #tpu.dot_dimension_numbers<[1], [0], [0], [1], [0, 0, 1, 1], [], []>} : vector<64x4xbf16>, vector<4x8xbf16>, vector<64x8xf32> -> vector<64x8xf32>
    %61 = arith.addf %53, %60 : vector<64x8xf32>
    %c3_81 = arith.constant 3 : index
    %c0_82 = arith.constant 0 : index
    %c1_83 = arith.constant 1 : index
    %c0_84 = arith.constant 0 : index
    %62 = vector.load %arg12[%c3_81, %c0_82, %c1_83, %c0_84] : memref<4x9x9x4xf32, #tpu.memory_space<vmem>>, vector<1x8x8x4xf32>
    %63 = vector.shape_cast %62 : vector<1x8x8x4xf32> to vector<8x8x4xf32>
    %64 = vector.shape_cast %63 : vector<8x8x4xf32> to vector<64x4xf32>
    %c2_85 = arith.constant 2 : index
    %c0_86 = arith.constant 0 : index
    %c0_87 = arith.constant 0 : index
    %65 = vector.load %arg2[%c2_85, %c0_86, %c0_87] : memref<9x4x8xbf16, #tpu.memory_space<vmem>>, vector<1x4x8xbf16>
    %66 = vector.shape_cast %65 : vector<1x4x8xbf16> to vector<4x8xbf16>
    %67 = arith.truncf %64 : vector<64x4xf32> to vector<64x4xbf16>
    %cst_88 = arith.constant dense<0.000000e+00> : vector<64x8xf32>
    %68 = tpu.matmul %67, %66, %cst_88 {dimension_numbers = #tpu.dot_dimension_numbers<[1], [0], [0], [1], [0, 0, 1, 1], [], []>} : vector<64x4xbf16>, vector<4x8xbf16>, vector<64x8xf32> -> vector<64x8xf32>
    %69 = arith.addf %61, %68 : vector<64x8xf32>
    %c1_89 = arith.constant 1 : index
    %c1_90 = arith.constant 1 : index
    %c0_91 = arith.constant 0 : index
    %c0_92 = arith.constant 0 : index
    %70 = vector.load %arg12[%c1_89, %c1_90, %c0_91, %c0_92] : memref<4x9x9x4xf32, #tpu.memory_space<vmem>>, vector<1x8x8x4xf32>
    %71 = vector.shape_cast %70 : vector<1x8x8x4xf32> to vector<8x8x4xf32>
    %72 = vector.shape_cast %71 : vector<8x8x4xf32> to vector<64x4xf32>
    %c3_93 = arith.constant 3 : index
    %c0_94 = arith.constant 0 : index
    %c0_95 = arith.constant 0 : index
    %73 = vector.load %arg2[%c3_93, %c0_94, %c0_95] : memref<9x4x8xbf16, #tpu.memory_space<vmem>>, vector<1x4x8xbf16>
    %74 = vector.shape_cast %73 : vector<1x4x8xbf16> to vector<4x8xbf16>
    %75 = arith.truncf %72 : vector<64x4xf32> to vector<64x4xbf16>
    %cst_96 = arith.constant dense<0.000000e+00> : vector<64x8xf32>
    %76 = tpu.matmul %75, %74, %cst_96 {dimension_numbers = #tpu.dot_dimension_numbers<[1], [0], [0], [1], [0, 0, 1, 1], [], []>} : vector<64x4xbf16>, vector<4x8xbf16>, vector<64x8xf32> -> vector<64x8xf32>
    %77 = arith.addf %69, %76 : vector<64x8xf32>
    %c0_97 = arith.constant 0 : index
    %c1_98 = arith.constant 1 : index
    %c1_99 = arith.constant 1 : index
    %c0_100 = arith.constant 0 : index
    %78 = vector.load %arg12[%c0_97, %c1_98, %c1_99, %c0_100] : memref<4x9x9x4xf32, #tpu.memory_space<vmem>>, vector<1x8x8x4xf32>
    %79 = vector.shape_cast %78 : vector<1x8x8x4xf32> to vector<8x8x4xf32>
    %80 = vector.shape_cast %79 : vector<8x8x4xf32> to vector<64x4xf32>
    %c4_101 = arith.constant 4 : index
    %c0_102 = arith.constant 0 : index
    %c0_103 = arith.constant 0 : index
    %81 = vector.load %arg2[%c4_101, %c0_102, %c0_103] : memref<9x4x8xbf16, #tpu.memory_space<vmem>>, vector<1x4x8xbf16>
    %82 = vector.shape_cast %81 : vector<1x4x8xbf16> to vector<4x8xbf16>
    %83 = arith.truncf %80 : vector<64x4xf32> to vector<64x4xbf16>
    %cst_104 = arith.constant dense<0.000000e+00> : vector<64x8xf32>
    %84 = tpu.matmul %83, %82, %cst_104 {dimension_numbers = #tpu.dot_dimension_numbers<[1], [0], [0], [1], [0, 0, 1, 1], [], []>} : vector<64x4xbf16>, vector<4x8xbf16>, vector<64x8xf32> -> vector<64x8xf32>
    %85 = arith.addf %77, %84 : vector<64x8xf32>
    %c1_105 = arith.constant 1 : index
    %c1_106 = arith.constant 1 : index
    %c1_107 = arith.constant 1 : index
    %c0_108 = arith.constant 0 : index
    %86 = vector.load %arg12[%c1_105, %c1_106, %c1_107, %c0_108] : memref<4x9x9x4xf32, #tpu.memory_space<vmem>>, vector<1x8x8x4xf32>
    %87 = vector.shape_cast %86 : vector<1x8x8x4xf32> to vector<8x8x4xf32>
    %88 = vector.shape_cast %87 : vector<8x8x4xf32> to vector<64x4xf32>
    %c5 = arith.constant 5 : index
    %c0_109 = arith.constant 0 : index
    %c0_110 = arith.constant 0 : index
    %89 = vector.load %arg2[%c5, %c0_109, %c0_110] : memref<9x4x8xbf16, #tpu.memory_space<vmem>>, vector<1x4x8xbf16>
    %90 = vector.shape_cast %89 : vector<1x4x8xbf16> to vector<4x8xbf16>
    %91 = arith.truncf %88 : vector<64x4xf32> to vector<64x4xbf16>
    %cst_111 = arith.constant dense<0.000000e+00> : vector<64x8xf32>
    %92 = tpu.matmul %91, %90, %cst_111 {dimension_numbers = #tpu.dot_dimension_numbers<[1], [0], [0], [1], [0, 0, 1, 1], [], []>} : vector<64x4xbf16>, vector<4x8xbf16>, vector<64x8xf32> -> vector<64x8xf32>
    %93 = arith.addf %85, %92 : vector<64x8xf32>
    %c3_112 = arith.constant 3 : index
    %c1_113 = arith.constant 1 : index
    %c0_114 = arith.constant 0 : index
    %c0_115 = arith.constant 0 : index
    %94 = vector.load %arg12[%c3_112, %c1_113, %c0_114, %c0_115] : memref<4x9x9x4xf32, #tpu.memory_space<vmem>>, vector<1x8x8x4xf32>
    %95 = vector.shape_cast %94 : vector<1x8x8x4xf32> to vector<8x8x4xf32>
    %96 = vector.shape_cast %95 : vector<8x8x4xf32> to vector<64x4xf32>
    %c6 = arith.constant 6 : index
    %c0_116 = arith.constant 0 : index
    %c0_117 = arith.constant 0 : index
    %97 = vector.load %arg2[%c6, %c0_116, %c0_117] : memref<9x4x8xbf16, #tpu.memory_space<vmem>>, vector<1x4x8xbf16>
    %98 = vector.shape_cast %97 : vector<1x4x8xbf16> to vector<4x8xbf16>
    %99 = arith.truncf %96 : vector<64x4xf32> to vector<64x4xbf16>
    %cst_118 = arith.constant dense<0.000000e+00> : vector<64x8xf32>
    %100 = tpu.matmul %99, %98, %cst_118 {dimension_numbers = #tpu.dot_dimension_numbers<[1], [0], [0], [1], [0, 0, 1, 1], [], []>} : vector<64x4xbf16>, vector<4x8xbf16>, vector<64x8xf32> -> vector<64x8xf32>
    %101 = arith.addf %93, %100 : vector<64x8xf32>
    %c2_119 = arith.constant 2 : index
    %c1_120 = arith.constant 1 : index
    %c1_121 = arith.constant 1 : index
    %c0_122 = arith.constant 0 : index
    %102 = vector.load %arg12[%c2_119, %c1_120, %c1_121, %c0_122] : memref<4x9x9x4xf32, #tpu.memory_space<vmem>>, vector<1x8x8x4xf32>
    %103 = vector.shape_cast %102 : vector<1x8x8x4xf32> to vector<8x8x4xf32>
    %104 = vector.shape_cast %103 : vector<8x8x4xf32> to vector<64x4xf32>
    %c7 = arith.constant 7 : index
    %c0_123 = arith.constant 0 : index
    %c0_124 = arith.constant 0 : index
    %105 = vector.load %arg2[%c7, %c0_123, %c0_124] : memref<9x4x8xbf16, #tpu.memory_space<vmem>>, vector<1x4x8xbf16>
    %106 = vector.shape_cast %105 : vector<1x4x8xbf16> to vector<4x8xbf16>
    %107 = arith.truncf %104 : vector<64x4xf32> to vector<64x4xbf16>
    %cst_125 = arith.constant dense<0.000000e+00> : vector<64x8xf32>
    %108 = tpu.matmul %107, %106, %cst_125 {dimension_numbers = #tpu.dot_dimension_numbers<[1], [0], [0], [1], [0, 0, 1, 1], [], []>} : vector<64x4xbf16>, vector<4x8xbf16>, vector<64x8xf32> -> vector<64x8xf32>
    %109 = arith.addf %101, %108 : vector<64x8xf32>
    %c3_126 = arith.constant 3 : index
    %c1_127 = arith.constant 1 : index
    %c1_128 = arith.constant 1 : index
    %c0_129 = arith.constant 0 : index
    %110 = vector.load %arg12[%c3_126, %c1_127, %c1_128, %c0_129] : memref<4x9x9x4xf32, #tpu.memory_space<vmem>>, vector<1x8x8x4xf32>
    %111 = vector.shape_cast %110 : vector<1x8x8x4xf32> to vector<8x8x4xf32>
    %112 = vector.shape_cast %111 : vector<8x8x4xf32> to vector<64x4xf32>
    %c8 = arith.constant 8 : index
    %c0_130 = arith.constant 0 : index
    %c0_131 = arith.constant 0 : index
    %113 = vector.load %arg2[%c8, %c0_130, %c0_131] : memref<9x4x8xbf16, #tpu.memory_space<vmem>>, vector<1x4x8xbf16>
    %114 = vector.shape_cast %113 : vector<1x4x8xbf16> to vector<4x8xbf16>
    %115 = arith.truncf %112 : vector<64x4xf32> to vector<64x4xbf16>
    %cst_132 = arith.constant dense<0.000000e+00> : vector<64x8xf32>
    %116 = tpu.matmul %115, %114, %cst_132 {dimension_numbers = #tpu.dot_dimension_numbers<[1], [0], [0], [1], [0, 0, 1, 1], [], []>} : vector<64x4xbf16>, vector<4x8xbf16>, vector<64x8xf32> -> vector<64x8xf32>
    %117 = arith.addf %109, %116 : vector<64x8xf32>
    %c0_133 = arith.constant 0 : index
    %c0_134 = arith.constant 0 : index
    %118 = vector.load %arg10[%c0_133, %c0_134] : memref<6x8xf32, #tpu.memory_space<vmem>>, vector<1x8xf32>
    %119 = vector.broadcast %118 : vector<1x8xf32> to vector<64x8xf32>
    %120 = arith.addf %117, %119 : vector<64x8xf32>
    %cst_135 = arith.constant 0.000000e+00 : f32
    %121 = vector.broadcast %cst_135 : f32 to vector<64x8xf32>
    %122 = arith.maximumf %120, %121 : vector<64x8xf32>
    %c1_136 = arith.constant 1 : index
    %c0_137 = arith.constant 0 : index
    %123 = vector.load %arg10[%c1_136, %c0_137] : memref<6x8xf32, #tpu.memory_space<vmem>>, vector<1x8xf32>
    %124 = vector.shape_cast %122 : vector<64x8xf32> to vector<8x8x8xf32>
    %c1_138 = arith.constant 1 : index
    %c1_139 = arith.constant 1 : index
    %c0_140 = arith.constant 0 : index
    %125 = vector.load %arg13[%c1_138, %c1_139, %c0_140] : memref<10x10x8xf32, #tpu.memory_space<vmem>>, vector<8x8x8xf32>
    tpu.vector_store %arg13[%c1_138, %c1_139, %c0_140], %124 {strides = array<i32>} : memref<10x10x8xf32, #tpu.memory_space<vmem>>, vector<8x8x8xf32>,
    %cst_141 = arith.constant 0.000000e+00 : f32
    %126 = vector.broadcast %cst_141 : f32 to vector<64x8xf32>
    %c0_142 = arith.constant 0 : index
    %c0_143 = arith.constant 0 : index
    %c0_144 = arith.constant 0 : index
    %127 = vector.load %arg13[%c0_142, %c0_143, %c0_144] : memref<10x10x8xf32, #tpu.memory_space<vmem>>, vector<8x8x8xf32>
    %128 = vector.shape_cast %127 : vector<8x8x8xf32> to vector<64x8xf32>
    %c0_145 = arith.constant 0 : index
    %c0_146 = arith.constant 0 : index
    %c0_147 = arith.constant 0 : index
    %129 = vector.load %arg3[%c0_145, %c0_146, %c0_147] : memref<9x8x8xbf16, #tpu.memory_space<vmem>>, vector<1x8x8xbf16>
    %130 = vector.shape_cast %129 : vector<1x8x8xbf16> to vector<8x8xbf16>
    %131 = arith.truncf %128 : vector<64x8xf32> to vector<64x8xbf16>
    %cst_148 = arith.constant dense<0.000000e+00> : vector<64x8xf32>
    %132 = tpu.matmul %131, %130, %cst_148 {dimension_numbers = #tpu.dot_dimension_numbers<[1], [0], [0], [1], [0, 0, 1, 1], [], []>} : vector<64x8xbf16>, vector<8x8xbf16>, vector<64x8xf32> -> vector<64x8xf32>
    %133 = arith.addf %126, %132 : vector<64x8xf32>
    %c0_149 = arith.constant 0 : index
    %c1_150 = arith.constant 1 : index
    %c0_151 = arith.constant 0 : index
    %134 = vector.load %arg13[%c0_149, %c1_150, %c0_151] : memref<10x10x8xf32, #tpu.memory_space<vmem>>, vector<8x8x8xf32>
    %135 = vector.shape_cast %134 : vector<8x8x8xf32> to vector<64x8xf32>
    %c1_152 = arith.constant 1 : index
    %c0_153 = arith.constant 0 : index
    %c0_154 = arith.constant 0 : index
    %136 = vector.load %arg3[%c1_152, %c0_153, %c0_154] : memref<9x8x8xbf16, #tpu.memory_space<vmem>>, vector<1x8x8xbf16>
    %137 = vector.shape_cast %136 : vector<1x8x8xbf16> to vector<8x8xbf16>
    %138 = arith.truncf %135 : vector<64x8xf32> to vector<64x8xbf16>
    %cst_155 = arith.constant dense<0.000000e+00> : vector<64x8xf32>
    %139 = tpu.matmul %138, %137, %cst_155 {dimension_numbers = #tpu.dot_dimension_numbers<[1], [0], [0], [1], [0, 0, 1, 1], [], []>} : vector<64x8xbf16>, vector<8x8xbf16>, vector<64x8xf32> -> vector<64x8xf32>
    %140 = arith.addf %133, %139 : vector<64x8xf32>
    %c0_156 = arith.constant 0 : index
    %c2_157 = arith.constant 2 : index
    %c0_158 = arith.constant 0 : index
    %141 = vector.load %arg13[%c0_156, %c2_157, %c0_158] : memref<10x10x8xf32, #tpu.memory_space<vmem>>, vector<8x8x8xf32>
    %142 = vector.shape_cast %141 : vector<8x8x8xf32> to vector<64x8xf32>
    %c2_159 = arith.constant 2 : index
    %c0_160 = arith.constant 0 : index
    %c0_161 = arith.constant 0 : index
    %143 = vector.load %arg3[%c2_159, %c0_160, %c0_161] : memref<9x8x8xbf16, #tpu.memory_space<vmem>>, vector<1x8x8xbf16>
    %144 = vector.shape_cast %143 : vector<1x8x8xbf16> to vector<8x8xbf16>
    %145 = arith.truncf %142 : vector<64x8xf32> to vector<64x8xbf16>
    %cst_162 = arith.constant dense<0.000000e+00> : vector<64x8xf32>
    %146 = tpu.matmul %145, %144, %cst_162 {dimension_numbers = #tpu.dot_dimension_numbers<[1], [0], [0], [1], [0, 0, 1, 1], [], []>} : vector<64x8xbf16>, vector<8x8xbf16>, vector<64x8xf32> -> vector<64x8xf32>
    %147 = arith.addf %140, %146 : vector<64x8xf32>
    %c1_163 = arith.constant 1 : index
    %c0_164 = arith.constant 0 : index
    %c0_165 = arith.constant 0 : index
    %148 = vector.load %arg13[%c1_163, %c0_164, %c0_165] : memref<10x10x8xf32, #tpu.memory_space<vmem>>, vector<8x8x8xf32>
    %149 = vector.shape_cast %148 : vector<8x8x8xf32> to vector<64x8xf32>
    %c3_166 = arith.constant 3 : index
    %c0_167 = arith.constant 0 : index
    %c0_168 = arith.constant 0 : index
    %150 = vector.load %arg3[%c3_166, %c0_167, %c0_168] : memref<9x8x8xbf16, #tpu.memory_space<vmem>>, vector<1x8x8xbf16>
    %151 = vector.shape_cast %150 : vector<1x8x8xbf16> to vector<8x8xbf16>
    %152 = arith.truncf %149 : vector<64x8xf32> to vector<64x8xbf16>
    %cst_169 = arith.constant dense<0.000000e+00> : vector<64x8xf32>
    %153 = tpu.matmul %152, %151, %cst_169 {dimension_numbers = #tpu.dot_dimension_numbers<[1], [0], [0], [1], [0, 0, 1, 1], [], []>} : vector<64x8xbf16>, vector<8x8xbf16>, vector<64x8xf32> -> vector<64x8xf32>
    %154 = arith.addf %147, %153 : vector<64x8xf32>
    %c1_170 = arith.constant 1 : index
    %c1_171 = arith.constant 1 : index
    %c0_172 = arith.constant 0 : index
    %155 = vector.load %arg13[%c1_170, %c1_171, %c0_172] : memref<10x10x8xf32, #tpu.memory_space<vmem>>, vector<8x8x8xf32>
    %156 = vector.shape_cast %155 : vector<8x8x8xf32> to vector<64x8xf32>
    %c4_173 = arith.constant 4 : index
    %c0_174 = arith.constant 0 : index
    %c0_175 = arith.constant 0 : index
    %157 = vector.load %arg3[%c4_173, %c0_174, %c0_175] : memref<9x8x8xbf16, #tpu.memory_space<vmem>>, vector<1x8x8xbf16>
    %158 = vector.shape_cast %157 : vector<1x8x8xbf16> to vector<8x8xbf16>
    %159 = arith.truncf %156 : vector<64x8xf32> to vector<64x8xbf16>
    %cst_176 = arith.constant dense<0.000000e+00> : vector<64x8xf32>
    %160 = tpu.matmul %159, %158, %cst_176 {dimension_numbers = #tpu.dot_dimension_numbers<[1], [0], [0], [1], [0, 0, 1, 1], [], []>} : vector<64x8xbf16>, vector<8x8xbf16>, vector<64x8xf32> -> vector<64x8xf32>
    %161 = arith.addf %154, %160 : vector<64x8xf32>
    %c1_177 = arith.constant 1 : index
    %c2_178 = arith.constant 2 : index
    %c0_179 = arith.constant 0 : index
    %162 = vector.load %arg13[%c1_177, %c2_178, %c0_179] : memref<10x10x8xf32, #tpu.memory_space<vmem>>, vector<8x8x8xf32>
    %163 = vector.shape_cast %162 : vector<8x8x8xf32> to vector<64x8xf32>
    %c5_180 = arith.constant 5 : index
    %c0_181 = arith.constant 0 : index
    %c0_182 = arith.constant 0 : index
    %164 = vector.load %arg3[%c5_180, %c0_181, %c0_182] : memref<9x8x8xbf16, #tpu.memory_space<vmem>>, vector<1x8x8xbf16>
    %165 = vector.shape_cast %164 : vector<1x8x8xbf16> to vector<8x8xbf16>
    %166 = arith.truncf %163 : vector<64x8xf32> to vector<64x8xbf16>
    %cst_183 = arith.constant dense<0.000000e+00> : vector<64x8xf32>
    %167 = tpu.matmul %166, %165, %cst_183 {dimension_numbers = #tpu.dot_dimension_numbers<[1], [0], [0], [1], [0, 0, 1, 1], [], []>} : vector<64x8xbf16>, vector<8x8xbf16>, vector<64x8xf32> -> vector<64x8xf32>
    %168 = arith.addf %161, %167 : vector<64x8xf32>
    %c2_184 = arith.constant 2 : index
    %c0_185 = arith.constant 0 : index
    %c0_186 = arith.constant 0 : index
    %169 = vector.load %arg13[%c2_184, %c0_185, %c0_186] : memref<10x10x8xf32, #tpu.memory_space<vmem>>, vector<8x8x8xf32>
    %170 = vector.shape_cast %169 : vector<8x8x8xf32> to vector<64x8xf32>
    %c6_187 = arith.constant 6 : index
    %c0_188 = arith.constant 0 : index
    %c0_189 = arith.constant 0 : index
    %171 = vector.load %arg3[%c6_187, %c0_188, %c0_189] : memref<9x8x8xbf16, #tpu.memory_space<vmem>>, vector<1x8x8xbf16>
    %172 = vector.shape_cast %171 : vector<1x8x8xbf16> to vector<8x8xbf16>
    %173 = arith.truncf %170 : vector<64x8xf32> to vector<64x8xbf16>
    %cst_190 = arith.constant dense<0.000000e+00> : vector<64x8xf32>
    %174 = tpu.matmul %173, %172, %cst_190 {dimension_numbers = #tpu.dot_dimension_numbers<[1], [0], [0], [1], [0, 0, 1, 1], [], []>} : vector<64x8xbf16>, vector<8x8xbf16>, vector<64x8xf32> -> vector<64x8xf32>
    %175 = arith.addf %168, %174 : vector<64x8xf32>
    %c2_191 = arith.constant 2 : index
    %c1_192 = arith.constant 1 : index
    %c0_193 = arith.constant 0 : index
    %176 = vector.load %arg13[%c2_191, %c1_192, %c0_193] : memref<10x10x8xf32, #tpu.memory_space<vmem>>, vector<8x8x8xf32>
    %177 = vector.shape_cast %176 : vector<8x8x8xf32> to vector<64x8xf32>
    %c7_194 = arith.constant 7 : index
    %c0_195 = arith.constant 0 : index
    %c0_196 = arith.constant 0 : index
    %178 = vector.load %arg3[%c7_194, %c0_195, %c0_196] : memref<9x8x8xbf16, #tpu.memory_space<vmem>>, vector<1x8x8xbf16>
    %179 = vector.shape_cast %178 : vector<1x8x8xbf16> to vector<8x8xbf16>
    %180 = arith.truncf %177 : vector<64x8xf32> to vector<64x8xbf16>
    %cst_197 = arith.constant dense<0.000000e+00> : vector<64x8xf32>
    %181 = tpu.matmul %180, %179, %cst_197 {dimension_numbers = #tpu.dot_dimension_numbers<[1], [0], [0], [1], [0, 0, 1, 1], [], []>} : vector<64x8xbf16>, vector<8x8xbf16>, vector<64x8xf32> -> vector<64x8xf32>
    %182 = arith.addf %175, %181 : vector<64x8xf32>
    %c2_198 = arith.constant 2 : index
    %c2_199 = arith.constant 2 : index
    %c0_200 = arith.constant 0 : index
    %183 = vector.load %arg13[%c2_198, %c2_199, %c0_200] : memref<10x10x8xf32, #tpu.memory_space<vmem>>, vector<8x8x8xf32>
    %184 = vector.shape_cast %183 : vector<8x8x8xf32> to vector<64x8xf32>
    %c8_201 = arith.constant 8 : index
    %c0_202 = arith.constant 0 : index
    %c0_203 = arith.constant 0 : index
    %185 = vector.load %arg3[%c8_201, %c0_202, %c0_203] : memref<9x8x8xbf16, #tpu.memory_space<vmem>>, vector<1x8x8xbf16>
    %186 = vector.shape_cast %185 : vector<1x8x8xbf16> to vector<8x8xbf16>
    %187 = arith.truncf %184 : vector<64x8xf32> to vector<64x8xbf16>
    %cst_204 = arith.constant dense<0.000000e+00> : vector<64x8xf32>
    %188 = tpu.matmul %187, %186, %cst_204 {dimension_numbers = #tpu.dot_dimension_numbers<[1], [0], [0], [1], [0, 0, 1, 1], [], []>} : vector<64x8xbf16>, vector<8x8xbf16>, vector<64x8xf32> -> vector<64x8xf32>
    %189 = arith.addf %182, %188 : vector<64x8xf32>
    %190 = vector.broadcast %123 : vector<1x8xf32> to vector<64x8xf32>
    %191 = arith.addf %189, %190 : vector<64x8xf32>
    %192 = arith.addf %191, %44 : vector<64x8xf32>
    %cst_205 = arith.constant 0.000000e+00 : f32
    %193 = vector.broadcast %cst_205 : f32 to vector<64x8xf32>
    %194 = arith.maximumf %192, %193 : vector<64x8xf32>
    %c2_206 = arith.constant 2 : index
    %c0_207 = arith.constant 0 : index
    %195 = vector.load %arg10[%c2_206, %c0_207] : memref<6x8xf32, #tpu.memory_space<vmem>>, vector<1x8xf32>
    %196 = vector.shape_cast %194 : vector<64x8xf32> to vector<8x8x8xf32>
    %c1_208 = arith.constant 1 : index
    %c1_209 = arith.constant 1 : index
    %c0_210 = arith.constant 0 : index
    %197 = vector.load %arg13[%c1_208, %c1_209, %c0_210] : memref<10x10x8xf32, #tpu.memory_space<vmem>>, vector<8x8x8xf32>
    tpu.vector_store %arg13[%c1_208, %c1_209, %c0_210], %196 {strides = array<i32>} : memref<10x10x8xf32, #tpu.memory_space<vmem>>, vector<8x8x8xf32>,
    %cst_211 = arith.constant 0.000000e+00 : f32
    %198 = vector.broadcast %cst_211 : f32 to vector<64x8xf32>
    %c0_212 = arith.constant 0 : index
    %c0_213 = arith.constant 0 : index
    %c0_214 = arith.constant 0 : index
    %199 = vector.load %arg13[%c0_212, %c0_213, %c0_214] : memref<10x10x8xf32, #tpu.memory_space<vmem>>, vector<8x8x8xf32>
    %200 = vector.shape_cast %199 : vector<8x8x8xf32> to vector<64x8xf32>
    %c0_215 = arith.constant 0 : index
    %c0_216 = arith.constant 0 : index
    %c0_217 = arith.constant 0 : index
    %201 = vector.load %arg4[%c0_215, %c0_216, %c0_217] : memref<9x8x8xbf16, #tpu.memory_space<vmem>>, vector<1x8x8xbf16>
    %202 = vector.shape_cast %201 : vector<1x8x8xbf16> to vector<8x8xbf16>
    %203 = arith.truncf %200 : vector<64x8xf32> to vector<64x8xbf16>
    %cst_218 = arith.constant dense<0.000000e+00> : vector<64x8xf32>
    %204 = tpu.matmul %203, %202, %cst_218 {dimension_numbers = #tpu.dot_dimension_numbers<[1], [0], [0], [1], [0, 0, 1, 1], [], []>} : vector<64x8xbf16>, vector<8x8xbf16>, vector<64x8xf32> -> vector<64x8xf32>
    %205 = arith.addf %198, %204 : vector<64x8xf32>
    %c0_219 = arith.constant 0 : index
    %c1_220 = arith.constant 1 : index
    %c0_221 = arith.constant 0 : index
    %206 = vector.load %arg13[%c0_219, %c1_220, %c0_221] : memref<10x10x8xf32, #tpu.memory_space<vmem>>, vector<8x8x8xf32>
    %207 = vector.shape_cast %206 : vector<8x8x8xf32> to vector<64x8xf32>
    %c1_222 = arith.constant 1 : index
    %c0_223 = arith.constant 0 : index
    %c0_224 = arith.constant 0 : index
    %208 = vector.load %arg4[%c1_222, %c0_223, %c0_224] : memref<9x8x8xbf16, #tpu.memory_space<vmem>>, vector<1x8x8xbf16>
    %209 = vector.shape_cast %208 : vector<1x8x8xbf16> to vector<8x8xbf16>
    %210 = arith.truncf %207 : vector<64x8xf32> to vector<64x8xbf16>
    %cst_225 = arith.constant dense<0.000000e+00> : vector<64x8xf32>
    %211 = tpu.matmul %210, %209, %cst_225 {dimension_numbers = #tpu.dot_dimension_numbers<[1], [0], [0], [1], [0, 0, 1, 1], [], []>} : vector<64x8xbf16>, vector<8x8xbf16>, vector<64x8xf32> -> vector<64x8xf32>
    %212 = arith.addf %205, %211 : vector<64x8xf32>
    %c0_226 = arith.constant 0 : index
    %c2_227 = arith.constant 2 : index
    %c0_228 = arith.constant 0 : index
    %213 = vector.load %arg13[%c0_226, %c2_227, %c0_228] : memref<10x10x8xf32, #tpu.memory_space<vmem>>, vector<8x8x8xf32>
    %214 = vector.shape_cast %213 : vector<8x8x8xf32> to vector<64x8xf32>
    %c2_229 = arith.constant 2 : index
    %c0_230 = arith.constant 0 : index
    %c0_231 = arith.constant 0 : index
    %215 = vector.load %arg4[%c2_229, %c0_230, %c0_231] : memref<9x8x8xbf16, #tpu.memory_space<vmem>>, vector<1x8x8xbf16>
    %216 = vector.shape_cast %215 : vector<1x8x8xbf16> to vector<8x8xbf16>
    %217 = arith.truncf %214 : vector<64x8xf32> to vector<64x8xbf16>
    %cst_232 = arith.constant dense<0.000000e+00> : vector<64x8xf32>
    %218 = tpu.matmul %217, %216, %cst_232 {dimension_numbers = #tpu.dot_dimension_numbers<[1], [0], [0], [1], [0, 0, 1, 1], [], []>} : vector<64x8xbf16>, vector<8x8xbf16>, vector<64x8xf32> -> vector<64x8xf32>
    %219 = arith.addf %212, %218 : vector<64x8xf32>
    %c1_233 = arith.constant 1 : index
    %c0_234 = arith.constant 0 : index
    %c0_235 = arith.constant 0 : index
    %220 = vector.load %arg13[%c1_233, %c0_234, %c0_235] : memref<10x10x8xf32, #tpu.memory_space<vmem>>, vector<8x8x8xf32>
    %221 = vector.shape_cast %220 : vector<8x8x8xf32> to vector<64x8xf32>
    %c3_236 = arith.constant 3 : index
    %c0_237 = arith.constant 0 : index
    %c0_238 = arith.constant 0 : index
    %222 = vector.load %arg4[%c3_236, %c0_237, %c0_238] : memref<9x8x8xbf16, #tpu.memory_space<vmem>>, vector<1x8x8xbf16>
    %223 = vector.shape_cast %222 : vector<1x8x8xbf16> to vector<8x8xbf16>
    %224 = arith.truncf %221 : vector<64x8xf32> to vector<64x8xbf16>
    %cst_239 = arith.constant dense<0.000000e+00> : vector<64x8xf32>
    %225 = tpu.matmul %224, %223, %cst_239 {dimension_numbers = #tpu.dot_dimension_numbers<[1], [0], [0], [1], [0, 0, 1, 1], [], []>} : vector<64x8xbf16>, vector<8x8xbf16>, vector<64x8xf32> -> vector<64x8xf32>
    %226 = arith.addf %219, %225 : vector<64x8xf32>
    %c1_240 = arith.constant 1 : index
    %c1_241 = arith.constant 1 : index
    %c0_242 = arith.constant 0 : index
    %227 = vector.load %arg13[%c1_240, %c1_241, %c0_242] : memref<10x10x8xf32, #tpu.memory_space<vmem>>, vector<8x8x8xf32>
    %228 = vector.shape_cast %227 : vector<8x8x8xf32> to vector<64x8xf32>
    %c4_243 = arith.constant 4 : index
    %c0_244 = arith.constant 0 : index
    %c0_245 = arith.constant 0 : index
    %229 = vector.load %arg4[%c4_243, %c0_244, %c0_245] : memref<9x8x8xbf16, #tpu.memory_space<vmem>>, vector<1x8x8xbf16>
    %230 = vector.shape_cast %229 : vector<1x8x8xbf16> to vector<8x8xbf16>
    %231 = arith.truncf %228 : vector<64x8xf32> to vector<64x8xbf16>
    %cst_246 = arith.constant dense<0.000000e+00> : vector<64x8xf32>
    %232 = tpu.matmul %231, %230, %cst_246 {dimension_numbers = #tpu.dot_dimension_numbers<[1], [0], [0], [1], [0, 0, 1, 1], [], []>} : vector<64x8xbf16>, vector<8x8xbf16>, vector<64x8xf32> -> vector<64x8xf32>
    %233 = arith.addf %226, %232 : vector<64x8xf32>
    %c1_247 = arith.constant 1 : index
    %c2_248 = arith.constant 2 : index
    %c0_249 = arith.constant 0 : index
    %234 = vector.load %arg13[%c1_247, %c2_248, %c0_249] : memref<10x10x8xf32, #tpu.memory_space<vmem>>, vector<8x8x8xf32>
    %235 = vector.shape_cast %234 : vector<8x8x8xf32> to vector<64x8xf32>
    %c5_250 = arith.constant 5 : index
    %c0_251 = arith.constant 0 : index
    %c0_252 = arith.constant 0 : index
    %236 = vector.load %arg4[%c5_250, %c0_251, %c0_252] : memref<9x8x8xbf16, #tpu.memory_space<vmem>>, vector<1x8x8xbf16>
    %237 = vector.shape_cast %236 : vector<1x8x8xbf16> to vector<8x8xbf16>
    %238 = arith.truncf %235 : vector<64x8xf32> to vector<64x8xbf16>
    %cst_253 = arith.constant dense<0.000000e+00> : vector<64x8xf32>
    %239 = tpu.matmul %238, %237, %cst_253 {dimension_numbers = #tpu.dot_dimension_numbers<[1], [0], [0], [1], [0, 0, 1, 1], [], []>} : vector<64x8xbf16>, vector<8x8xbf16>, vector<64x8xf32> -> vector<64x8xf32>
    %240 = arith.addf %233, %239 : vector<64x8xf32>
    %c2_254 = arith.constant 2 : index
    %c0_255 = arith.constant 0 : index
    %c0_256 = arith.constant 0 : index
    %241 = vector.load %arg13[%c2_254, %c0_255, %c0_256] : memref<10x10x8xf32, #tpu.memory_space<vmem>>, vector<8x8x8xf32>
    %242 = vector.shape_cast %241 : vector<8x8x8xf32> to vector<64x8xf32>
    %c6_257 = arith.constant 6 : index
    %c0_258 = arith.constant 0 : index
    %c0_259 = arith.constant 0 : index
    %243 = vector.load %arg4[%c6_257, %c0_258, %c0_259] : memref<9x8x8xbf16, #tpu.memory_space<vmem>>, vector<1x8x8xbf16>
    %244 = vector.shape_cast %243 : vector<1x8x8xbf16> to vector<8x8xbf16>
    %245 = arith.truncf %242 : vector<64x8xf32> to vector<64x8xbf16>
    %cst_260 = arith.constant dense<0.000000e+00> : vector<64x8xf32>
    %246 = tpu.matmul %245, %244, %cst_260 {dimension_numbers = #tpu.dot_dimension_numbers<[1], [0], [0], [1], [0, 0, 1, 1], [], []>} : vector<64x8xbf16>, vector<8x8xbf16>, vector<64x8xf32> -> vector<64x8xf32>
    %247 = arith.addf %240, %246 : vector<64x8xf32>
    %c2_261 = arith.constant 2 : index
    %c1_262 = arith.constant 1 : index
    %c0_263 = arith.constant 0 : index
    %248 = vector.load %arg13[%c2_261, %c1_262, %c0_263] : memref<10x10x8xf32, #tpu.memory_space<vmem>>, vector<8x8x8xf32>
    %249 = vector.shape_cast %248 : vector<8x8x8xf32> to vector<64x8xf32>
    %c7_264 = arith.constant 7 : index
    %c0_265 = arith.constant 0 : index
    %c0_266 = arith.constant 0 : index
    %250 = vector.load %arg4[%c7_264, %c0_265, %c0_266] : memref<9x8x8xbf16, #tpu.memory_space<vmem>>, vector<1x8x8xbf16>
    %251 = vector.shape_cast %250 : vector<1x8x8xbf16> to vector<8x8xbf16>
    %252 = arith.truncf %249 : vector<64x8xf32> to vector<64x8xbf16>
    %cst_267 = arith.constant dense<0.000000e+00> : vector<64x8xf32>
    %253 = tpu.matmul %252, %251, %cst_267 {dimension_numbers = #tpu.dot_dimension_numbers<[1], [0], [0], [1], [0, 0, 1, 1], [], []>} : vector<64x8xbf16>, vector<8x8xbf16>, vector<64x8xf32> -> vector<64x8xf32>
    %254 = arith.addf %247, %253 : vector<64x8xf32>
    %c2_268 = arith.constant 2 : index
    %c2_269 = arith.constant 2 : index
    %c0_270 = arith.constant 0 : index
    %255 = vector.load %arg13[%c2_268, %c2_269, %c0_270] : memref<10x10x8xf32, #tpu.memory_space<vmem>>, vector<8x8x8xf32>
    %256 = vector.shape_cast %255 : vector<8x8x8xf32> to vector<64x8xf32>
    %c8_271 = arith.constant 8 : index
    %c0_272 = arith.constant 0 : index
    %c0_273 = arith.constant 0 : index
    %257 = vector.load %arg4[%c8_271, %c0_272, %c0_273] : memref<9x8x8xbf16, #tpu.memory_space<vmem>>, vector<1x8x8xbf16>
    %258 = vector.shape_cast %257 : vector<1x8x8xbf16> to vector<8x8xbf16>
    %259 = arith.truncf %256 : vector<64x8xf32> to vector<64x8xbf16>
    %cst_274 = arith.constant dense<0.000000e+00> : vector<64x8xf32>
    %260 = tpu.matmul %259, %258, %cst_274 {dimension_numbers = #tpu.dot_dimension_numbers<[1], [0], [0], [1], [0, 0, 1, 1], [], []>} : vector<64x8xbf16>, vector<8x8xbf16>, vector<64x8xf32> -> vector<64x8xf32>
    %261 = arith.addf %254, %260 : vector<64x8xf32>
    %262 = vector.broadcast %195 : vector<1x8xf32> to vector<64x8xf32>
    %263 = arith.addf %261, %262 : vector<64x8xf32>
    %cst_275 = arith.constant 0.000000e+00 : f32
    %264 = vector.broadcast %cst_275 : f32 to vector<64x8xf32>
    %265 = arith.maximumf %263, %264 : vector<64x8xf32>
    %c3_276 = arith.constant 3 : index
    %c0_277 = arith.constant 0 : index
    %266 = vector.load %arg10[%c3_276, %c0_277] : memref<6x8xf32, #tpu.memory_space<vmem>>, vector<1x8xf32>
    %267 = vector.shape_cast %265 : vector<64x8xf32> to vector<8x8x8xf32>
    %c1_278 = arith.constant 1 : index
    %c1_279 = arith.constant 1 : index
    %c0_280 = arith.constant 0 : index
    %268 = vector.load %arg13[%c1_278, %c1_279, %c0_280] : memref<10x10x8xf32, #tpu.memory_space<vmem>>, vector<8x8x8xf32>
    tpu.vector_store %arg13[%c1_278, %c1_279, %c0_280], %267 {strides = array<i32>} : memref<10x10x8xf32, #tpu.memory_space<vmem>>, vector<8x8x8xf32>,
    %cst_281 = arith.constant 0.000000e+00 : f32
    %269 = vector.broadcast %cst_281 : f32 to vector<64x8xf32>
    %c0_282 = arith.constant 0 : index
    %c0_283 = arith.constant 0 : index
    %c0_284 = arith.constant 0 : index
    %270 = vector.load %arg13[%c0_282, %c0_283, %c0_284] : memref<10x10x8xf32, #tpu.memory_space<vmem>>, vector<8x8x8xf32>
    %271 = vector.shape_cast %270 : vector<8x8x8xf32> to vector<64x8xf32>
    %c0_285 = arith.constant 0 : index
    %c0_286 = arith.constant 0 : index
    %c0_287 = arith.constant 0 : index
    %272 = vector.load %arg5[%c0_285, %c0_286, %c0_287] : memref<9x8x8xbf16, #tpu.memory_space<vmem>>, vector<1x8x8xbf16>
    %273 = vector.shape_cast %272 : vector<1x8x8xbf16> to vector<8x8xbf16>
    %274 = arith.truncf %271 : vector<64x8xf32> to vector<64x8xbf16>
    %cst_288 = arith.constant dense<0.000000e+00> : vector<64x8xf32>
    %275 = tpu.matmul %274, %273, %cst_288 {dimension_numbers = #tpu.dot_dimension_numbers<[1], [0], [0], [1], [0, 0, 1, 1], [], []>} : vector<64x8xbf16>, vector<8x8xbf16>, vector<64x8xf32> -> vector<64x8xf32>
    %276 = arith.addf %269, %275 : vector<64x8xf32>
    %c0_289 = arith.constant 0 : index
    %c1_290 = arith.constant 1 : index
    %c0_291 = arith.constant 0 : index
    %277 = vector.load %arg13[%c0_289, %c1_290, %c0_291] : memref<10x10x8xf32, #tpu.memory_space<vmem>>, vector<8x8x8xf32>
    %278 = vector.shape_cast %277 : vector<8x8x8xf32> to vector<64x8xf32>
    %c1_292 = arith.constant 1 : index
    %c0_293 = arith.constant 0 : index
    %c0_294 = arith.constant 0 : index
    %279 = vector.load %arg5[%c1_292, %c0_293, %c0_294] : memref<9x8x8xbf16, #tpu.memory_space<vmem>>, vector<1x8x8xbf16>
    %280 = vector.shape_cast %279 : vector<1x8x8xbf16> to vector<8x8xbf16>
    %281 = arith.truncf %278 : vector<64x8xf32> to vector<64x8xbf16>
    %cst_295 = arith.constant dense<0.000000e+00> : vector<64x8xf32>
    %282 = tpu.matmul %281, %280, %cst_295 {dimension_numbers = #tpu.dot_dimension_numbers<[1], [0], [0], [1], [0, 0, 1, 1], [], []>} : vector<64x8xbf16>, vector<8x8xbf16>, vector<64x8xf32> -> vector<64x8xf32>
    %283 = arith.addf %276, %282 : vector<64x8xf32>
    %c0_296 = arith.constant 0 : index
    %c2_297 = arith.constant 2 : index
    %c0_298 = arith.constant 0 : index
    %284 = vector.load %arg13[%c0_296, %c2_297, %c0_298] : memref<10x10x8xf32, #tpu.memory_space<vmem>>, vector<8x8x8xf32>
    %285 = vector.shape_cast %284 : vector<8x8x8xf32> to vector<64x8xf32>
    %c2_299 = arith.constant 2 : index
    %c0_300 = arith.constant 0 : index
    %c0_301 = arith.constant 0 : index
    %286 = vector.load %arg5[%c2_299, %c0_300, %c0_301] : memref<9x8x8xbf16, #tpu.memory_space<vmem>>, vector<1x8x8xbf16>
    %287 = vector.shape_cast %286 : vector<1x8x8xbf16> to vector<8x8xbf16>
    %288 = arith.truncf %285 : vector<64x8xf32> to vector<64x8xbf16>
    %cst_302 = arith.constant dense<0.000000e+00> : vector<64x8xf32>
    %289 = tpu.matmul %288, %287, %cst_302 {dimension_numbers = #tpu.dot_dimension_numbers<[1], [0], [0], [1], [0, 0, 1, 1], [], []>} : vector<64x8xbf16>, vector<8x8xbf16>, vector<64x8xf32> -> vector<64x8xf32>
    %290 = arith.addf %283, %289 : vector<64x8xf32>
    %c1_303 = arith.constant 1 : index
    %c0_304 = arith.constant 0 : index
    %c0_305 = arith.constant 0 : index
    %291 = vector.load %arg13[%c1_303, %c0_304, %c0_305] : memref<10x10x8xf32, #tpu.memory_space<vmem>>, vector<8x8x8xf32>
    %292 = vector.shape_cast %291 : vector<8x8x8xf32> to vector<64x8xf32>
    %c3_306 = arith.constant 3 : index
    %c0_307 = arith.constant 0 : index
    %c0_308 = arith.constant 0 : index
    %293 = vector.load %arg5[%c3_306, %c0_307, %c0_308] : memref<9x8x8xbf16, #tpu.memory_space<vmem>>, vector<1x8x8xbf16>
    %294 = vector.shape_cast %293 : vector<1x8x8xbf16> to vector<8x8xbf16>
    %295 = arith.truncf %292 : vector<64x8xf32> to vector<64x8xbf16>
    %cst_309 = arith.constant dense<0.000000e+00> : vector<64x8xf32>
    %296 = tpu.matmul %295, %294, %cst_309 {dimension_numbers = #tpu.dot_dimension_numbers<[1], [0], [0], [1], [0, 0, 1, 1], [], []>} : vector<64x8xbf16>, vector<8x8xbf16>, vector<64x8xf32> -> vector<64x8xf32>
    %297 = arith.addf %290, %296 : vector<64x8xf32>
    %c1_310 = arith.constant 1 : index
    %c1_311 = arith.constant 1 : index
    %c0_312 = arith.constant 0 : index
    %298 = vector.load %arg13[%c1_310, %c1_311, %c0_312] : memref<10x10x8xf32, #tpu.memory_space<vmem>>, vector<8x8x8xf32>
    %299 = vector.shape_cast %298 : vector<8x8x8xf32> to vector<64x8xf32>
    %c4_313 = arith.constant 4 : index
    %c0_314 = arith.constant 0 : index
    %c0_315 = arith.constant 0 : index
    %300 = vector.load %arg5[%c4_313, %c0_314, %c0_315] : memref<9x8x8xbf16, #tpu.memory_space<vmem>>, vector<1x8x8xbf16>
    %301 = vector.shape_cast %300 : vector<1x8x8xbf16> to vector<8x8xbf16>
    %302 = arith.truncf %299 : vector<64x8xf32> to vector<64x8xbf16>
    %cst_316 = arith.constant dense<0.000000e+00> : vector<64x8xf32>
    %303 = tpu.matmul %302, %301, %cst_316 {dimension_numbers = #tpu.dot_dimension_numbers<[1], [0], [0], [1], [0, 0, 1, 1], [], []>} : vector<64x8xbf16>, vector<8x8xbf16>, vector<64x8xf32> -> vector<64x8xf32>
    %304 = arith.addf %297, %303 : vector<64x8xf32>
    %c1_317 = arith.constant 1 : index
    %c2_318 = arith.constant 2 : index
    %c0_319 = arith.constant 0 : index
    %305 = vector.load %arg13[%c1_317, %c2_318, %c0_319] : memref<10x10x8xf32, #tpu.memory_space<vmem>>, vector<8x8x8xf32>
    %306 = vector.shape_cast %305 : vector<8x8x8xf32> to vector<64x8xf32>
    %c5_320 = arith.constant 5 : index
    %c0_321 = arith.constant 0 : index
    %c0_322 = arith.constant 0 : index
    %307 = vector.load %arg5[%c5_320, %c0_321, %c0_322] : memref<9x8x8xbf16, #tpu.memory_space<vmem>>, vector<1x8x8xbf16>
    %308 = vector.shape_cast %307 : vector<1x8x8xbf16> to vector<8x8xbf16>
    %309 = arith.truncf %306 : vector<64x8xf32> to vector<64x8xbf16>
    %cst_323 = arith.constant dense<0.000000e+00> : vector<64x8xf32>
    %310 = tpu.matmul %309, %308, %cst_323 {dimension_numbers = #tpu.dot_dimension_numbers<[1], [0], [0], [1], [0, 0, 1, 1], [], []>} : vector<64x8xbf16>, vector<8x8xbf16>, vector<64x8xf32> -> vector<64x8xf32>
    %311 = arith.addf %304, %310 : vector<64x8xf32>
    %c2_324 = arith.constant 2 : index
    %c0_325 = arith.constant 0 : index
    %c0_326 = arith.constant 0 : index
    %312 = vector.load %arg13[%c2_324, %c0_325, %c0_326] : memref<10x10x8xf32, #tpu.memory_space<vmem>>, vector<8x8x8xf32>
    %313 = vector.shape_cast %312 : vector<8x8x8xf32> to vector<64x8xf32>
    %c6_327 = arith.constant 6 : index
    %c0_328 = arith.constant 0 : index
    %c0_329 = arith.constant 0 : index
    %314 = vector.load %arg5[%c6_327, %c0_328, %c0_329] : memref<9x8x8xbf16, #tpu.memory_space<vmem>>, vector<1x8x8xbf16>
    %315 = vector.shape_cast %314 : vector<1x8x8xbf16> to vector<8x8xbf16>
    %316 = arith.truncf %313 : vector<64x8xf32> to vector<64x8xbf16>
    %cst_330 = arith.constant dense<0.000000e+00> : vector<64x8xf32>
    %317 = tpu.matmul %316, %315, %cst_330 {dimension_numbers = #tpu.dot_dimension_numbers<[1], [0], [0], [1], [0, 0, 1, 1], [], []>} : vector<64x8xbf16>, vector<8x8xbf16>, vector<64x8xf32> -> vector<64x8xf32>
    %318 = arith.addf %311, %317 : vector<64x8xf32>
    %c2_331 = arith.constant 2 : index
    %c1_332 = arith.constant 1 : index
    %c0_333 = arith.constant 0 : index
    %319 = vector.load %arg13[%c2_331, %c1_332, %c0_333] : memref<10x10x8xf32, #tpu.memory_space<vmem>>, vector<8x8x8xf32>
    %320 = vector.shape_cast %319 : vector<8x8x8xf32> to vector<64x8xf32>
    %c7_334 = arith.constant 7 : index
    %c0_335 = arith.constant 0 : index
    %c0_336 = arith.constant 0 : index
    %321 = vector.load %arg5[%c7_334, %c0_335, %c0_336] : memref<9x8x8xbf16, #tpu.memory_space<vmem>>, vector<1x8x8xbf16>
    %322 = vector.shape_cast %321 : vector<1x8x8xbf16> to vector<8x8xbf16>
    %323 = arith.truncf %320 : vector<64x8xf32> to vector<64x8xbf16>
    %cst_337 = arith.constant dense<0.000000e+00> : vector<64x8xf32>
    %324 = tpu.matmul %323, %322, %cst_337 {dimension_numbers = #tpu.dot_dimension_numbers<[1], [0], [0], [1], [0, 0, 1, 1], [], []>} : vector<64x8xbf16>, vector<8x8xbf16>, vector<64x8xf32> -> vector<64x8xf32>
    %325 = arith.addf %318, %324 : vector<64x8xf32>
    %c2_338 = arith.constant 2 : index
    %c2_339 = arith.constant 2 : index
    %c0_340 = arith.constant 0 : index
    %326 = vector.load %arg13[%c2_338, %c2_339, %c0_340] : memref<10x10x8xf32, #tpu.memory_space<vmem>>, vector<8x8x8xf32>
    %327 = vector.shape_cast %326 : vector<8x8x8xf32> to vector<64x8xf32>
    %c8_341 = arith.constant 8 : index
    %c0_342 = arith.constant 0 : index
    %c0_343 = arith.constant 0 : index
    %328 = vector.load %arg5[%c8_341, %c0_342, %c0_343] : memref<9x8x8xbf16, #tpu.memory_space<vmem>>, vector<1x8x8xbf16>
    %329 = vector.shape_cast %328 : vector<1x8x8xbf16> to vector<8x8xbf16>
    %330 = arith.truncf %327 : vector<64x8xf32> to vector<64x8xbf16>
    %cst_344 = arith.constant dense<0.000000e+00> : vector<64x8xf32>
    %331 = tpu.matmul %330, %329, %cst_344 {dimension_numbers = #tpu.dot_dimension_numbers<[1], [0], [0], [1], [0, 0, 1, 1], [], []>} : vector<64x8xbf16>, vector<8x8xbf16>, vector<64x8xf32> -> vector<64x8xf32>
    %332 = arith.addf %325, %331 : vector<64x8xf32>
    %333 = vector.broadcast %266 : vector<1x8xf32> to vector<64x8xf32>
    %334 = arith.addf %332, %333 : vector<64x8xf32>
    %335 = arith.addf %334, %194 : vector<64x8xf32>
    %cst_345 = arith.constant 0.000000e+00 : f32
    %336 = vector.broadcast %cst_345 : f32 to vector<64x8xf32>
    %337 = arith.maximumf %335, %336 : vector<64x8xf32>
    %c0_346 = arith.constant 0 : index
    %c0_347 = arith.constant 0 : index
    %338 = vector.load %arg7[%c0_346, %c0_347] : memref<8x8xbf16, #tpu.memory_space<vmem>>, vector<8x8xbf16>
    %339 = arith.truncf %337 : vector<64x8xf32> to vector<64x8xbf16>
    %cst_348 = arith.constant dense<0.000000e+00> : vector<64x8xf32>
    %340 = tpu.matmul %339, %338, %cst_348 {dimension_numbers = #tpu.dot_dimension_numbers<[1], [0], [0], [1], [0, 0, 1, 1], [], []>} : vector<64x8xbf16>, vector<8x8xbf16>, vector<64x8xf32> -> vector<64x8xf32>
    %c0_349 = arith.constant 0 : index
    %c0_350 = arith.constant 0 : index
    %341 = vector.load %arg8[%c0_349, %c0_350] : memref<8x8xbf16, #tpu.memory_space<vmem>>, vector<8x8xbf16>
    %342 = arith.truncf %194 : vector<64x8xf32> to vector<64x8xbf16>
    %cst_351 = arith.constant dense<0.000000e+00> : vector<64x8xf32>
    %343 = tpu.matmul %342, %341, %cst_351 {dimension_numbers = #tpu.dot_dimension_numbers<[1], [0], [0], [1], [0, 0, 1, 1], [], []>} : vector<64x8xbf16>, vector<8x8xbf16>, vector<64x8xf32> -> vector<64x8xf32>
    %344 = arith.addf %340, %343 : vector<64x8xf32>
    %c5_352 = arith.constant 5 : index
    %c0_353 = arith.constant 0 : index
    %345 = vector.load %arg10[%c5_352, %c0_353] : memref<6x8xf32, #tpu.memory_space<vmem>>, vector<1x8xf32>
    %346 = vector.broadcast %345 : vector<1x8xf32> to vector<64x8xf32>
    %347 = arith.addf %344, %346 : vector<64x8xf32>
    %c0_354 = arith.constant 0 : index
    %c0_355 = arith.constant 0 : index
    %348 = vector.load %arg9[%c0_354, %c0_355] : memref<4x8xbf16, #tpu.memory_space<vmem>>, vector<4x8xbf16>
    %349 = arith.truncf %38 : vector<64x4xf32> to vector<64x4xbf16>
    %cst_356 = arith.constant dense<0.000000e+00> : vector<64x8xf32>
    %350 = tpu.matmul %349, %348, %cst_356 {dimension_numbers = #tpu.dot_dimension_numbers<[1], [0], [0], [1], [0, 0, 1, 1], [], []>} : vector<64x4xbf16>, vector<4x8xbf16>, vector<64x8xf32> -> vector<64x8xf32>
    %351 = arith.addf %347, %350 : vector<64x8xf32>
    %cst_357 = arith.constant 0.000000e+00 : f32
    %352 = vector.broadcast %cst_357 : f32 to vector<64x8xf32>
    %353 = arith.maximumf %351, %352 : vector<64x8xf32>
    %c0_358 = arith.constant 0 : index
    %c0_359 = arith.constant 0 : index
    %c0_360 = arith.constant 0 : index
    %354 = vector.load %arg11[%c0_358, %c0_359, %c0_360] : memref<1x64x8xf32, #tpu.memory_space<vmem>>, vector<1x64x8xf32>
    %355 = vector.shape_cast %354 : vector<1x64x8xf32> to vector<64x8xf32>
    %356 = vector.shape_cast %353 : vector<64x8xf32> to vector<1x64x8xf32>
    tpu.vector_store %arg11[%c0_358, %c0_359, %c0_360], %356 {strides = array<i32>} : memref<1x64x8xf32, #tpu.memory_space<vmem>>, vector<1x64x8xf32>,
    return
  }
  func.func @transform_0(%arg0: i32) -> (i32, i32, i32, i32, i32) {
    %c0_i32 = arith.constant 0 : i32
    %c0_i32_0 = arith.constant 0 : i32
    %c0_i32_1 = arith.constant 0 : i32
    %c0_i32_2 = arith.constant 0 : i32
    %c0_i32_3 = arith.constant 0 : i32
    return %arg0, %c0_i32, %c0_i32_0, %c0_i32_1, %c0_i32_2 : i32, i32, i32, i32, i32
  }
  func.func @transform_1(%arg0: i32) -> (i32, i32, i32) {
    %c0_i32 = arith.constant 0 : i32
    %c0_i32_0 = arith.constant 0 : i32
    %c0_i32_1 = arith.constant 0 : i32
    %c0_i32_2 = arith.constant 0 : i32
    return %c0_i32, %c0_i32_0, %c0_i32_1 : i32, i32, i32
  }
  func.func @transform_2(%arg0: i32) -> (i32, i32, i32) {
    %c0_i32 = arith.constant 0 : i32
    %c0_i32_0 = arith.constant 0 : i32
    %c0_i32_1 = arith.constant 0 : i32
    %c0_i32_2 = arith.constant 0 : i32
    return %c0_i32, %c0_i32_0, %c0_i32_1 : i32, i32, i32
  }
  func.func @transform_3(%arg0: i32) -> (i32, i32, i32) {
    %c0_i32 = arith.constant 0 : i32
    %c0_i32_0 = arith.constant 0 : i32
    %c0_i32_1 = arith.constant 0 : i32
    %c0_i32_2 = arith.constant 0 : i32
    return %c0_i32, %c0_i32_0, %c0_i32_1 : i32, i32, i32
  }
  func.func @transform_4(%arg0: i32) -> (i32, i32, i32) {
    %c0_i32 = arith.constant 0 : i32
    %c0_i32_0 = arith.constant 0 : i32
    %c0_i32_1 = arith.constant 0 : i32
    %c0_i32_2 = arith.constant 0 : i32
    return %c0_i32, %c0_i32_0, %c0_i32_1 : i32, i32, i32
  }
  func.func @transform_5(%arg0: i32) -> (i32, i32) {
    %c0_i32 = arith.constant 0 : i32
    %c0_i32_0 = arith.constant 0 : i32
    %c0_i32_1 = arith.constant 0 : i32
    return %c0_i32, %c0_i32_0 : i32, i32
  }
  func.func @transform_6(%arg0: i32) -> (i32, i32) {
    %c0_i32 = arith.constant 0 : i32
    %c0_i32_0 = arith.constant 0 : i32
    %c0_i32_1 = arith.constant 0 : i32
    return %c0_i32, %c0_i32_0 : i32, i32
  }
  func.func @transform_7(%arg0: i32) -> (i32, i32) {
    %c0_i32 = arith.constant 0 : i32
    %c0_i32_0 = arith.constant 0 : i32
    %c0_i32_1 = arith.constant 0 : i32
    return %c0_i32, %c0_i32_0 : i32, i32
  }
  func.func @transform_8(%arg0: i32) -> (i32, i32) {
    %c0_i32 = arith.constant 0 : i32
    %c0_i32_0 = arith.constant 0 : i32
    %c0_i32_1 = arith.constant 0 : i32
    return %c0_i32, %c0_i32_0 : i32, i32
  }
  func.func @transform_9(%arg0: i32) -> (i32, i32) {
    %c0_i32 = arith.constant 0 : i32
    %c0_i32_0 = arith.constant 0 : i32
    %c0_i32_1 = arith.constant 0 : i32
    return %c0_i32, %c0_i32_0 : i32, i32
  }
  func.func @transform_10(%arg0: i32) -> (i32, i32, i32) {
    %c0_i32 = arith.constant 0 : i32
    %c0_i32_0 = arith.constant 0 : i32
    %c0_i32_1 = arith.constant 0 : i32
    return %arg0, %c0_i32, %c0_i32_0 : i32, i32, i32
  }
}

</mosaic_0001>

<llo_original>
// kernel: tree_forward.1
$region0: #{tree_forward.1}
  #allocation0 [shape = 'u32[]', space=smem, size = 0x4, offset = 0x4, fixed_abs, tag = 'smem constant byte address 0x4 - core index']
  #allocation1 [shape = 'u32[72,128]{1,0:T(1,128)}', space=vmem, size = 0x9000, scoped, tag = 'internal scratch']
  #allocation2 [shape = 'f32[4,9,9,4]{3,2,1,0:T(8,128)}', space=vmem, size = 0x48000, scoped, tag = 'scratch operand']
  #allocation3 [shape = 'f32[10,10,8]{2,1,0:T(8,128)}', space=vmem, size = 0x14000, scoped, tag = 'scratch operand']
  %s0 = inlined_call_operand.vmem [shape: f32[2,4,8,8,4], index: 0, kind: input, shape index: {}]
  %s1 = inlined_call_operand.vmem [shape: bf16[9,4,8], index: 1, kind: input, shape index: {}]
  %s2 = inlined_call_operand.vmem [shape: bf16[9,8,8], index: 2, kind: input, shape index: {}]
  %s3 = inlined_call_operand.vmem [shape: bf16[9,8,8], index: 3, kind: input, shape index: {}]
  %s4 = inlined_call_operand.vmem [shape: bf16[9,8,8], index: 4, kind: input, shape index: {}]
  %s5 = inlined_call_operand.vmem [shape: bf16[4,8], index: 5, kind: input, shape index: {}]
  %s6 = inlined_call_operand.vmem [shape: bf16[8,8], index: 6, kind: input, shape index: {}]
  %s7 = inlined_call_operand.vmem [shape: bf16[8,8], index: 7, kind: input, shape index: {}]
  %s8 = inlined_call_operand.vmem [shape: bf16[4,8], index: 8, kind: input, shape index: {}]
  %s9 = inlined_call_operand.vmem [shape: f32[6,8], index: 9, kind: input, shape index: {}]
  %s10 = inlined_call_operand.vmem [shape: f32[2,64,8], index: 10, kind: output, shape index: {}]
  %s11 = sld [smem:[#allocation0]]
  $region73: #{tree_forward.1} parent=0
    _
  %s13 = ssub.s32 1, %s11
  %s14 = scalar_select 0, %s13, %s11
  loop: start=0, step=1, limit=4
  $region2: #{tree_forward.1} parent=0 // loop_pre_header
    _
  $region3: #{tree_forward.1} parent=0 // loop_header
    %s16 = sphi 0, %s20
    %p17 = scmp.ge.s32.totalorder %s16, 4
    %s26 = sphi 0, %s28
    %s29 = sphi 0, %s26
    %s30 = sphi 0, %s29
    %s46 = sphi 0, %s30
    %s50 = sphi 0, %s50
    %s52 = sphi 0, %s50
    %s53 = sphi 0, %s52
    %s67 = sphi 0, %s53
    %s71 = sphi 0, %s71
    %s73 = sphi 0, %s71
    %s74 = sphi 0, %s73
    %s88 = sphi 0, %s74
    %s92 = sphi 0, %s92
    %s94 = sphi 0, %s92
    %s95 = sphi 0, %s94
    %s109 = sphi 0, %s95
    %s113 = sphi 0, %s113
    %s115 = sphi 0, %s113
    %s116 = sphi 0, %s115
    %s130 = sphi 0, %s116
    %s134 = sphi 0, %s134
    %s136 = sphi 0, %s134
    %s137 = sphi 0, %s136
    %s151 = sphi 0, %s137
    %s155 = sphi 0, %s155
    %s157 = sphi 0, %s155
    %s158 = sphi 0, %s157
    %s172 = sphi 0, %s158
    %s176 = sphi 0, %s176
    %s178 = sphi 0, %s176
    %s179 = sphi 0, %s178
    %s193 = sphi 0, %s179
    %s197 = sphi 0, %s197
    %s199 = sphi 0, %s197
    %s200 = sphi 0, %s199
    %s214 = sphi 0, %s200
    %s218 = sphi 0, %s218
    %s220 = sphi 0, %s218
    %s221 = sphi 0, %s220
    %s235 = sphi 0, %s221
    %s241 = sphi 0, %s243
    %s244 = sphi 0, %s241
    %s245 = sphi 0, %s244
    %s261 = sphi 0, %s245
  $region4: #{tree_forward.1} parent=0 // loop_header_branch
    %19 = sbr.rel (%p17) target = $region8
  $region5: #{tree_forward.1} parent=0 // loop_body
    %s21 = ssub.s32 %s16, 1
    %s22 = ssub.s32 %s16, 2
    %s23 = sadd.s32 %s16, 1
    %s24 = ssub.s32 %s16, %s23
    %p25 = scmp.eq.s32.totalorder %s24, 0
    %s27 = sadd.s32 %s26, 1
    %s28 = scalar_select %p25, %s26, %s27
    %p31 = pneg %p25
    %p32 = scmp.eq.s32.totalorder %s16, 1
    %p33 = por %p31, %p32
    %p34 = scmp.ne.s32.totalorder %s26, %s29
    %p35 = scmp.eq.s32.totalorder %s16, 0
    %p36 = por %p34, %p35
    %p37 = scmp.ne.s32.totalorder %s26, %s29
    %p38 = scmp.eq.s32.totalorder %s21, 1
    %p39 = por %p37, %p38
    %p40 = scmp.ne.s32.totalorder %s29, %s30
    %p41 = scmp.eq.s32.totalorder %s21, 0
    %p42 = por %p40, %p41
    %p43 = scmp.ne.s32.totalorder %s29, %s30
    %p44 = scmp.eq.s32.totalorder %s22, 1
    %p45 = por %p43, %p44
    %p47 = scmp.ne.s32.totalorder %s30, %s46
    %p48 = scmp.eq.s32.totalorder %s22, 0
    %p49 = por %p47, %p48
    %s51 = sadd.s32 %s50, 1
    %p54 = scmp.eq.s32.totalorder %s16, 1
    %p55 = scmp.ne.s32.totalorder %s50, %s52
    %p56 = scmp.eq.s32.totalorder %s16, 0
    %p57 = por %p55, %p56
    %p58 = scmp.ne.s32.totalorder %s50, %s52
    %p59 = scmp.eq.s32.totalorder %s21, 1
    %p60 = por %p58, %p59
    %p61 = scmp.ne.s32.totalorder %s52, %s53
    %p62 = scmp.eq.s32.totalorder %s21, 0
    %p63 = por %p61, %p62
    %p64 = scmp.ne.s32.totalorder %s52, %s53
    %p65 = scmp.eq.s32.totalorder %s22, 1
    %p66 = por %p64, %p65
    %p68 = scmp.ne.s32.totalorder %s53, %s67
    %p69 = scmp.eq.s32.totalorder %s22, 0
    %p70 = por %p68, %p69
    %s72 = sadd.s32 %s71, 1
    %p75 = scmp.eq.s32.totalorder %s16, 1
    %p76 = scmp.ne.s32.totalorder %s71, %s73
    %p77 = scmp.eq.s32.totalorder %s16, 0
    %p78 = por %p76, %p77
    %p79 = scmp.ne.s32.totalorder %s71, %s73
    %p80 = scmp.eq.s32.totalorder %s21, 1
    %p81 = por %p79, %p80
    %p82 = scmp.ne.s32.totalorder %s73, %s74
    %p83 = scmp.eq.s32.totalorder %s21, 0
    %p84 = por %p82, %p83
    %p85 = scmp.ne.s32.totalorder %s73, %s74
    %p86 = scmp.eq.s32.totalorder %s22, 1
    %p87 = por %p85, %p86
    %p89 = scmp.ne.s32.totalorder %s74, %s88
    %p90 = scmp.eq.s32.totalorder %s22, 0
    %p91 = por %p89, %p90
    %s93 = sadd.s32 %s92, 1
    %p96 = scmp.eq.s32.totalorder %s16, 1
    %p97 = scmp.ne.s32.totalorder %s92, %s94
    %p98 = scmp.eq.s32.totalorder %s16, 0
    %p99 = por %p97, %p98
    %p100 = scmp.ne.s32.totalorder %s92, %s94
    %p101 = scmp.eq.s32.totalorder %s21, 1
    %p102 = por %p100, %p101
    %p103 = scmp.ne.s32.totalorder %s94, %s95
    %p104 = scmp.eq.s32.totalorder %s21, 0
    %p105 = por %p103, %p104
    %p106 = scmp.ne.s32.totalorder %s94, %s95
    %p107 = scmp.eq.s32.totalorder %s22, 1
    %p108 = por %p106, %p107
    %p110 = scmp.ne.s32.totalorder %s95, %s109
    %p111 = scmp.eq.s32.totalorder %s22, 0
    %p112 = por %p110, %p111
    %s114 = sadd.s32 %s113, 1
    %p117 = scmp.eq.s32.totalorder %s16, 1
    %p118 = scmp.ne.s32.totalorder %s113, %s115
    %p119 = scmp.eq.s32.totalorder %s16, 0
    %p120 = por %p118, %p119
    %p121 = scmp.ne.s32.totalorder %s113, %s115
    %p122 = scmp.eq.s32.totalorder %s21, 1
    %p123 = por %p121, %p122
    %p124 = scmp.ne.s32.totalorder %s115, %s116
    %p125 = scmp.eq.s32.totalorder %s21, 0
    %p126 = por %p124, %p125
    %p127 = scmp.ne.s32.totalorder %s115, %s116
    %p128 = scmp.eq.s32.totalorder %s22, 1
    %p129 = por %p127, %p128
    %p131 = scmp.ne.s32.totalorder %s116, %s130
    %p132 = scmp.eq.s32.totalorder %s22, 0
    %p133 = por %p131, %p132
    %s135 = sadd.s32 %s134, 1
    %p138 = scmp.eq.s32.totalorder %s16, 1
    %p139 = scmp.ne.s32.totalorder %s134, %s136
    %p140 = scmp.eq.s32.totalorder %s16, 0
    %p141 = por %p139, %p140
    %p142 = scmp.ne.s32.totalorder %s134, %s136
    %p143 = scmp.eq.s32.totalorder %s21, 1
    %p144 = por %p142, %p143
    %p145 = scmp.ne.s32.totalorder %s136, %s137
    %p146 = scmp.eq.s32.totalorder %s21, 0
    %p147 = por %p145, %p146
    %p148 = scmp.ne.s32.totalorder %s136, %s137
    %p149 = scmp.eq.s32.totalorder %s22, 1
    %p150 = por %p148, %p149
    %p152 = scmp.ne.s32.totalorder %s137, %s151
    %p153 = scmp.eq.s32.totalorder %s22, 0
    %p154 = por %p152, %p153
    %s156 = sadd.s32 %s155, 1
    %p159 = scmp.eq.s32.totalorder %s16, 1
    %p160 = scmp.ne.s32.totalorder %s155, %s157
    %p161 = scmp.eq.s32.totalorder %s16, 0
    %p162 = por %p160, %p161
    %p163 = scmp.ne.s32.totalorder %s155, %s157
    %p164 = scmp.eq.s32.totalorder %s21, 1
    %p165 = por %p163, %p164
    %p166 = scmp.ne.s32.totalorder %s157, %s158
    %p167 = scmp.eq.s32.totalorder %s21, 0
    %p168 = por %p166, %p167
    %p169 = scmp.ne.s32.totalorder %s157, %s158
    %p170 = scmp.eq.s32.totalorder %s22, 1
    %p171 = por %p169, %p170
    %p173 = scmp.ne.s32.totalorder %s158, %s172
    %p174 = scmp.eq.s32.totalorder %s22, 0
    %p175 = por %p173, %p174
    %s177 = sadd.s32 %s176, 1
    %p180 = scmp.eq.s32.totalorder %s16, 1
    %p181 = scmp.ne.s32.totalorder %s176, %s178
    %p182 = scmp.eq.s32.totalorder %s16, 0
    %p183 = por %p181, %p182
    %p184 = scmp.ne.s32.totalorder %s176, %s178
    %p185 = scmp.eq.s32.totalorder %s21, 1
    %p186 = por %p184, %p185
    %p187 = scmp.ne.s32.totalorder %s178, %s179
    %p188 = scmp.eq.s32.totalorder %s21, 0
    %p189 = por %p187, %p188
    %p190 = scmp.ne.s32.totalorder %s178, %s179
    %p191 = scmp.eq.s32.totalorder %s22, 1
    %p192 = por %p190, %p191
    %p194 = scmp.ne.s32.totalorder %s179, %s193
    %p195 = scmp.eq.s32.totalorder %s22, 0
    %p196 = por %p194, %p195
    %s198 = sadd.s32 %s197, 1
    %p201 = scmp.eq.s32.totalorder %s16, 1
    %p202 = scmp.ne.s32.totalorder %s197, %s199
    %p203 = scmp.eq.s32.totalorder %s16, 0
    %p204 = por %p202, %p203
    %p205 = scmp.ne.s32.totalorder %s197, %s199
    %p206 = scmp.eq.s32.totalorder %s21, 1
    %p207 = por %p205, %p206
    %p208 = scmp.ne.s32.totalorder %s199, %s200
    %p209 = scmp.eq.s32.totalorder %s21, 0
    %p210 = por %p208, %p209
    %p211 = scmp.ne.s32.totalorder %s199, %s200
    %p212 = scmp.eq.s32.totalorder %s22, 1
    %p213 = por %p211, %p212
    %p215 = scmp.ne.s32.totalorder %s200, %s214
    %p216 = scmp.eq.s32.totalorder %s22, 0
    %p217 = por %p215, %p216
    %s219 = sadd.s32 %s218, 1
    %p222 = scmp.eq.s32.totalorder %s16, 1
    %p223 = scmp.ne.s32.totalorder %s218, %s220
    %p224 = scmp.eq.s32.totalorder %s16, 0
    %p225 = por %p223, %p224
    %p226 = scmp.ne.s32.totalorder %s218, %s220
    %p227 = scmp.eq.s32.totalorder %s21, 1
    %p228 = por %p226, %p227
    %p229 = scmp.ne.s32.totalorder %s220, %s221
    %p230 = scmp.eq.s32.totalorder %s21, 0
    %p231 = por %p229, %p230
    %p232 = scmp.ne.s32.totalorder %s220, %s221
    %p233 = scmp.eq.s32.totalorder %s22, 1
    %p234 = por %p232, %p233
    %p236 = scmp.ne.s32.totalorder %s221, %s235
    %p237 = scmp.eq.s32.totalorder %s22, 0
    %p238 = por %p236, %p237
    %s239 = ssub.s32 %s16, %s23
    %p240 = scmp.eq.s32.totalorder %s239, 0
    %s242 = sadd.s32 %s241, 1
    %s243 = scalar_select %p240, %s241, %s242
    %p246 = pneg %p240
    %p247 = scmp.eq.s32.totalorder %s16, 1
    %p248 = por %p246, %p247
    %p249 = scmp.ne.s32.totalorder %s241, %s244
    %p250 = scmp.eq.s32.totalorder %s16, 0
    %p251 = por %p249, %p250
    %p252 = scmp.ne.s32.totalorder %s241, %s244
    %p253 = scmp.eq.s32.totalorder %s21, 1
    %p254 = por %p252, %p253
    %p255 = scmp.ne.s32.totalorder %s244, %s245
    %p256 = scmp.eq.s32.totalorder %s21, 0
    %p257 = por %p255, %p256
    %p258 = scmp.ne.s32.totalorder %s244, %s245
    %p259 = scmp.eq.s32.totalorder %s22, 1
    %p260 = por %p258, %p259
    %p262 = scmp.ne.s32.totalorder %s245, %s261
    %p263 = scmp.eq.s32.totalorder %s22, 0
    %p264 = por %p262, %p263
    %p265 = scmp.le.s32.totalorder 1, %s16
    %p266 = scmp.lt.s32.totalorder %s16, 3
    %p267 = pnand %p265, %p266
    %p268 = pneg %p267
    // Predicated region
    $region9: #{tree_forward.1} parent=5 // pred_check
      _
    $region10: #{tree_forward.1} parent=5 // pred_check_branch
      %270 = sbr.rel (%p267) target = $region12
    $region11: #{tree_forward.1} parent=5 // pred_region
      %s271 = ssub.s32 %s16, 1
      // Predicated region
      $region13: #{tree_forward.1} parent=11 // pred_check
        %p272 = pneg %p63
      $region14: #{tree_forward.1} parent=11 // pred_check_branch
        %274 = sbr.rel (%p272) target = $region16
      $region15: #{tree_forward.1} parent=11 // pred_region
        _
      $region16: #{tree_forward.1} parent=11 // pred_fallthru
        _
      // Predicated region
      $region17: #{tree_forward.1} parent=11 // pred_check
        %p275 = pneg %p84
      $region18: #{tree_forward.1} parent=11 // pred_check_branch
        %277 = sbr.rel (%p275) target = $region20
      $region19: #{tree_forward.1} parent=11 // pred_region
        _
      $region20: #{tree_forward.1} parent=11 // pred_fallthru
        _
      // Predicated region
      $region21: #{tree_forward.1} parent=11 // pred_check
        %p278 = pneg %p105
      $region22: #{tree_forward.1} parent=11 // pred_check_branch
        %280 = sbr.rel (%p278) target = $region24
      $region23: #{tree_forward.1} parent=11 // pred_region
        _
      $region24: #{tree_forward.1} parent=11 // pred_fallthru
        _
      // Predicated region
      $region25: #{tree_forward.1} parent=11 // pred_check
        %p281 = pneg %p126
      $region26: #{tree_forward.1} parent=11 // pred_check_branch
        %283 = sbr.rel (%p281) target = $region28
      $region27: #{tree_forward.1} parent=11 // pred_region
        _
      $region28: #{tree_forward.1} parent=11 // pred_fallthru
        _
      // Predicated region
      $region29: #{tree_forward.1} parent=11 // pred_check
        %p284 = pneg %p147
      $region30: #{tree_forward.1} parent=11 // pred_check_branch
        %286 = sbr.rel (%p284) target = $region32
      $region31: #{tree_forward.1} parent=11 // pred_region
        _
      $region32: #{tree_forward.1} parent=11 // pred_fallthru
        _
      // Predicated region
      $region33: #{tree_forward.1} parent=11 // pred_check
        %p287 = pneg %p168
      $region34: #{tree_forward.1} parent=11 // pred_check_branch
        %289 = sbr.rel (%p287) target = $region36
      $region35: #{tree_forward.1} parent=11 // pred_region
        _
      $region36: #{tree_forward.1} parent=11 // pred_fallthru
        _
      // Predicated region
      $region37: #{tree_forward.1} parent=11 // pred_check
        %p290 = pneg %p189
      $region38: #{tree_forward.1} parent=11 // pred_check_branch
        %292 = sbr.rel (%p290) target = $region40
      $region39: #{tree_forward.1} parent=11 // pred_region
        _
      $region40: #{tree_forward.1} parent=11 // pred_fallthru
        _
      // Predicated region
      $region41: #{tree_forward.1} parent=11 // pred_check
        %p293 = pneg %p210
      $region42: #{tree_forward.1} parent=11 // pred_check_branch
        %295 = sbr.rel (%p293) target = $region44
      $region43: #{tree_forward.1} parent=11 // pred_region
        _
      $region44: #{tree_forward.1} parent=11 // pred_fallthru
        _
      // Predicated region
      $region45: #{tree_forward.1} parent=11 // pred_check
        %p296 = pneg %p231
      $region46: #{tree_forward.1} parent=11 // pred_check_branch
        %298 = sbr.rel (%p296) target = $region48
      $region47: #{tree_forward.1} parent=11 // pred_region
        _
      $region48: #{tree_forward.1} parent=11 // pred_fallthru
        _
    $region12: #{tree_forward.1} parent=5 // pred_fallthru
      _
    %p299 = scmp.lt.s32.totalorder %s16, 2
    // Predicated region
    $region49: #{tree_forward.1} parent=5 // pred_check
      %p300 = pneg %p299
    $region50: #{tree_forward.1} parent=5 // pred_check_branch
      %302 = sbr.rel (%p300) target = $region52
    $region51: #{tree_forward.1} parent=5 // pred_region
      // Predicated region
      $region53: #{tree_forward.1} parent=51 // pred_check
        %p303 = pneg %p36
      $region54: #{tree_forward.1} parent=51 // pred_check_branch
        %305 = sbr.rel (%p303) target = $region56
      $region55: #{tree_forward.1} parent=51 // pred_region
        %p306 = scmp.lt.s32.totalorder %s16, 1
        %s307 = scalar_select %p306, %s16, 1
        %s308 = smul.addr %s307, 32
        %s309 = smul.addr %s308, 8
        %s310 = scalar_lea.vmem %s0, %s309
      $region56: #{tree_forward.1} parent=51 // pred_fallthru
        _
    $region52: #{tree_forward.1} parent=5 // pred_fallthru
      _
    %p311 = scmp.le.s32.totalorder 1, %s16
    %p312 = scmp.lt.s32.totalorder %s16, 3
    %p313 = pnand %p311, %p312
    %p314 = pneg %p313
    // Predicated region
    $region57: #{tree_forward.1} parent=5 // pred_check
      _
    $region58: #{tree_forward.1} parent=5 // pred_check_branch
      %316 = sbr.rel (%p313) target = $region60
    $region59: #{tree_forward.1} parent=5 // pred_region
      %s317 = ssub.s32 %s16, 1
      %p318 = scmp.lt.s32.totalorder %s21, 1
      %s319 = scalar_select %p318, %s21, 1
      %s320 = smul.addr %s319, 32
      %s321 = smul.addr %s320, 8
      %s322 = scalar_lea.vmem %s0, %s321
      %p323 = pneg %p42
      %p324 = pneg %p39
      %p325 = pneg %p63
      %p326 = pneg %p60
      %p327 = pneg %p84
      %p328 = pneg %p81
      %p329 = pneg %p105
      %p330 = pneg %p102
      %p331 = pneg %p126
      %p332 = pneg %p123
      %p333 = pneg %p147
      %p334 = pneg %p144
      %p335 = pneg %p168
      %p336 = pneg %p165
      %p337 = pneg %p189
      %p338 = pneg %p186
      %p339 = pneg %p210
      %p340 = pneg %p207
      %p341 = pneg %p231
      %p342 = pneg %p228
      %p343 = pneg %p257
      %p344 = pneg %p254
      %p345 = scmp.lt.s32.totalorder %s21, 1
      %s346 = scalar_select %p345, %s21, 1
      %s347 = smul.addr %s346, 8
      %s348 = smul.addr %s347, 8
      %s349 = scalar_lea.vmem %s10, %s348
      %p350 = scmp.lt.s32.totalorder %s21, 1
      %s351 = scalar_select %p350, %s21, 1
      %s352 = smul.addr %s351, 32
      %s353 = smul.addr %s352, 8
      %s354 = scalar_lea.vmem %s0, %s353
      %p355 = scmp.lt.s32.totalorder %s21, 1
      %s356 = scalar_select %p355, %s21, 1
      %s357 = smul.addr %s356, 8
      %s358 = smul.addr %s357, 8
      %s359 = scalar_lea.vmem %s10, %s358
      %vm361 = vcmask 31744
      %362 = vst.msk [vmem:[#allocation2] sm:$0xff] %vm361, 0.0
      %vm363 = vcmask 24576
      %364 = vst.msk [vmem:[#allocation2 + $0x8] sm:$0x1] %vm363, 0.0
      %365 = vst.msk [vmem:[#allocation2 + $0x10] sm:$0xff] %vm361, 0.0
      %366 = vst.msk [vmem:[#allocation2 + $0x18] sm:$0x1] %vm363, 0.0
      %367 = vst.msk [vmem:[#allocation2 + $0x20] sm:$0xff] %vm361, 0.0
      %368 = vst.msk [vmem:[#allocation2 + $0x28] sm:$0x1] %vm363, 0.0
      %369 = vst.msk [vmem:[#allocation2 + $0x30] sm:$0xff] %vm361, 0.0
      %370 = vst.msk [vmem:[#allocation2 + $0x38] sm:$0x1] %vm363, 0.0
      %371 = vst.msk [vmem:[#allocation2 + $0x40] sm:$0xff] %vm361, 0.0
      %372 = vst.msk [vmem:[#allocation2 + $0x48] sm:$0x1] %vm363, 0.0
      %373 = vst.msk [vmem:[#allocation2 + $0x50] sm:$0xff] %vm361, 0.0
      %374 = vst.msk [vmem:[#allocation2 + $0x58] sm:$0x1] %vm363, 0.0
      %375 = vst.msk [vmem:[#allocation2 + $0x60] sm:$0xff] %vm361, 0.0
      %376 = vst.msk [vmem:[#allocation2 + $0x68] sm:$0x1] %vm363, 0.0
      %377 = vst.msk [vmem:[#allocation2 + $0x70] sm:$0xff] %vm361, 0.0
      %378 = vst.msk [vmem:[#allocation2 + $0x78] sm:$0x1] %vm363, 0.0
      %379 = vst.msk [vmem:[#allocation2 + $0x80] sm:$0xff] %vm361, 0.0
      %380 = vst.msk [vmem:[#allocation2 + $0x88] sm:$0x1] %vm363, 0.0
      %381 = vst.msk [vmem:[#allocation2 + $0x90] sm:$0xff] %vm361, 0.0
      %382 = vst.msk [vmem:[#allocation2 + $0x98] sm:$0x1] %vm363, 0.0
      %383 = vst.msk [vmem:[#allocation2 + $0xa0] sm:$0xff] %vm361, 0.0
      %384 = vst.msk [vmem:[#allocation2 + $0xa8] sm:$0x1] %vm363, 0.0
      %385 = vst.msk [vmem:[#allocation2 + $0xb0] sm:$0xff] %vm361, 0.0
      %386 = vst.msk [vmem:[#allocation2 + $0xb8] sm:$0x1] %vm363, 0.0
      %387 = vst.msk [vmem:[#allocation2 + $0xc0] sm:$0xff] %vm361, 0.0
      %388 = vst.msk [vmem:[#allocation2 + $0xc8] sm:$0x1] %vm363, 0.0
      %389 = vst.msk [vmem:[#allocation2 + $0xd0] sm:$0xff] %vm361, 0.0
      %390 = vst.msk [vmem:[#allocation2 + $0xd8] sm:$0x1] %vm363, 0.0
      %391 = vst.msk [vmem:[#allocation2 + $0xe0] sm:$0xff] %vm361, 0.0
      %392 = vst.msk [vmem:[#allocation2 + $0xe8] sm:$0x1] %vm363, 0.0
      %393 = vst.msk [vmem:[#allocation2 + $0xf0] sm:$0xff] %vm361, 0.0
      %394 = vst.msk [vmem:[#allocation2 + $0xf8] sm:$0x1] %vm363, 0.0
      %395 = vst.msk [vmem:[#allocation2 + $0x100] sm:$0xff] %vm361, 0.0
      %396 = vst.msk [vmem:[#allocation2 + $0x108] sm:$0x1] %vm363, 0.0
      %397 = vst.msk [vmem:[#allocation2 + $0x110] sm:$0xff] %vm361, 0.0
      %398 = vst.msk [vmem:[#allocation2 + $0x118] sm:$0x1] %vm363, 0.0
      %399 = vst.msk [vmem:[#allocation2 + $0x120] sm:$0xff] %vm361, 0.0
      %400 = vst.msk [vmem:[#allocation2 + $0x128] sm:$0x1] %vm363, 0.0
      %401 = vst.msk [vmem:[#allocation2 + $0x130] sm:$0xff] %vm361, 0.0
      %402 = vst.msk [vmem:[#allocation2 + $0x138] sm:$0x1] %vm363, 0.0
      %403 = vst.msk [vmem:[#allocation2 + $0x140] sm:$0xff] %vm361, 0.0
      %404 = vst.msk [vmem:[#allocation2 + $0x148] sm:$0x1] %vm363, 0.0
      %405 = vst.msk [vmem:[#allocation2 + $0x150] sm:$0xff] %vm361, 0.0
      %406 = vst.msk [vmem:[#allocation2 + $0x158] sm:$0x1] %vm363, 0.0
      %407 = vst.msk [vmem:[#allocation2 + $0x160] sm:$0xff] %vm361, 0.0
      %408 = vst.msk [vmem:[#allocation2 + $0x168] sm:$0x1] %vm363, 0.0
      %409 = vst.msk [vmem:[#allocation2 + $0x170] sm:$0xff] %vm361, 0.0
      %410 = vst.msk [vmem:[#allocation2 + $0x178] sm:$0x1] %vm363, 0.0
      %411 = vst.msk [vmem:[#allocation2 + $0x180] sm:$0xff] %vm361, 0.0
      %412 = vst.msk [vmem:[#allocation2 + $0x188] sm:$0x1] %vm363, 0.0
      %413 = vst.msk [vmem:[#allocation2 + $0x190] sm:$0xff] %vm361, 0.0
      %414 = vst.msk [vmem:[#allocation2 + $0x198] sm:$0x1] %vm363, 0.0
      %415 = vst.msk [vmem:[#allocation2 + $0x1a0] sm:$0xff] %vm361, 0.0
      %416 = vst.msk [vmem:[#allocation2 + $0x1a8] sm:$0x1] %vm363, 0.0
      %417 = vst.msk [vmem:[#allocation2 + $0x1b0] sm:$0xff] %vm361, 0.0
      %418 = vst.msk [vmem:[#allocation2 + $0x1b8] sm:$0x1] %vm363, 0.0
      %419 = vst.msk [vmem:[#allocation2 + $0x1c0] sm:$0xff] %vm361, 0.0
      %420 = vst.msk [vmem:[#allocation2 + $0x1c8] sm:$0x1] %vm363, 0.0
      %421 = vst.msk [vmem:[#allocation2 + $0x1d0] sm:$0xff] %vm361, 0.0
      %422 = vst.msk [vmem:[#allocation2 + $0x1d8] sm:$0x1] %vm363, 0.0
      %423 = vst.msk [vmem:[#allocation2 + $0x1e0] sm:$0xff] %vm361, 0.0
      %424 = vst.msk [vmem:[#allocation2 + $0x1e8] sm:$0x1] %vm363, 0.0
      %425 = vst.msk [vmem:[#allocation2 + $0x1f0] sm:$0xff] %vm361, 0.0
      %426 = vst.msk [vmem:[#allocation2 + $0x1f8] sm:$0x1] %vm363, 0.0
      %427 = vst.msk [vmem:[#allocation2 + $0x200] sm:$0xff] %vm361, 0.0
      %428 = vst.msk [vmem:[#allocation2 + $0x208] sm:$0x1] %vm363, 0.0
      %429 = vst.msk [vmem:[#allocation2 + $0x210] sm:$0xff] %vm361, 0.0
      %430 = vst.msk [vmem:[#allocation2 + $0x218] sm:$0x1] %vm363, 0.0
      %431 = vst.msk [vmem:[#allocation2 + $0x220] sm:$0xff] %vm361, 0.0
      %432 = vst.msk [vmem:[#allocation2 + $0x228] sm:$0x1] %vm363, 0.0
      %433 = vst.msk [vmem:[#allocation2 + $0x230] sm:$0xff] %vm361, 0.0
      %434 = vst.msk [vmem:[#allocation2 + $0x238] sm:$0x1] %vm363, 0.0
      %vm435 = vcmask 64512
      %436 = vst.msk [vmem:[#allocation3] sm:$0xff] %vm435, 0.0
      %vm437 = vcmask 58368
      %438 = vst.msk [vmem:[#allocation3 + $0x8] sm:$0x3] %vm437, 0.0
      %439 = vst.msk [vmem:[#allocation3 + $0x10] sm:$0xff] %vm435, 0.0
      %440 = vst.msk [vmem:[#allocation3 + $0x18] sm:$0x3] %vm437, 0.0
      %441 = vst.msk [vmem:[#allocation3 + $0x20] sm:$0xff] %vm435, 0.0
      %442 = vst.msk [vmem:[#allocation3 + $0x28] sm:$0x3] %vm437, 0.0
      %443 = vst.msk [vmem:[#allocation3 + $0x30] sm:$0xff] %vm435, 0.0
      %444 = vst.msk [vmem:[#allocation3 + $0x38] sm:$0x3] %vm437, 0.0
      %445 = vst.msk [vmem:[#allocation3 + $0x40] sm:$0xff] %vm435, 0.0
      %446 = vst.msk [vmem:[#allocation3 + $0x48] sm:$0x3] %vm437, 0.0
      %447 = vst.msk [vmem:[#allocation3 + $0x50] sm:$0xff] %vm435, 0.0
      %448 = vst.msk [vmem:[#allocation3 + $0x58] sm:$0x3] %vm437, 0.0
      %449 = vst.msk [vmem:[#allocation3 + $0x60] sm:$0xff] %vm435, 0.0
      %450 = vst.msk [vmem:[#allocation3 + $0x68] sm:$0x3] %vm437, 0.0
      %451 = vst.msk [vmem:[#allocation3 + $0x70] sm:$0xff] %vm435, 0.0
      %452 = vst.msk [vmem:[#allocation3 + $0x78] sm:$0x3] %vm437, 0.0
      %453 = vst.msk [vmem:[#allocation3 + $0x80] sm:$0xff] %vm435, 0.0
      %454 = vst.msk [vmem:[#allocation3 + $0x88] sm:$0x3] %vm437, 0.0
      %455 = vst.msk [vmem:[#allocation3 + $0x90] sm:$0xff] %vm435, 0.0
      %456 = vst.msk [vmem:[#allocation3 + $0x98] sm:$0x3] %vm437, 0.0
      %v457 = vld [vmem:[%s354] sm:$0xff]
      %v458 = vld [vmem:[%s354 + $0x8] sm:$0xff]
      %v459 = vld [vmem:[%s354 + $0x10] sm:$0xff]
      %v460 = vld [vmem:[%s354 + $0x18] sm:$0xff]
      %v461 = vld [vmem:[%s354 + $0x20] sm:$0xff]
      %v462 = vld [vmem:[%s354 + $0x28] sm:$0xff]
      %v463 = vld [vmem:[%s354 + $0x30] sm:$0xff]
      %v464 = vld [vmem:[%s354 + $0x38] sm:$0xff]
      %s465 = scalar_lea.vmem [#allocation2], 16
      %466 = vst.msk [vmem:[%s465 + $0x1] sm:$0xff] %vm361, %v457
      %467 = vst.msk [vmem:[%s465 + $0x11] sm:$0xff] %vm361, %v458
      %468 = vst.msk [vmem:[%s465 + $0x21] sm:$0xff] %vm361, %v459
      %469 = vst.msk [vmem:[%s465 + $0x31] sm:$0xff] %vm361, %v460
      %470 = vst.msk [vmem:[%s465 + $0x41] sm:$0xff] %vm361, %v461
      %471 = vst.msk [vmem:[%s465 + $0x51] sm:$0xff] %vm361, %v462
      %472 = vst.msk [vmem:[%s465 + $0x61] sm:$0xff] %vm361, %v463
      %473 = vst.msk [vmem:[%s465 + $0x71] sm:$0xff] %vm361, %v464
      %s474 = scalar_lea.vmem %s354, 64
      %v475 = vld [vmem:[%s474] sm:$0xff]
      %v476 = vld [vmem:[%s474 + $0x8] sm:$0xff]
      %v477 = vld [vmem:[%s474 + $0x10] sm:$0xff]
      %v478 = vld [vmem:[%s474 + $0x18] sm:$0xff]
      %v479 = vld [vmem:[%s474 + $0x20] sm:$0xff]
      %v480 = vld [vmem:[%s474 + $0x28] sm:$0xff]
      %v481 = vld [vmem:[%s474 + $0x30] sm:$0xff]
      %v482 = vld [vmem:[%s474 + $0x38] sm:$0xff]
      %s483 = scalar_lea.vmem [#allocation2], 160
      %484 = vst.msk [vmem:[%s483 + $0x1] sm:$0xff] %vm361, %v475
      %485 = vst.msk [vmem:[%s483 + $0x11] sm:$0xff] %vm361, %v476
      %486 = vst.msk [vmem:[%s483 + $0x21] sm:$0xff] %vm361, %v477
      %487 = vst.msk [vmem:[%s483 + $0x31] sm:$0xff] %vm361, %v478
      %488 = vst.msk [vmem:[%s483 + $0x41] sm:$0xff] %vm361, %v479
      %489 = vst.msk [vmem:[%s483 + $0x51] sm:$0xff] %vm361, %v480
      %490 = vst.msk [vmem:[%s483 + $0x61] sm:$0xff] %vm361, %v481
      %491 = vst.msk [vmem:[%s483 + $0x71] sm:$0xff] %vm361, %v482
      %s492 = scalar_lea.vmem %s354, 128
      %v493 = vld [vmem:[%s492] sm:$0xff]
      %v494 = vld [vmem:[%s492 + $0x8] sm:$0xff]
      %v495 = vld [vmem:[%s492 + $0x10] sm:$0xff]
      %v496 = vld [vmem:[%s492 + $0x18] sm:$0xff]
      %v497 = vld [vmem:[%s492 + $0x20] sm:$0xff]
      %v498 = vld [vmem:[%s492 + $0x28] sm:$0xff]
      %v499 = vld [vmem:[%s492 + $0x30] sm:$0xff]
      %v500 = vld [vmem:[%s492 + $0x38] sm:$0xff]
      %s501 = scalar_lea.vmem [#allocation2], 304
      %502 = vst.msk [vmem:[%s501 + $0x1] sm:$0xff] %vm361, %v493
      %503 = vst.msk [vmem:[%s501 + $0x11] sm:$0xff] %vm361, %v494
      %504 = vst.msk [vmem:[%s501 + $0x21] sm:$0xff] %vm361, %v495
      %505 = vst.msk [vmem:[%s501 + $0x31] sm:$0xff] %vm361, %v496
      %506 = vst.msk [vmem:[%s501 + $0x41] sm:$0xff] %vm361, %v497
      %507 = vst.msk [vmem:[%s501 + $0x51] sm:$0xff] %vm361, %v498
      %508 = vst.msk [vmem:[%s501 + $0x61] sm:$0xff] %vm361, %v499
      %509 = vst.msk [vmem:[%s501 + $0x71] sm:$0xff] %vm361, %v500
      %s510 = scalar_lea.vmem %s354, 192
      %v511 = vld [vmem:[%s510] sm:$0xff]
      %v512 = vld [vmem:[%s510 + $0x8] sm:$0xff]
      %v513 = vld [vmem:[%s510 + $0x10] sm:$0xff]
      %v514 = vld [vmem:[%s510 + $0x18] sm:$0xff]
      %v515 = vld [vmem:[%s510 + $0x20] sm:$0xff]
      %v516 = vld [vmem:[%s510 + $0x28] sm:$0xff]
      %v517 = vld [vmem:[%s510 + $0x30] sm:$0xff]
      %v518 = vld [vmem:[%s510 + $0x38] sm:$0xff]
      %s519 = scalar_lea.vmem [#allocation2], 448
      %520 = vst.msk [vmem:[%s519 + $0x1] sm:$0xff] %vm361, %v511
      %521 = vst.msk [vmem:[%s519 + $0x11] sm:$0xff] %vm361, %v512
      %522 = vst.msk [vmem:[%s519 + $0x21] sm:$0xff] %vm361, %v513
      %523 = vst.msk [vmem:[%s519 + $0x31] sm:$0xff] %vm361, %v514
      %524 = vst.msk [vmem:[%s519 + $0x41] sm:$0xff] %vm361, %v515
      %525 = vst.msk [vmem:[%s519 + $0x51] sm:$0xff] %vm361, %v516
      %526 = vst.msk [vmem:[%s519 + $0x61] sm:$0xff] %vm361, %v517
      %527 = vst.msk [vmem:[%s519 + $0x71] sm:$0xff] %vm361, %v518
      %v528 = vld [vmem:[%s354] sm:$0xff]
      %v529 = vld [vmem:[%s354 + $0x8] sm:$0xff]
      %v530 = vld [vmem:[%s354 + $0x10] sm:$0xff]
      %v531 = vld [vmem:[%s354 + $0x18] sm:$0xff]
      %v532 = vld [vmem:[%s354 + $0x20] sm:$0xff]
      %v533 = vld [vmem:[%s354 + $0x28] sm:$0xff]
      %v534 = vld [vmem:[%s354 + $0x30] sm:$0xff]
      %v535 = vld [vmem:[%s354 + $0x38] sm:$0xff]
      %v536 = vld [vmem:[%s474] sm:$0xff]
      %v537 = vld [vmem:[%s474 + $0x8] sm:$0xff]
      %v538 = vld [vmem:[%s474 + $0x10] sm:$0xff]
      %v539 = vld [vmem:[%s474 + $0x18] sm:$0xff]
      %v540 = vld [vmem:[%s474 + $0x20] sm:$0xff]
      %v541 = vld [vmem:[%s474 + $0x28] sm:$0xff]
      %v542 = vld [vmem:[%s474 + $0x30] sm:$0xff]
      %v543 = vld [vmem:[%s474 + $0x38] sm:$0xff]
      %v544 = vmax.f32 %v528, %v536
      %v545 = vmax.f32 %v529, %v537
      %v546 = vmax.f32 %v530, %v538
      %v547 = vmax.f32 %v531, %v539
      %v548 = vmax.f32 %v532, %v540
      %v549 = vmax.f32 %v533, %v541
      %v550 = vmax.f32 %v534, %v542
      %v551 = vmax.f32 %v535, %v543
      %v552 = vld [vmem:[%s492] sm:$0xff]
      %v553 = vld [vmem:[%s492 + $0x8] sm:$0xff]
      %v554 = vld [vmem:[%s492 + $0x10] sm:$0xff]
      %v555 = vld [vmem:[%s492 + $0x18] sm:$0xff]
      %v556 = vld [vmem:[%s492 + $0x20] sm:$0xff]
      %v557 = vld [vmem:[%s492 + $0x28] sm:$0xff]
      %v558 = vld [vmem:[%s492 + $0x30] sm:$0xff]
      %v559 = vld [vmem:[%s492 + $0x38] sm:$0xff]
      %v560 = vld [vmem:[%s510] sm:$0xff]
      %v561 = vld [vmem:[%s510 + $0x8] sm:$0xff]
      %v562 = vld [vmem:[%s510 + $0x10] sm:$0xff]
      %v563 = vld [vmem:[%s510 + $0x18] sm:$0xff]
      %v564 = vld [vmem:[%s510 + $0x20] sm:$0xff]
      %v565 = vld [vmem:[%s510 + $0x28] sm:$0xff]
      %v566 = vld [vmem:[%s510 + $0x30] sm:$0xff]
      %v567 = vld [vmem:[%s510 + $0x38] sm:$0xff]
      %v568 = vmax.f32 %v552, %v560
      %v569 = vmax.f32 %v553, %v561
      %v570 = vmax.f32 %v554, %v562
      %v571 = vmax.f32 %v555, %v563
      %v572 = vmax.f32 %v556, %v564
      %v573 = vmax.f32 %v557, %v565
      %v574 = vmax.f32 %v558, %v566
      %v575 = vmax.f32 %v559, %v567
      %v576 = vmax.f32 %v544, %v568
      %v577 = vmax.f32 %v545, %v569
      %v578 = vmax.f32 %v546, %v570
      %v579 = vmax.f32 %v547, %v571
      %v580 = vmax.f32 %v548, %v572
      %v581 = vmax.f32 %v549, %v573
      %v582 = vmax.f32 %v550, %v574
      %v583 = vmax.f32 %v551, %v575
      %v584 = vld [vmem:[%s5] sm:$0x3]
      %v585 = vpack.c.bf16 %v577, %v576
      %v586 = vpack.c.bf16 %v579, %v578
      %v587 = vpack.c.bf16 %v581, %v580
      %v588 = vpack.c.bf16 %v583, %v582
      %v589 = vld [vmem:[%s9 + $0x4] sm:$0x1]
      %v590 = vperm.slane %v589, 0
      %v592 = vsel %vm361, %v585, 0
      %v595 = vsel %vm361, %v586, 0
      %v598 = vsel %vm361, %v587, 0
      %v601 = vsel %vm361, %v588, 0
      %vm603 = vcmask 1041408
      %v605 = vsel %vm603, %v584, 0
      %607 = vmatpush.bf16.msra.mxu0 0
      %608 = vmatpush.bf16.msra.mxu0 0
      %609 = vmatpush.bf16.msra.mxu0 0
      %610 = vmatpush.bf16.msra.mxu0 0
      %611 = vmatpush.bf16.msra.mxu0 0
      %612 = vmatpush.bf16.msra.mxu0 0
      %613 = vmatpush.bf16.msra.mxu0 0
      %614 = vmatpush.bf16.msra.mxu0 %v605
      %615 = vmatmul.bf16.gmra.mxu0 %v592
      %v616 = vpop.f32.mrf.mxu0
      %v617 = vadd.f32 %v590, %v616
      %v618 = vpop.f32.mrf.mxu0
      %v619 = vadd.f32 %v590, %v618
      %620 = vmatmul.bf16.gmra.mxu0 %v595
      %v621 = vpop.f32.mrf.mxu0
      %v622 = vadd.f32 %v590, %v621
      %v623 = vpop.f32.mrf.mxu0
      %v624 = vadd.f32 %v590, %v623
      %625 = vmatmul.bf16.gmra.mxu0 %v598
      %v626 = vpop.f32.mrf.mxu0
      %v627 = vadd.f32 %v590, %v626
      %v628 = vpop.f32.mrf.mxu0
      %v629 = vadd.f32 %v590, %v628
      %630 = vmatmul.bf16.gmra.mxu0 %v601
      %v631 = vpop.f32.mrf.mxu0
      %v632 = vadd.f32 %v590, %v631
      %v633 = vpop.f32.mrf.mxu0
      %v634 = vadd.f32 %v590, %v633
      %635 = vdwg.mxu0
      %s636 = scalar_lea.vmem [#allocation2], 432
      %v637 = vld [vmem:[%s636] sm:$0xff]
      %v638 = vld [vmem:[%s636 + $0x10] sm:$0xff]
      %v639 = vld [vmem:[%s636 + $0x20] sm:$0xff]
      %v640 = vld [vmem:[%s636 + $0x30] sm:$0xff]
      %v641 = vld [vmem:[%s636 + $0x40] sm:$0xff]
      %v642 = vld [vmem:[%s636 + $0x50] sm:$0xff]
      %v643 = vld [vmem:[%s636 + $0x60] sm:$0xff]
      %v644 = vld [vmem:[%s636 + $0x70] sm:$0xff]
      %v645 = vld [vmem:[%s1] sm:$0x3]
      %v646 = vpack.c.bf16 %v638, %v637
      %v647 = vpack.c.bf16 %v640, %v639
      %v648 = vpack.c.bf16 %v642, %v641
      %v649 = vpack.c.bf16 %v644, %v643
      %s650 = scalar_lea.vmem [#allocation2], 288
      %v651 = vld [vmem:[%s650 + $0x1] sm:$0xff]
      %v652 = vld [vmem:[%s650 + $0x11] sm:$0xff]
      %v653 = vld [vmem:[%s650 + $0x21] sm:$0xff]
      %v654 = vld [vmem:[%s650 + $0x31] sm:$0xff]
      %v655 = vld [vmem:[%s650 + $0x41] sm:$0xff]
      %v656 = vld [vmem:[%s650 + $0x51] sm:$0xff]
      %v657 = vld [vmem:[%s650 + $0x61] sm:$0xff]
      %v658 = vld [vmem:[%s650 + $0x71] sm:$0xff]
      %s659 = scalar_lea.vmem %s1, 2
      %v660 = vld [vmem:[%s659] sm:$0x3]
      %v661 = vpack.c.bf16 %v652, %v651
      %v662 = vpack.c.bf16 %v654, %v653
      %v663 = vpack.c.bf16 %v656, %v655
      %v664 = vpack.c.bf16 %v658, %v657
      %v666 = vsel %vm361, %v661, 0
      %v669 = vsel %vm361, %v662, 0
      %v672 = vsel %vm361, %v663, 0
      %v675 = vsel %vm361, %v664, 0
      %v678 = vsel %vm603, %v660, 0
      %680 = vmatpush.bf16.msra.mxu0 0
      %681 = vmatpush.bf16.msra.mxu0 0
      %682 = vmatpush.bf16.msra.mxu0 0
      %683 = vmatpush.bf16.msra.mxu0 0
      %684 = vmatpush.bf16.msra.mxu0 0
      %685 = vmatpush.bf16.msra.mxu0 0
      %686 = vmatpush.bf16.msra.mxu0 0
      %687 = vmatpush.bf16.msra.mxu0 %v678
      %688 = vmatmul.bf16.gmra.mxu0 %v666
      %v689 = vpop.f32.mrf.mxu0
      %v690 = vadd.f32 0.0, %v689
      %v691 = vpop.f32.mrf.mxu0
      %v692 = vadd.f32 0.0, %v691
      %693 = vmatmul.bf16.gmra.mxu0 %v669
      %v694 = vpop.f32.mrf.mxu0
      %v695 = vadd.f32 0.0, %v694
      %v696 = vpop.f32.mrf.mxu0
      %v697 = vadd.f32 0.0, %v696
      %698 = vmatmul.bf16.gmra.mxu0 %v672
      %v699 = vpop.f32.mrf.mxu0
      %v700 = vadd.f32 0.0, %v699
      %v701 = vpop.f32.mrf.mxu0
      %v702 = vadd.f32 0.0, %v701
      %703 = vmatmul.bf16.gmra.mxu0 %v675
      %v704 = vpop.f32.mrf.mxu0
      %v705 = vadd.f32 0.0, %v704
      %v706 = vpop.f32.mrf.mxu0
      %v707 = vadd.f32 0.0, %v706
      %708 = vdwg.mxu0
      %v710 = vsel %vm361, %v646, 0
      %v713 = vsel %vm361, %v647, 0
      %v716 = vsel %vm361, %v648, 0
      %v719 = vsel %vm361, %v649, 0
      %v722 = vsel %vm603, %v645, 0
      %724 = vmatpush.bf16.msra.mxu0 0
      %725 = vmatpush.bf16.msra.mxu0 0
      %726 = vmatpush.bf16.msra.mxu0 0
      %727 = vmatpush.bf16.msra.mxu0 0
      %728 = vmatpush.bf16.msra.mxu0 0
      %729 = vmatpush.bf16.msra.mxu0 0
      %730 = vmatpush.bf16.msra.mxu0 0
      %731 = vmatpush.bf16.msra.mxu0 %v722
      %732 = vmatmul.bf16.gmra.mxu0 %v710
      %v733 = vpop.f32.mrf.mxu0
      %v734 = vadd.f32 %v690, %v733
      %v735 = vpop.f32.mrf.mxu0
      %v736 = vadd.f32 %v692, %v735
      %737 = vmatmul.bf16.gmra.mxu0 %v713
      %v738 = vpop.f32.mrf.mxu0
      %v739 = vadd.f32 %v695, %v738
      %v740 = vpop.f32.mrf.mxu0
      %v741 = vadd.f32 %v697, %v740
      %742 = vmatmul.bf16.gmra.mxu0 %v716
      %v743 = vpop.f32.mrf.mxu0
      %v744 = vadd.f32 %v700, %v743
      %v745 = vpop.f32.mrf.mxu0
      %v746 = vadd.f32 %v702, %v745
      %747 = vmatmul.bf16.gmra.mxu0 %v719
      %v748 = vpop.f32.mrf.mxu0
      %v749 = vadd.f32 %v705, %v748
      %v750 = vpop.f32.mrf.mxu0
      %v751 = vadd.f32 %v707, %v750
      %752 = vdwg.mxu0
      %v753 = vld [vmem:[%s636 + $0x1] sm:$0xff]
      %v754 = vld [vmem:[%s636 + $0x11] sm:$0xff]
      %v755 = vld [vmem:[%s636 + $0x21] sm:$0xff]
      %v756 = vld [vmem:[%s636 + $0x31] sm:$0xff]
      %v757 = vld [vmem:[%s636 + $0x41] sm:$0xff]
      %v758 = vld [vmem:[%s636 + $0x51] sm:$0xff]
      %v759 = vld [vmem:[%s636 + $0x61] sm:$0xff]
      %v760 = vld [vmem:[%s636 + $0x71] sm:$0xff]
      %s761 = scalar_lea.vmem %s1, 4
      %v762 = vld [vmem:[%s761] sm:$0x3]
      %v763 = vpack.c.bf16 %v754, %v753
      %v764 = vpack.c.bf16 %v756, %v755
      %v765 = vpack.c.bf16 %v758, %v757
      %v766 = vpack.c.bf16 %v760, %v759
      %v768 = vsel %vm361, %v763, 0
      %v771 = vsel %vm361, %v764, 0
      %v774 = vsel %vm361, %v765, 0
      %v777 = vsel %vm361, %v766, 0
      %v780 = vsel %vm603, %v762, 0
      %782 = vmatpush.bf16.msra.mxu0 0
      %783 = vmatpush.bf16.msra.mxu0 0
      %784 = vmatpush.bf16.msra.mxu0 0
      %785 = vmatpush.bf16.msra.mxu0 0
      %786 = vmatpush.bf16.msra.mxu0 0
      %787 = vmatpush.bf16.msra.mxu0 0
      %788 = vmatpush.bf16.msra.mxu0 0
      %789 = vmatpush.bf16.msra.mxu0 %v780
      %790 = vmatmul.bf16.gmra.mxu0 %v768
      %v791 = vpop.f32.mrf.mxu0
      %v792 = vadd.f32 0.0, %v791
      %v793 = vpop.f32.mrf.mxu0
      %v794 = vadd.f32 0.0, %v793
      %795 = vmatmul.bf16.gmra.mxu0 %v771
      %v796 = vpop.f32.mrf.mxu0
      %v797 = vadd.f32 0.0, %v796
      %v798 = vpop.f32.mrf.mxu0
      %v799 = vadd.f32 0.0, %v798
      %800 = vmatmul.bf16.gmra.mxu0 %v774
      %v801 = vpop.f32.mrf.mxu0
      %v802 = vadd.f32 0.0, %v801
      %v803 = vpop.f32.mrf.mxu0
      %v804 = vadd.f32 0.0, %v803
      %805 = vmatmul.bf16.gmra.mxu0 %v777
      %v806 = vpop.f32.mrf.mxu0
      %v807 = vadd.f32 0.0, %v806
      %v808 = vpop.f32.mrf.mxu0
      %v809 = vadd.f32 0.0, %v808
      %810 = vdwg.mxu0
      %v811 = vadd.f32 %v734, %v792
      %v812 = vadd.f32 %v736, %v794
      %v813 = vadd.f32 %v739, %v797
      %v814 = vadd.f32 %v741, %v799
      %v815 = vadd.f32 %v744, %v802
      %v816 = vadd.f32 %v746, %v804
      %v817 = vadd.f32 %v749, %v807
      %v818 = vadd.f32 %v751, %v809
      %v819 = vld [vmem:[%s483] sm:$0xff]
      %v820 = vld [vmem:[%s483 + $0x10] sm:$0xff]
      %v821 = vld [vmem:[%s483 + $0x20] sm:$0xff]
      %v822 = vld [vmem:[%s483 + $0x30] sm:$0xff]
      %v823 = vld [vmem:[%s483 + $0x40] sm:$0xff]
      %v824 = vld [vmem:[%s483 + $0x50] sm:$0xff]
      %v825 = vld [vmem:[%s483 + $0x60] sm:$0xff]
      %v826 = vld [vmem:[%s483 + $0x70] sm:$0xff]
      %s827 = scalar_lea.vmem %s1, 6
      %v828 = vld [vmem:[%s827] sm:$0x3]
      %v829 = vpack.c.bf16 %v820, %v819
      %v830 = vpack.c.bf16 %v822, %v821
      %v831 = vpack.c.bf16 %v824, %v823
      %v832 = vpack.c.bf16 %v826, %v825
      %v834 = vsel %vm361, %v829, 0
      %v837 = vsel %vm361, %v830, 0
      %v840 = vsel %vm361, %v831, 0
      %v843 = vsel %vm361, %v832, 0
      %v846 = vsel %vm603, %v828, 0
      %848 = vmatpush.bf16.msra.mxu0 0
      %849 = vmatpush.bf16.msra.mxu0 0
      %850 = vmatpush.bf16.msra.mxu0 0
      %851 = vmatpush.bf16.msra.mxu0 0
      %852 = vmatpush.bf16.msra.mxu0 0
      %853 = vmatpush.bf16.msra.mxu0 0
      %854 = vmatpush.bf16.msra.mxu0 0
      %855 = vmatpush.bf16.msra.mxu0 %v846
      %856 = vmatmul.bf16.gmra.mxu0 %v834
      %v857 = vpop.f32.mrf.mxu0
      %v858 = vadd.f32 0.0, %v857
      %v859 = vpop.f32.mrf.mxu0
      %v860 = vadd.f32 0.0, %v859
      %861 = vmatmul.bf16.gmra.mxu0 %v837
      %v862 = vpop.f32.mrf.mxu0
      %v863 = vadd.f32 0.0, %v862
      %v864 = vpop.f32.mrf.mxu0
      %v865 = vadd.f32 0.0, %v864
      %866 = vmatmul.bf16.gmra.mxu0 %v840
      %v867 = vpop.f32.mrf.mxu0
      %v868 = vadd.f32 0.0, %v867
      %v869 = vpop.f32.mrf.mxu0
      %v870 = vadd.f32 0.0, %v869
      %871 = vmatmul.bf16.gmra.mxu0 %v843
      %v872 = vpop.f32.mrf.mxu0
      %v873 = vadd.f32 0.0, %v872
      %v874 = vpop.f32.mrf.mxu0
      %v875 = vadd.f32 0.0, %v874
      %876 = vdwg.mxu0
      %v877 = vadd.f32 %v811, %v858
      %v878 = vadd.f32 %v812, %v860
      %v879 = vadd.f32 %v813, %v863
      %v880 = vadd.f32 %v814, %v865
      %v881 = vadd.f32 %v815, %v868
      %v882 = vadd.f32 %v816, %v870
      %v883 = vadd.f32 %v817, %v873
      %v884 = vadd.f32 %v818, %v875
      %v885 = vld [vmem:[%s465 + $0x1] sm:$0xff]
      %v886 = vld [vmem:[%s465 + $0x11] sm:$0xff]
      %v887 = vld [vmem:[%s465 + $0x21] sm:$0xff]
      %v888 = vld [vmem:[%s465 + $0x31] sm:$0xff]
      %v889 = vld [vmem:[%s465 + $0x41] sm:$0xff]
      %v890 = vld [vmem:[%s465 + $0x51] sm:$0xff]
      %v891 = vld [vmem:[%s465 + $0x61] sm:$0xff]
      %v892 = vld [vmem:[%s465 + $0x71] sm:$0xff]
      %s893 = scalar_lea.vmem %s1, 8
      %v894 = vld [vmem:[%s893] sm:$0x3]
      %v895 = vpack.c.bf16 %v886, %v885
      %v896 = vpack.c.bf16 %v888, %v887
      %v897 = vpack.c.bf16 %v890, %v889
      %v898 = vpack.c.bf16 %v892, %v891
      %v900 = vsel %vm361, %v895, 0
      %v903 = vsel %vm361, %v896, 0
      %v906 = vsel %vm361, %v897, 0
      %v909 = vsel %vm361, %v898, 0
      %v912 = vsel %vm603, %v894, 0
      %914 = vmatpush.bf16.msra.mxu0 0
      %915 = vmatpush.bf16.msra.mxu0 0
      %916 = vmatpush.bf16.msra.mxu0 0
      %917 = vmatpush.bf16.msra.mxu0 0
      %918 = vmatpush.bf16.msra.mxu0 0
      %919 = vmatpush.bf16.msra.mxu0 0
      %920 = vmatpush.bf16.msra.mxu0 0
      %921 = vmatpush.bf16.msra.mxu0 %v912
      %922 = vmatmul.bf16.gmra.mxu0 %v900
      %v923 = vpop.f32.mrf.mxu0
      %v924 = vadd.f32 0.0, %v923
      %v925 = vpop.f32.mrf.mxu0
      %v926 = vadd.f32 0.0, %v925
      %927 = vmatmul.bf16.gmra.mxu0 %v903
      %v928 = vpop.f32.mrf.mxu0
      %v929 = vadd.f32 0.0, %v928
      %v930 = vpop.f32.mrf.mxu0
      %v931 = vadd.f32 0.0, %v930
      %932 = vmatmul.bf16.gmra.mxu0 %v906
      %v933 = vpop.f32.mrf.mxu0
      %v934 = vadd.f32 0.0, %v933
      %v935 = vpop.f32.mrf.mxu0
      %v936 = vadd.f32 0.0, %v935
      %937 = vmatmul.bf16.gmra.mxu0 %v909
      %v938 = vpop.f32.mrf.mxu0
      %v939 = vadd.f32 0.0, %v938
      %v940 = vpop.f32.mrf.mxu0
      %v941 = vadd.f32 0.0, %v940
      %942 = vdwg.mxu0
      %v943 = vadd.f32 %v877, %v924
      %v944 = vadd.f32 %v878, %v926
      %v945 = vadd.f32 %v879, %v929
      %v946 = vadd.f32 %v880, %v931
      %v947 = vadd.f32 %v881, %v934
      %v948 = vadd.f32 %v882, %v936
      %v949 = vadd.f32 %v883, %v939
      %v950 = vadd.f32 %v884, %v941
      %v951 = vld [vmem:[%s483 + $0x1] sm:$0xff]
      %v952 = vld [vmem:[%s483 + $0x11] sm:$0xff]
      %v953 = vld [vmem:[%s483 + $0x21] sm:$0xff]
      %v954 = vld [vmem:[%s483 + $0x31] sm:$0xff]
      %v955 = vld [vmem:[%s483 + $0x41] sm:$0xff]
      %v956 = vld [vmem:[%s483 + $0x51] sm:$0xff]
      %v957 = vld [vmem:[%s483 + $0x61] sm:$0xff]
      %v958 = vld [vmem:[%s483 + $0x71] sm:$0xff]
      %s959 = scalar_lea.vmem %s1, 10
      %v960 = vld [vmem:[%s959] sm:$0x3]
      %v961 = vpack.c.bf16 %v952, %v951
      %v962 = vpack.c.bf16 %v954, %v953
      %v963 = vpack.c.bf16 %v956, %v955
      %v964 = vpack.c.bf16 %v958, %v957
      %v966 = vsel %vm361, %v961, 0
      %v969 = vsel %vm361, %v962, 0
      %v972 = vsel %vm361, %v963, 0
      %v975 = vsel %vm361, %v964, 0
      %v978 = vsel %vm603, %v960, 0
      %980 = vmatpush.bf16.msra.mxu0 0
      %981 = vmatpush.bf16.msra.mxu0 0
      %982 = vmatpush.bf16.msra.mxu0 0
      %983 = vmatpush.bf16.msra.mxu0 0
      %984 = vmatpush.bf16.msra.mxu0 0
      %985 = vmatpush.bf16.msra.mxu0 0
      %986 = vmatpush.bf16.msra.mxu0 0
      %987 = vmatpush.bf16.msra.mxu0 %v978
      %988 = vmatmul.bf16.gmra.mxu0 %v966
      %v989 = vpop.f32.mrf.mxu0
      %v990 = vadd.f32 0.0, %v989
      %v991 = vpop.f32.mrf.mxu0
      %v992 = vadd.f32 0.0, %v991
      %993 = vmatmul.bf16.gmra.mxu0 %v969
      %v994 = vpop.f32.mrf.mxu0
      %v995 = vadd.f32 0.0, %v994
      %v996 = vpop.f32.mrf.mxu0
      %v997 = vadd.f32 0.0, %v996
      %998 = vmatmul.bf16.gmra.mxu0 %v972
      %v999 = vpop.f32.mrf.mxu0
      %v1000 = vadd.f32 0.0, %v999
      %v1001 = vpop.f32.mrf.mxu0
      %v1002 = vadd.f32 0.0, %v1001
      %1003 = vmatmul.bf16.gmra.mxu0 %v975
      %v1004 = vpop.f32.mrf.mxu0
      %v1005 = vadd.f32 0.0, %v1004
      %v1006 = vpop.f32.mrf.mxu0
      %v1007 = vadd.f32 0.0, %v1006
      %1008 = vdwg.mxu0
      %v1009 = vadd.f32 %v943, %v990
      %v1010 = vadd.f32 %v944, %v992
      %v1011 = vadd.f32 %v945, %v995
      %v1012 = vadd.f32 %v946, %v997
      %v1013 = vadd.f32 %v947, %v1000
      %v1014 = vadd.f32 %v948, %v1002
      %v1015 = vadd.f32 %v949, %v1005
      %v1016 = vadd.f32 %v950, %v1007
      %v1017 = vld [vmem:[%s519] sm:$0xff]
      %v1018 = vld [vmem:[%s519 + $0x10] sm:$0xff]
      %v1019 = vld [vmem:[%s519 + $0x20] sm:$0xff]
      %v1020 = vld [vmem:[%s519 + $0x30] sm:$0xff]
      %v1021 = vld [vmem:[%s519 + $0x40] sm:$0xff]
      %v1022 = vld [vmem:[%s519 + $0x50] sm:$0xff]
      %v1023 = vld [vmem:[%s519 + $0x60] sm:$0xff]
      %v1024 = vld [vmem:[%s519 + $0x70] sm:$0xff]
      %s1025 = scalar_lea.vmem %s1, 12
      %v1026 = vld [vmem:[%s1025] sm:$0x3]
      %v1027 = vpack.c.bf16 %v1018, %v1017
      %v1028 = vpack.c.bf16 %v1020, %v1019
      %v1029 = vpack.c.bf16 %v1022, %v1021
      %v1030 = vpack.c.bf16 %v1024, %v1023
      %v1032 = vsel %vm361, %v1027, 0
      %v1035 = vsel %vm361, %v1028, 0
      %v1038 = vsel %vm361, %v1029, 0
      %v1041 = vsel %vm361, %v1030, 0
      %v1044 = vsel %vm603, %v1026, 0
      %1046 = vmatpush.bf16.msra.mxu0 0
      %1047 = vmatpush.bf16.msra.mxu0 0
      %1048 = vmatpush.bf16.msra.mxu0 0
      %1049 = vmatpush.bf16.msra.mxu0 0
      %1050 = vmatpush.bf16.msra.mxu0 0
      %1051 = vmatpush.bf16.msra.mxu0 0
      %1052 = vmatpush.bf16.msra.mxu0 0
      %1053 = vmatpush.bf16.msra.mxu0 %v1044
      %1054 = vmatmul.bf16.gmra.mxu0 %v1032
      %v1055 = vpop.f32.mrf.mxu0
      %v1056 = vadd.f32 0.0, %v1055
      %v1057 = vpop.f32.mrf.mxu0
      %v1058 = vadd.f32 0.0, %v1057
      %1059 = vmatmul.bf16.gmra.mxu0 %v1035
      %v1060 = vpop.f32.mrf.mxu0
      %v1061 = vadd.f32 0.0, %v1060
      %v1062 = vpop.f32.mrf.mxu0
      %v1063 = vadd.f32 0.0, %v1062
      %1064 = vmatmul.bf16.gmra.mxu0 %v1038
      %v1065 = vpop.f32.mrf.mxu0
      %v1066 = vadd.f32 0.0, %v1065
      %v1067 = vpop.f32.mrf.mxu0
      %v1068 = vadd.f32 0.0, %v1067
      %1069 = vmatmul.bf16.gmra.mxu0 %v1041
      %v1070 = vpop.f32.mrf.mxu0
      %v1071 = vadd.f32 0.0, %v1070
      %v1072 = vpop.f32.mrf.mxu0
      %v1073 = vadd.f32 0.0, %v1072
      %1074 = vdwg.mxu0
      %v1075 = vadd.f32 %v1009, %v1056
      %v1076 = vadd.f32 %v1010, %v1058
      %v1077 = vadd.f32 %v1011, %v1061
      %v1078 = vadd.f32 %v1012, %v1063
      %v1079 = vadd.f32 %v1013, %v1066
      %v1080 = vadd.f32 %v1014, %v1068
      %v1081 = vadd.f32 %v1015, %v1071
      %v1082 = vadd.f32 %v1016, %v1073
      %v1083 = vld [vmem:[%s501 + $0x1] sm:$0xff]
      %v1084 = vld [vmem:[%s501 + $0x11] sm:$0xff]
      %v1085 = vld [vmem:[%s501 + $0x21] sm:$0xff]
      %v1086 = vld [vmem:[%s501 + $0x31] sm:$0xff]
      %v1087 = vld [vmem:[%s501 + $0x41] sm:$0xff]
      %v1088 = vld [vmem:[%s501 + $0x51] sm:$0xff]
      %v1089 = vld [vmem:[%s501 + $0x61] sm:$0xff]
      %v1090 = vld [vmem:[%s501 + $0x71] sm:$0xff]
      %s1091 = scalar_lea.vmem %s1, 14
      %v1092 = vld [vmem:[%s1091] sm:$0x3]
      %v1093 = vpack.c.bf16 %v1084, %v1083
      %v1094 = vpack.c.bf16 %v1086, %v1085
      %v1095 = vpack.c.bf16 %v1088, %v1087
      %v1096 = vpack.c.bf16 %v1090, %v1089
      %v1098 = vsel %vm361, %v1093, 0
      %v1101 = vsel %vm361, %v1094, 0
      %v1104 = vsel %vm361, %v1095, 0
      %v1107 = vsel %vm361, %v1096, 0
      %v1110 = vsel %vm603, %v1092, 0
      %1112 = vmatpush.bf16.msra.mxu0 0
      %1113 = vmatpush.bf16.msra.mxu0 0
      %1114 = vmatpush.bf16.msra.mxu0 0
      %1115 = vmatpush.bf16.msra.mxu0 0
      %1116 = vmatpush.bf16.msra.mxu0 0
      %1117 = vmatpush.bf16.msra.mxu0 0
      %1118 = vmatpush.bf16.msra.mxu0 0
      %1119 = vmatpush.bf16.msra.mxu0 %v1110
      %1120 = vmatmul.bf16.gmra.mxu0 %v1098
      %v1121 = vpop.f32.mrf.mxu0
      %v1122 = vadd.f32 0.0, %v1121
      %v1123 = vpop.f32.mrf.mxu0
      %v1124 = vadd.f32 0.0, %v1123
      %1125 = vmatmul.bf16.gmra.mxu0 %v1101
      %v1126 = vpop.f32.mrf.mxu0
      %v1127 = vadd.f32 0.0, %v1126
      %v1128 = vpop.f32.mrf.mxu0
      %v1129 = vadd.f32 0.0, %v1128
      %1130 = vmatmul.bf16.gmra.mxu0 %v1104
      %v1131 = vpop.f32.mrf.mxu0
      %v1132 = vadd.f32 0.0, %v1131
      %v1133 = vpop.f32.mrf.mxu0
      %v1134 = vadd.f32 0.0, %v1133
      %1135 = vmatmul.bf16.gmra.mxu0 %v1107
      %v1136 = vpop.f32.mrf.mxu0
      %v1137 = vadd.f32 0.0, %v1136
      %v1138 = vpop.f32.mrf.mxu0
      %v1139 = vadd.f32 0.0, %v1138
      %1140 = vdwg.mxu0
      %v1141 = vadd.f32 %v1075, %v1122
      %v1142 = vadd.f32 %v1076, %v1124
      %v1143 = vadd.f32 %v1077, %v1127
      %v1144 = vadd.f32 %v1078, %v1129
      %v1145 = vadd.f32 %v1079, %v1132
      %v1146 = vadd.f32 %v1080, %v1134
      %v1147 = vadd.f32 %v1081, %v1137
      %v1148 = vadd.f32 %v1082, %v1139
      %v1149 = vld [vmem:[%s519 + $0x1] sm:$0xff]
      %v1150 = vld [vmem:[%s519 + $0x11] sm:$0xff]
      %v1151 = vld [vmem:[%s519 + $0x21] sm:$0xff]
      %v1152 = vld [vmem:[%s519 + $0x31] sm:$0xff]
      %v1153 = vld [vmem:[%s519 + $0x41] sm:$0xff]
      %v1154 = vld [vmem:[%s519 + $0x51] sm:$0xff]
      %v1155 = vld [vmem:[%s519 + $0x61] sm:$0xff]
      %v1156 = vld [vmem:[%s519 + $0x71] sm:$0xff]
      %s1157 = scalar_lea.vmem %s1, 16
      %v1158 = vld [vmem:[%s1157] sm:$0x3]
      %v1159 = vpack.c.bf16 %v1150, %v1149
      %v1160 = vpack.c.bf16 %v1152, %v1151
      %v1161 = vpack.c.bf16 %v1154, %v1153
      %v1162 = vpack.c.bf16 %v1156, %v1155
      %v1164 = vsel %vm361, %v1159, 0
      %v1167 = vsel %vm361, %v1160, 0
      %v1170 = vsel %vm361, %v1161, 0
      %v1173 = vsel %vm361, %v1162, 0
      %v1176 = vsel %vm603, %v1158, 0
      %1178 = vmatpush.bf16.msra.mxu0 0
      %1179 = vmatpush.bf16.msra.mxu0 0
      %1180 = vmatpush.bf16.msra.mxu0 0
      %1181 = vmatpush.bf16.msra.mxu0 0
      %1182 = vmatpush.bf16.msra.mxu0 0
      %1183 = vmatpush.bf16.msra.mxu0 0
      %1184 = vmatpush.bf16.msra.mxu0 0
      %1185 = vmatpush.bf16.msra.mxu0 %v1176
      %1186 = vmatmul.bf16.gmra.mxu0 %v1164
      %v1187 = vpop.f32.mrf.mxu0
      %v1188 = vadd.f32 0.0, %v1187
      %v1189 = vpop.f32.mrf.mxu0
      %v1190 = vadd.f32 0.0, %v1189
      %1191 = vmatmul.bf16.gmra.mxu0 %v1167
      %v1192 = vpop.f32.mrf.mxu0
      %v1193 = vadd.f32 0.0, %v1192
      %v1194 = vpop.f32.mrf.mxu0
      %v1195 = vadd.f32 0.0, %v1194
      %1196 = vmatmul.bf16.gmra.mxu0 %v1170
      %v1197 = vpop.f32.mrf.mxu0
      %v1198 = vadd.f32 0.0, %v1197
      %v1199 = vpop.f32.mrf.mxu0
      %v1200 = vadd.f32 0.0, %v1199
      %1201 = vmatmul.bf16.gmra.mxu0 %v1173
      %v1202 = vpop.f32.mrf.mxu0
      %v1203 = vadd.f32 0.0, %v1202
      %v1204 = vpop.f32.mrf.mxu0
      %v1205 = vadd.f32 0.0, %v1204
      %1206 = vdwg.mxu0
      %v1207 = vadd.f32 %v1141, %v1188
      %v1208 = vadd.f32 %v1142, %v1190
      %v1209 = vadd.f32 %v1143, %v1193
      %v1210 = vadd.f32 %v1144, %v1195
      %v1211 = vadd.f32 %v1145, %v1198
      %v1212 = vadd.f32 %v1146, %v1200
      %v1213 = vadd.f32 %v1147, %v1203
      %v1214 = vadd.f32 %v1148, %v1205
      %v1215 = vld [vmem:[%s9] sm:$0x1]
      %v1216 = vperm.slane %v1215, 0
      %v1217 = vadd.f32 %v1207, %v1216
      %v1218 = vadd.f32 %v1208, %v1216
      %v1219 = vadd.f32 %v1209, %v1216
      %v1220 = vadd.f32 %v1210, %v1216
      %v1221 = vadd.f32 %v1211, %v1216
      %v1222 = vadd.f32 %v1212, %v1216
      %v1223 = vadd.f32 %v1213, %v1216
      %v1224 = vadd.f32 %v1214, %v1216
      %v1225 = vmax.f32 %v1217, 0.0
      %v1226 = vmax.f32 %v1218, 0.0
      %v1227 = vmax.f32 %v1219, 0.0
      %v1228 = vmax.f32 %v1220, 0.0
      %v1229 = vmax.f32 %v1221, 0.0
      %v1230 = vmax.f32 %v1222, 0.0
      %v1231 = vmax.f32 %v1223, 0.0
      %v1232 = vmax.f32 %v1224, 0.0
      %v1233 = vld [vmem:[%s9 + $0x1] sm:$0x1]
      %s1234 = scalar_lea.vmem [#allocation3], 16
      %1235 = vst.msk [vmem:[%s1234 + $0x1] sm:$0xff] %vm435, %v1225
      %1236 = vst.msk [vmem:[%s1234 + $0x11] sm:$0xff] %vm435, %v1226
      %1237 = vst.msk [vmem:[%s1234 + $0x21] sm:$0xff] %vm435, %v1227
      %1238 = vst.msk [vmem:[%s1234 + $0x31] sm:$0xff] %vm435, %v1228
      %1239 = vst.msk [vmem:[%s1234 + $0x41] sm:$0xff] %vm435, %v1229
      %1240 = vst.msk [vmem:[%s1234 + $0x51] sm:$0xff] %vm435, %v1230
      %1241 = vst.msk [vmem:[%s1234 + $0x61] sm:$0xff] %vm435, %v1231
      %1242 = vst.msk [vmem:[%s1234 + $0x71] sm:$0xff] %vm435, %v1232
      %v1243 = vld [vmem:[#allocation3] sm:$0xff]
      %v1244 = vld [vmem:[#allocation3 + $0x10] sm:$0xff]
      %v1245 = vld [vmem:[#allocation3 + $0x20] sm:$0xff]
      %v1246 = vld [vmem:[#allocation3 + $0x30] sm:$0xff]
      %v1247 = vld [vmem:[#allocation3 + $0x40] sm:$0xff]
      %v1248 = vld [vmem:[#allocation3 + $0x50] sm:$0xff]
      %v1249 = vld [vmem:[#allocation3 + $0x60] sm:$0xff]
      %v1250 = vld [vmem:[#allocation3 + $0x70] sm:$0xff]
      %v1251 = vld [vmem:[%s2] sm:$0xf]
      %v1252 = vpack.c.bf16 %v1244, %v1243
      %v1253 = vpack.c.bf16 %v1246, %v1245
      %v1254 = vpack.c.bf16 %v1248, %v1247
      %v1255 = vpack.c.bf16 %v1250, %v1249
      %v1256 = vld [vmem:[#allocation3 + $0x1] sm:$0xff]
      %v1257 = vld [vmem:[#allocation3 + $0x11] sm:$0xff]
      %v1258 = vld [vmem:[#allocation3 + $0x21] sm:$0xff]
      %v1259 = vld [vmem:[#allocation3 + $0x31] sm:$0xff]
      %v1260 = vld [vmem:[#allocation3 + $0x41] sm:$0xff]
      %v1261 = vld [vmem:[#allocation3 + $0x51] sm:$0xff]
      %v1262 = vld [vmem:[#allocation3 + $0x61] sm:$0xff]
      %v1263 = vld [vmem:[#allocation3 + $0x71] sm:$0xff]
      %s1264 = scalar_lea.vmem %s2, 4
      %v1265 = vld [vmem:[%s1264] sm:$0xf]
      %v1266 = vpack.c.bf16 %v1257, %v1256
      %v1267 = vpack.c.bf16 %v1259, %v1258
      %v1268 = vpack.c.bf16 %v1261, %v1260
      %v1269 = vpack.c.bf16 %v1263, %v1262
      %v1271 = vsel %vm435, %v1266, 0
      %v1274 = vsel %vm435, %v1267, 0
      %v1277 = vsel %vm435, %v1268, 0
      %v1280 = vsel %vm435, %v1269, 0
      %vm1282 = vcmask 1043456
      %v1284 = vsel %vm1282, %v1265, 0
      %1286 = vmatpush.bf16.msra.mxu0 0
      %1287 = vmatpush.bf16.msra.mxu0 0
      %1288 = vmatpush.bf16.msra.mxu0 0
      %1289 = vmatpush.bf16.msra.mxu0 0
      %1290 = vmatpush.bf16.msra.mxu0 0
      %1291 = vmatpush.bf16.msra.mxu0 0
      %1292 = vmatpush.bf16.msra.mxu0 0
      %1293 = vmatpush.bf16.msra.mxu0 %v1284
      %1294 = vmatmul.bf16.gmra.mxu0 %v1271
      %v1295 = vpop.f32.mrf.mxu0
      %v1296 = vadd.f32 0.0, %v1295
      %v1297 = vpop.f32.mrf.mxu0
      %v1298 = vadd.f32 0.0, %v1297
      %1299 = vmatmul.bf16.gmra.mxu0 %v1274
      %v1300 = vpop.f32.mrf.mxu0
      %v1301 = vadd.f32 0.0, %v1300
      %v1302 = vpop.f32.mrf.mxu0
      %v1303 = vadd.f32 0.0, %v1302
      %1304 = vmatmul.bf16.gmra.mxu0 %v1277
      %v1305 = vpop.f32.mrf.mxu0
      %v1306 = vadd.f32 0.0, %v1305
      %v1307 = vpop.f32.mrf.mxu0
      %v1308 = vadd.f32 0.0, %v1307
      %1309 = vmatmul.bf16.gmra.mxu0 %v1280
      %v1310 = vpop.f32.mrf.mxu0
      %v1311 = vadd.f32 0.0, %v1310
      %v1312 = vpop.f32.mrf.mxu0
      %v1313 = vadd.f32 0.0, %v1312
      %1314 = vdwg.mxu0
      %v1316 = vsel %vm435, %v1252, 0
      %v1319 = vsel %vm435, %v1253, 0
      %v1322 = vsel %vm435, %v1254, 0
      %v1325 = vsel %vm435, %v1255, 0
      %v1328 = vsel %vm1282, %v1251, 0
      %1330 = vmatpush.bf16.msra.mxu0 0
      %1331 = vmatpush.bf16.msra.mxu0 0
      %1332 = vmatpush.bf16.msra.mxu0 0
      %1333 = vmatpush.bf16.msra.mxu0 0
      %1334 = vmatpush.bf16.msra.mxu0 0
      %1335 = vmatpush.bf16.msra.mxu0 0
      %1336 = vmatpush.bf16.msra.mxu0 0
      %1337 = vmatpush.bf16.msra.mxu0 %v1328
      %1338 = vmatmul.bf16.gmra.mxu0 %v1316
      %v1339 = vpop.f32.mrf.mxu0
      %v1340 = vadd.f32 %v1296, %v1339
      %v1341 = vpop.f32.mrf.mxu0
      %v1342 = vadd.f32 %v1298, %v1341
      %1343 = vmatmul.bf16.gmra.mxu0 %v1319
      %v1344 = vpop.f32.mrf.mxu0
      %v1345 = vadd.f32 %v1301, %v1344
      %v1346 = vpop.f32.mrf.mxu0
      %v1347 = vadd.f32 %v1303, %v1346
      %1348 = vmatmul.bf16.gmra.mxu0 %v1322
      %v1349 = vpop.f32.mrf.mxu0
      %v1350 = vadd.f32 %v1306, %v1349
      %v1351 = vpop.f32.mrf.mxu0
      %v1352 = vadd.f32 %v1308, %v1351
      %1353 = vmatmul.bf16.gmra.mxu0 %v1325
      %v1354 = vpop.f32.mrf.mxu0
      %v1355 = vadd.f32 %v1311, %v1354
      %v1356 = vpop.f32.mrf.mxu0
      %v1357 = vadd.f32 %v1313, %v1356
      %1358 = vdwg.mxu0
      %v1359 = vld [vmem:[#allocation3 + $0x2] sm:$0xff]
      %v1360 = vld [vmem:[#allocation3 + $0x12] sm:$0xff]
      %v1361 = vld [vmem:[#allocation3 + $0x22] sm:$0xff]
      %v1362 = vld [vmem:[#allocation3 + $0x32] sm:$0xff]
      %v1363 = vld [vmem:[#allocation3 + $0x42] sm:$0xff]
      %v1364 = vld [vmem:[#allocation3 + $0x52] sm:$0xff]
      %v1365 = vld [vmem:[#allocation3 + $0x62] sm:$0xff]
      %v1366 = vld [vmem:[#allocation3 + $0x72] sm:$0xff]
      %s1367 = scalar_lea.vmem %s2, 8
      %v1368 = vld [vmem:[%s1367] sm:$0xf]
      %v1369 = vpack.c.bf16 %v1360, %v1359
      %v1370 = vpack.c.bf16 %v1362, %v1361
      %v1371 = vpack.c.bf16 %v1364, %v1363
      %v1372 = vpack.c.bf16 %v1366, %v1365
      %v1374 = vsel %vm435, %v1369, 0
      %v1377 = vsel %vm435, %v1370, 0
      %v1380 = vsel %vm435, %v1371, 0
      %v1383 = vsel %vm435, %v1372, 0
      %v1386 = vsel %vm1282, %v1368, 0
      %1388 = vmatpush.bf16.msra.mxu0 0
      %1389 = vmatpush.bf16.msra.mxu0 0
      %1390 = vmatpush.bf16.msra.mxu0 0
      %1391 = vmatpush.bf16.msra.mxu0 0
      %1392 = vmatpush.bf16.msra.mxu0 0
      %1393 = vmatpush.bf16.msra.mxu0 0
      %1394 = vmatpush.bf16.msra.mxu0 0
      %1395 = vmatpush.bf16.msra.mxu0 %v1386
      %1396 = vmatmul.bf16.gmra.mxu0 %v1374
      %v1397 = vpop.f32.mrf.mxu0
      %v1398 = vadd.f32 0.0, %v1397
      %v1399 = vpop.f32.mrf.mxu0
      %v1400 = vadd.f32 0.0, %v1399
      %1401 = vmatmul.bf16.gmra.mxu0 %v1377
      %v1402 = vpop.f32.mrf.mxu0
      %v1403 = vadd.f32 0.0, %v1402
      %v1404 = vpop.f32.mrf.mxu0
      %v1405 = vadd.f32 0.0, %v1404
      %1406 = vmatmul.bf16.gmra.mxu0 %v1380
      %v1407 = vpop.f32.mrf.mxu0
      %v1408 = vadd.f32 0.0, %v1407
      %v1409 = vpop.f32.mrf.mxu0
      %v1410 = vadd.f32 0.0, %v1409
      %1411 = vmatmul.bf16.gmra.mxu0 %v1383
      %v1412 = vpop.f32.mrf.mxu0
      %v1413 = vadd.f32 0.0, %v1412
      %v1414 = vpop.f32.mrf.mxu0
      %v1415 = vadd.f32 0.0, %v1414
      %1416 = vdwg.mxu0
      %v1417 = vadd.f32 %v1340, %v1398
      %v1418 = vadd.f32 %v1342, %v1400
      %v1419 = vadd.f32 %v1345, %v1403
      %v1420 = vadd.f32 %v1347, %v1405
      %v1421 = vadd.f32 %v1350, %v1408
      %v1422 = vadd.f32 %v1352, %v1410
      %v1423 = vadd.f32 %v1355, %v1413
      %v1424 = vadd.f32 %v1357, %v1415
      %v1425 = vld [vmem:[%s1234] sm:$0xff]
      %v1426 = vld [vmem:[%s1234 + $0x10] sm:$0xff]
      %v1427 = vld [vmem:[%s1234 + $0x20] sm:$0xff]
      %v1428 = vld [vmem:[%s1234 + $0x30] sm:$0xff]
      %v1429 = vld [vmem:[%s1234 + $0x40] sm:$0xff]
      %v1430 = vld [vmem:[%s1234 + $0x50] sm:$0xff]
      %v1431 = vld [vmem:[%s1234 + $0x60] sm:$0xff]
      %v1432 = vld [vmem:[%s1234 + $0x70] sm:$0xff]
      %s1433 = scalar_lea.vmem %s2, 12
      %v1434 = vld [vmem:[%s1433] sm:$0xf]
      %v1435 = vpack.c.bf16 %v1426, %v1425
      %v1436 = vpack.c.bf16 %v1428, %v1427
      %v1437 = vpack.c.bf16 %v1430, %v1429
      %v1438 = vpack.c.bf16 %v1432, %v1431
      %v1440 = vsel %vm435, %v1435, 0
      %v1443 = vsel %vm435, %v1436, 0
      %v1446 = vsel %vm435, %v1437, 0
      %v1449 = vsel %vm435, %v1438, 0
      %v1452 = vsel %vm1282, %v1434, 0
      %1454 = vmatpush.bf16.msra.mxu0 0
      %1455 = vmatpush.bf16.msra.mxu0 0
      %1456 = vmatpush.bf16.msra.mxu0 0
      %1457 = vmatpush.bf16.msra.mxu0 0
      %1458 = vmatpush.bf16.msra.mxu0 0
      %1459 = vmatpush.bf16.msra.mxu0 0
      %1460 = vmatpush.bf16.msra.mxu0 0
      %1461 = vmatpush.bf16.msra.mxu0 %v1452
      %1462 = vmatmul.bf16.gmra.mxu0 %v1440
      %v1463 = vpop.f32.mrf.mxu0
      %v1464 = vadd.f32 0.0, %v1463
      %v1465 = vpop.f32.mrf.mxu0
      %v1466 = vadd.f32 0.0, %v1465
      %1467 = vmatmul.bf16.gmra.mxu0 %v1443
      %v1468 = vpop.f32.mrf.mxu0
      %v1469 = vadd.f32 0.0, %v1468
      %v1470 = vpop.f32.mrf.mxu0
      %v1471 = vadd.f32 0.0, %v1470
      %1472 = vmatmul.bf16.gmra.mxu0 %v1446
      %v1473 = vpop.f32.mrf.mxu0
      %v1474 = vadd.f32 0.0, %v1473
      %v1475 = vpop.f32.mrf.mxu0
      %v1476 = vadd.f32 0.0, %v1475
      %1477 = vmatmul.bf16.gmra.mxu0 %v1449
      %v1478 = vpop.f32.mrf.mxu0
      %v1479 = vadd.f32 0.0, %v1478
      %v1480 = vpop.f32.mrf.mxu0
      %v1481 = vadd.f32 0.0, %v1480
      %1482 = vdwg.mxu0
      %v1483 = vadd.f32 %v1417, %v1464
      %v1484 = vadd.f32 %v1418, %v1466
      %v1485 = vadd.f32 %v1419, %v1469
      %v1486 = vadd.f32 %v1420, %v1471
      %v1487 = vadd.f32 %v1421, %v1474
      %v1488 = vadd.f32 %v1422, %v1476
      %v1489 = vadd.f32 %v1423, %v1479
      %v1490 = vadd.f32 %v1424, %v1481
      %v1491 = vld [vmem:[%s1234 + $0x1] sm:$0xff]
      %v1492 = vld [vmem:[%s1234 + $0x11] sm:$0xff]
      %v1493 = vld [vmem:[%s1234 + $0x21] sm:$0xff]
      %v1494 = vld [vmem:[%s1234 + $0x31] sm:$0xff]
      %v1495 = vld [vmem:[%s1234 + $0x41] sm:$0xff]
      %v1496 = vld [vmem:[%s1234 + $0x51] sm:$0xff]
      %v1497 = vld [vmem:[%s1234 + $0x61] sm:$0xff]
      %v1498 = vld [vmem:[%s1234 + $0x71] sm:$0xff]
      %s1499 = scalar_lea.vmem %s2, 16
      %v1500 = vld [vmem:[%s1499] sm:$0xf]
      %v1501 = vpack.c.bf16 %v1492, %v1491
      %v1502 = vpack.c.bf16 %v1494, %v1493
      %v1503 = vpack.c.bf16 %v1496, %v1495
      %v1504 = vpack.c.bf16 %v1498, %v1497
      %v1506 = vsel %vm435, %v1501, 0
      %v1509 = vsel %vm435, %v1502, 0
      %v1512 = vsel %vm435, %v1503, 0
      %v1515 = vsel %vm435, %v1504, 0
      %v1518 = vsel %vm1282, %v1500, 0
      %1520 = vmatpush.bf16.msra.mxu0 0
      %1521 = vmatpush.bf16.msra.mxu0 0
      %1522 = vmatpush.bf16.msra.mxu0 0
      %1523 = vmatpush.bf16.msra.mxu0 0
      %1524 = vmatpush.bf16.msra.mxu0 0
      %1525 = vmatpush.bf16.msra.mxu0 0
      %1526 = vmatpush.bf16.msra.mxu0 0
      %1527 = vmatpush.bf16.msra.mxu0 %v1518
      %1528 = vmatmul.bf16.gmra.mxu0 %v1506
      %v1529 = vpop.f32.mrf.mxu0
      %v1530 = vadd.f32 0.0, %v1529
      %v1531 = vpop.f32.mrf.mxu0
      %v1532 = vadd.f32 0.0, %v1531
      %1533 = vmatmul.bf16.gmra.mxu0 %v1509
      %v1534 = vpop.f32.mrf.mxu0
      %v1535 = vadd.f32 0.0, %v1534
      %v1536 = vpop.f32.mrf.mxu0
      %v1537 = vadd.f32 0.0, %v1536
      %1538 = vmatmul.bf16.gmra.mxu0 %v1512
      %v1539 = vpop.f32.mrf.mxu0
      %v1540 = vadd.f32 0.0, %v1539
      %v1541 = vpop.f32.mrf.mxu0
      %v1542 = vadd.f32 0.0, %v1541
      %1543 = vmatmul.bf16.gmra.mxu0 %v1515
      %v1544 = vpop.f32.mrf.mxu0
      %v1545 = vadd.f32 0.0, %v1544
      %v1546 = vpop.f32.mrf.mxu0
      %v1547 = vadd.f32 0.0, %v1546
      %1548 = vdwg.mxu0
      %v1549 = vadd.f32 %v1483, %v1530
      %v1550 = vadd.f32 %v1484, %v1532
      %v1551 = vadd.f32 %v1485, %v1535
      %v1552 = vadd.f32 %v1486, %v1537
      %v1553 = vadd.f32 %v1487, %v1540
      %v1554 = vadd.f32 %v1488, %v1542
      %v1555 = vadd.f32 %v1489, %v1545
      %v1556 = vadd.f32 %v1490, %v1547
      %v1557 = vld [vmem:[%s1234 + $0x2] sm:$0xff]
      %v1558 = vld [vmem:[%s1234 + $0x12] sm:$0xff]
      %v1559 = vld [vmem:[%s1234 + $0x22] sm:$0xff]
      %v1560 = vld [vmem:[%s1234 + $0x32] sm:$0xff]
      %v1561 = vld [vmem:[%s1234 + $0x42] sm:$0xff]
      %v1562 = vld [vmem:[%s1234 + $0x52] sm:$0xff]
      %v1563 = vld [vmem:[%s1234 + $0x62] sm:$0xff]
      %v1564 = vld [vmem:[%s1234 + $0x72] sm:$0xff]
      %s1565 = scalar_lea.vmem %s2, 20
      %v1566 = vld [vmem:[%s1565] sm:$0xf]
      %v1567 = vpack.c.bf16 %v1558, %v1557
      %v1568 = vpack.c.bf16 %v1560, %v1559
      %v1569 = vpack.c.bf16 %v1562, %v1561
      %v1570 = vpack.c.bf16 %v1564, %v1563
      %v1572 = vsel %vm435, %v1567, 0
      %v1575 = vsel %vm435, %v1568, 0
      %v1578 = vsel %vm435, %v1569, 0
      %v1581 = vsel %vm435, %v1570, 0
      %v1584 = vsel %vm1282, %v1566, 0
      %1586 = vmatpush.bf16.msra.mxu0 0
      %1587 = vmatpush.bf16.msra.mxu0 0
      %1588 = vmatpush.bf16.msra.mxu0 0
      %1589 = vmatpush.bf16.msra.mxu0 0
      %1590 = vmatpush.bf16.msra.mxu0 0
      %1591 = vmatpush.bf16.msra.mxu0 0
      %1592 = vmatpush.bf16.msra.mxu0 0
      %1593 = vmatpush.bf16.msra.mxu0 %v1584
      %1594 = vmatmul.bf16.gmra.mxu0 %v1572
      %v1595 = vpop.f32.mrf.mxu0
      %v1596 = vadd.f32 0.0, %v1595
      %v1597 = vpop.f32.mrf.mxu0
      %v1598 = vadd.f32 0.0, %v1597
      %1599 = vmatmul.bf16.gmra.mxu0 %v1575
      %v1600 = vpop.f32.mrf.mxu0
      %v1601 = vadd.f32 0.0, %v1600
      %v1602 = vpop.f32.mrf.mxu0
      %v1603 = vadd.f32 0.0, %v1602
      %1604 = vmatmul.bf16.gmra.mxu0 %v1578
      %v1605 = vpop.f32.mrf.mxu0
      %v1606 = vadd.f32 0.0, %v1605
      %v1607 = vpop.f32.mrf.mxu0
      %v1608 = vadd.f32 0.0, %v1607
      %1609 = vmatmul.bf16.gmra.mxu0 %v1581
      %v1610 = vpop.f32.mrf.mxu0
      %v1611 = vadd.f32 0.0, %v1610
      %v1612 = vpop.f32.mrf.mxu0
      %v1613 = vadd.f32 0.0, %v1612
      %1614 = vdwg.mxu0
      %v1615 = vadd.f32 %v1549, %v1596
      %v1616 = vadd.f32 %v1550, %v1598
      %v1617 = vadd.f32 %v1551, %v1601
      %v1618 = vadd.f32 %v1552, %v1603
      %v1619 = vadd.f32 %v1553, %v1606
      %v1620 = vadd.f32 %v1554, %v1608
      %v1621 = vadd.f32 %v1555, %v1611
      %v1622 = vadd.f32 %v1556, %v1613
      %s1623 = scalar_lea.vmem [#allocation3], 32
      %v1624 = vld [vmem:[%s1623] sm:$0xff]
      %v1625 = vld [vmem:[%s1623 + $0x10] sm:$0xff]
      %v1626 = vld [vmem:[%s1623 + $0x20] sm:$0xff]
      %v1627 = vld [vmem:[%s1623 + $0x30] sm:$0xff]
      %v1628 = vld [vmem:[%s1623 + $0x40] sm:$0xff]
      %v1629 = vld [vmem:[%s1623 + $0x50] sm:$0xff]
      %v1630 = vld [vmem:[%s1623 + $0x60] sm:$0xff]
      %v1631 = vld [vmem:[%s1623 + $0x70] sm:$0xff]
      %s1632 = scalar_lea.vmem %s2, 24
      %v1633 = vld [vmem:[%s1632] sm:$0xf]
      %v1634 = vpack.c.bf16 %v1625, %v1624
      %v1635 = vpack.c.bf16 %v1627, %v1626
      %v1636 = vpack.c.bf16 %v1629, %v1628
      %v1637 = vpack.c.bf16 %v1631, %v1630
      %v1639 = vsel %vm435, %v1634, 0
      %v1642 = vsel %vm435, %v1635, 0
      %v1645 = vsel %vm435, %v1636, 0
      %v1648 = vsel %vm435, %v1637, 0
      %v1651 = vsel %vm1282, %v1633, 0
      %1653 = vmatpush.bf16.msra.mxu0 0
      %1654 = vmatpush.bf16.msra.mxu0 0
      %1655 = vmatpush.bf16.msra.mxu0 0
      %1656 = vmatpush.bf16.msra.mxu0 0
      %1657 = vmatpush.bf16.msra.mxu0 0
      %1658 = vmatpush.bf16.msra.mxu0 0
      %1659 = vmatpush.bf16.msra.mxu0 0
      %1660 = vmatpush.bf16.msra.mxu0 %v1651
      %1661 = vmatmul.bf16.gmra.mxu0 %v1639
      %v1662 = vpop.f32.mrf.mxu0
      %v1663 = vadd.f32 0.0, %v1662
      %v1664 = vpop.f32.mrf.mxu0
      %v1665 = vadd.f32 0.0, %v1664
      %1666 = vmatmul.bf16.gmra.mxu0 %v1642
      %v1667 = vpop.f32.mrf.mxu0
      %v1668 = vadd.f32 0.0, %v1667
      %v1669 = vpop.f32.mrf.mxu0
      %v1670 = vadd.f32 0.0, %v1669
      %1671 = vmatmul.bf16.gmra.mxu0 %v1645
      %v1672 = vpop.f32.mrf.mxu0
      %v1673 = vadd.f32 0.0, %v1672
      %v1674 = vpop.f32.mrf.mxu0
      %v1675 = vadd.f32 0.0, %v1674
      %1676 = vmatmul.bf16.gmra.mxu0 %v1648
      %v1677 = vpop.f32.mrf.mxu0
      %v1678 = vadd.f32 0.0, %v1677
      %v1679 = vpop.f32.mrf.mxu0
      %v1680 = vadd.f32 0.0, %v1679
      %1681 = vdwg.mxu0
      %v1682 = vadd.f32 %v1615, %v1663
      %v1683 = vadd.f32 %v1616, %v1665
      %v1684 = vadd.f32 %v1617, %v1668
      %v1685 = vadd.f32 %v1618, %v1670
      %v1686 = vadd.f32 %v1619, %v1673
      %v1687 = vadd.f32 %v1620, %v1675
      %v1688 = vadd.f32 %v1621, %v1678
      %v1689 = vadd.f32 %v1622, %v1680
      %v1690 = vld [vmem:[%s1623 + $0x1] sm:$0xff]
      %v1691 = vld [vmem:[%s1623 + $0x11] sm:$0xff]
      %v1692 = vld [vmem:[%s1623 + $0x21] sm:$0xff]
      %v1693 = vld [vmem:[%s1623 + $0x31] sm:$0xff]
      %v1694 = vld [vmem:[%s1623 + $0x41] sm:$0xff]
      %v1695 = vld [vmem:[%s1623 + $0x51] sm:$0xff]
      %v1696 = vld [vmem:[%s1623 + $0x61] sm:$0xff]
      %v1697 = vld [vmem:[%s1623 + $0x71] sm:$0xff]
      %s1698 = scalar_lea.vmem %s2, 28
      %v1699 = vld [vmem:[%s1698] sm:$0xf]
      %v1700 = vpack.c.bf16 %v1691, %v1690
      %v1701 = vpack.c.bf16 %v1693, %v1692
      %v1702 = vpack.c.bf16 %v1695, %v1694
      %v1703 = vpack.c.bf16 %v1697, %v1696
      %v1705 = vsel %vm435, %v1700, 0
      %v1708 = vsel %vm435, %v1701, 0
      %v1711 = vsel %vm435, %v1702, 0
      %v1714 = vsel %vm435, %v1703, 0
      %v1717 = vsel %vm1282, %v1699, 0
      %1719 = vmatpush.bf16.msra.mxu0 0
      %1720 = vmatpush.bf16.msra.mxu0 0
      %1721 = vmatpush.bf16.msra.mxu0 0
      %1722 = vmatpush.bf16.msra.mxu0 0
      %1723 = vmatpush.bf16.msra.mxu0 0
      %1724 = vmatpush.bf16.msra.mxu0 0
      %1725 = vmatpush.bf16.msra.mxu0 0
      %1726 = vmatpush.bf16.msra.mxu0 %v1717
      %1727 = vmatmul.bf16.gmra.mxu0 %v1705
      %v1728 = vpop.f32.mrf.mxu0
      %v1729 = vadd.f32 0.0, %v1728
      %v1730 = vpop.f32.mrf.mxu0
      %v1731 = vadd.f32 0.0, %v1730
      %1732 = vmatmul.bf16.gmra.mxu0 %v1708
      %v1733 = vpop.f32.mrf.mxu0
      %v1734 = vadd.f32 0.0, %v1733
      %v1735 = vpop.f32.mrf.mxu0
      %v1736 = vadd.f32 0.0, %v1735
      %1737 = vmatmul.bf16.gmra.mxu0 %v1711
      %v1738 = vpop.f32.mrf.mxu0
      %v1739 = vadd.f32 0.0, %v1738
      %v1740 = vpop.f32.mrf.mxu0
      %v1741 = vadd.f32 0.0, %v1740
      %1742 = vmatmul.bf16.gmra.mxu0 %v1714
      %v1743 = vpop.f32.mrf.mxu0
      %v1744 = vadd.f32 0.0, %v1743
      %v1745 = vpop.f32.mrf.mxu0
      %v1746 = vadd.f32 0.0, %v1745
      %1747 = vdwg.mxu0
      %v1748 = vadd.f32 %v1682, %v1729
      %v1749 = vadd.f32 %v1683, %v1731
      %v1750 = vadd.f32 %v1684, %v1734
      %v1751 = vadd.f32 %v1685, %v1736
      %v1752 = vadd.f32 %v1686, %v1739
      %v1753 = vadd.f32 %v1687, %v1741
      %v1754 = vadd.f32 %v1688, %v1744
      %v1755 = vadd.f32 %v1689, %v1746
      %v1756 = vld [vmem:[%s1623 + $0x2] sm:$0xff]
      %v1757 = vld [vmem:[%s1623 + $0x12] sm:$0xff]
      %v1758 = vld [vmem:[%s1623 + $0x22] sm:$0xff]
      %v1759 = vld [vmem:[%s1623 + $0x32] sm:$0xff]
      %v1760 = vld [vmem:[%s1623 + $0x42] sm:$0xff]
      %v1761 = vld [vmem:[%s1623 + $0x52] sm:$0xff]
      %v1762 = vld [vmem:[%s1623 + $0x62] sm:$0xff]
      %v1763 = vld [vmem:[%s1623 + $0x72] sm:$0xff]
      %s1764 = scalar_lea.vmem %s2, 32
      %v1765 = vld [vmem:[%s1764] sm:$0xf]
      %v1766 = vpack.c.bf16 %v1757, %v1756
      %v1767 = vpack.c.bf16 %v1759, %v1758
      %v1768 = vpack.c.bf16 %v1761, %v1760
      %v1769 = vpack.c.bf16 %v1763, %v1762
      %v1771 = vsel %vm435, %v1766, 0
      %v1774 = vsel %vm435, %v1767, 0
      %v1777 = vsel %vm435, %v1768, 0
      %v1780 = vsel %vm435, %v1769, 0
      %v1783 = vsel %vm1282, %v1765, 0
      %1785 = vmatpush.bf16.msra.mxu0 0
      %1786 = vmatpush.bf16.msra.mxu0 0
      %1787 = vmatpush.bf16.msra.mxu0 0
      %1788 = vmatpush.bf16.msra.mxu0 0
      %1789 = vmatpush.bf16.msra.mxu0 0
      %1790 = vmatpush.bf16.msra.mxu0 0
      %1791 = vmatpush.bf16.msra.mxu0 0
      %1792 = vmatpush.bf16.msra.mxu0 %v1783
      %1793 = vmatmul.bf16.gmra.mxu0 %v1771
      %v1794 = vpop.f32.mrf.mxu0
      %v1795 = vadd.f32 0.0, %v1794
      %v1796 = vpop.f32.mrf.mxu0
      %v1797 = vadd.f32 0.0, %v1796
      %1798 = vmatmul.bf16.gmra.mxu0 %v1774
      %v1799 = vpop.f32.mrf.mxu0
      %v1800 = vadd.f32 0.0, %v1799
      %v1801 = vpop.f32.mrf.mxu0
      %v1802 = vadd.f32 0.0, %v1801
      %1803 = vmatmul.bf16.gmra.mxu0 %v1777
      %v1804 = vpop.f32.mrf.mxu0
      %v1805 = vadd.f32 0.0, %v1804
      %v1806 = vpop.f32.mrf.mxu0
      %v1807 = vadd.f32 0.0, %v1806
      %1808 = vmatmul.bf16.gmra.mxu0 %v1780
      %v1809 = vpop.f32.mrf.mxu0
      %v1810 = vadd.f32 0.0, %v1809
      %v1811 = vpop.f32.mrf.mxu0
      %v1812 = vadd.f32 0.0, %v1811
      %1813 = vdwg.mxu0
      %v1814 = vadd.f32 %v1748, %v1795
      %v1815 = vadd.f32 %v1749, %v1797
      %v1816 = vadd.f32 %v1750, %v1800
      %v1817 = vadd.f32 %v1751, %v1802
      %v1818 = vadd.f32 %v1752, %v1805
      %v1819 = vadd.f32 %v1753, %v1807
      %v1820 = vadd.f32 %v1754, %v1810
      %v1821 = vadd.f32 %v1755, %v1812
      %v1822 = vperm.slane %v1233, 0
      %v1823 = vadd.f32 %v1814, %v1822
      %v1824 = vadd.f32 %v1815, %v1822
      %v1825 = vadd.f32 %v1816, %v1822
      %v1826 = vadd.f32 %v1817, %v1822
      %v1827 = vadd.f32 %v1818, %v1822
      %v1828 = vadd.f32 %v1819, %v1822
      %v1829 = vadd.f32 %v1820, %v1822
      %v1830 = vadd.f32 %v1821, %v1822
      %v1831 = vadd.f32 %v1823, %v617
      %v1832 = vadd.f32 %v1824, %v619
      %v1833 = vadd.f32 %v1825, %v622
      %v1834 = vadd.f32 %v1826, %v624
      %v1835 = vadd.f32 %v1827, %v627
      %v1836 = vadd.f32 %v1828, %v629
      %v1837 = vadd.f32 %v1829, %v632
      %v1838 = vadd.f32 %v1830, %v634
      %v1839 = vmax.f32 %v1831, 0.0
      %v1840 = vmax.f32 %v1832, 0.0
      %v1841 = vmax.f32 %v1833, 0.0
      %v1842 = vmax.f32 %v1834, 0.0
      %v1843 = vmax.f32 %v1835, 0.0
      %v1844 = vmax.f32 %v1836, 0.0
      %v1845 = vmax.f32 %v1837, 0.0
      %v1846 = vmax.f32 %v1838, 0.0
      %v1847 = vld [vmem:[%s9 + $0x2] sm:$0x1]
      %1848 = vst.msk [vmem:[%s1234 + $0x1] sm:$0xff] %vm435, %v1839
      %1849 = vst.msk [vmem:[%s1234 + $0x11] sm:$0xff] %vm435, %v1840
      %1850 = vst.msk [vmem:[%s1234 + $0x21] sm:$0xff] %vm435, %v1841
      %1851 = vst.msk [vmem:[%s1234 + $0x31] sm:$0xff] %vm435, %v1842
      %1852 = vst.msk [vmem:[%s1234 + $0x41] sm:$0xff] %vm435, %v1843
      %1853 = vst.msk [vmem:[%s1234 + $0x51] sm:$0xff] %vm435, %v1844
      %1854 = vst.msk [vmem:[%s1234 + $0x61] sm:$0xff] %vm435, %v1845
      %1855 = vst.msk [vmem:[%s1234 + $0x71] sm:$0xff] %vm435, %v1846
      %v1856 = vld [vmem:[#allocation3] sm:$0xff]
      %v1857 = vld [vmem:[#allocation3 + $0x10] sm:$0xff]
      %v1858 = vld [vmem:[#allocation3 + $0x20] sm:$0xff]
      %v1859 = vld [vmem:[#allocation3 + $0x30] sm:$0xff]
      %v1860 = vld [vmem:[#allocation3 + $0x40] sm:$0xff]
      %v1861 = vld [vmem:[#allocation3 + $0x50] sm:$0xff]
      %v1862 = vld [vmem:[#allocation3 + $0x60] sm:$0xff]
      %v1863 = vld [vmem:[#allocation3 + $0x70] sm:$0xff]
      %v1864 = vld [vmem:[%s3] sm:$0xf]
      %v1865 = vpack.c.bf16 %v1857, %v1856
      %v1866 = vpack.c.bf16 %v1859, %v1858
      %v1867 = vpack.c.bf16 %v1861, %v1860
      %v1868 = vpack.c.bf16 %v1863, %v1862
      %v1869 = vld [vmem:[#allocation3 + $0x1] sm:$0xff]
      %v1870 = vld [vmem:[#allocation3 + $0x11] sm:$0xff]
      %v1871 = vld [vmem:[#allocation3 + $0x21] sm:$0xff]
      %v1872 = vld [vmem:[#allocation3 + $0x31] sm:$0xff]
      %v1873 = vld [vmem:[#allocation3 + $0x41] sm:$0xff]
      %v1874 = vld [vmem:[#allocation3 + $0x51] sm:$0xff]
      %v1875 = vld [vmem:[#allocation3 + $0x61] sm:$0xff]
      %v1876 = vld [vmem:[#allocation3 + $0x71] sm:$0xff]
      %s1877 = scalar_lea.vmem %s3, 4
      %v1878 = vld [vmem:[%s1877] sm:$0xf]
      %v1879 = vpack.c.bf16 %v1870, %v1869
      %v1880 = vpack.c.bf16 %v1872, %v1871
      %v1881 = vpack.c.bf16 %v1874, %v1873
      %v1882 = vpack.c.bf16 %v1876, %v1875
      %v1884 = vsel %vm435, %v1879, 0
      %v1887 = vsel %vm435, %v1880, 0
      %v1890 = vsel %vm435, %v1881, 0
      %v1893 = vsel %vm435, %v1882, 0
      %v1896 = vsel %vm1282, %v1878, 0
      %1898 = vmatpush.bf16.msra.mxu0 0
      %1899 = vmatpush.bf16.msra.mxu0 0
      %1900 = vmatpush.bf16.msra.mxu0 0
      %1901 = vmatpush.bf16.msra.mxu0 0
      %1902 = vmatpush.bf16.msra.mxu0 0
      %1903 = vmatpush.bf16.msra.mxu0 0
      %1904 = vmatpush.bf16.msra.mxu0 0
      %1905 = vmatpush.bf16.msra.mxu0 %v1896
      %1906 = vmatmul.bf16.gmra.mxu0 %v1884
      %v1907 = vpop.f32.mrf.mxu0
      %v1908 = vadd.f32 0.0, %v1907
      %v1909 = vpop.f32.mrf.mxu0
      %v1910 = vadd.f32 0.0, %v1909
      %1911 = vmatmul.bf16.gmra.mxu0 %v1887
      %v1912 = vpop.f32.mrf.mxu0
      %v1913 = vadd.f32 0.0, %v1912
      %v1914 = vpop.f32.mrf.mxu0
      %v1915 = vadd.f32 0.0, %v1914
      %1916 = vmatmul.bf16.gmra.mxu0 %v1890
      %v1917 = vpop.f32.mrf.mxu0
      %v1918 = vadd.f32 0.0, %v1917
      %v1919 = vpop.f32.mrf.mxu0
      %v1920 = vadd.f32 0.0, %v1919
      %1921 = vmatmul.bf16.gmra.mxu0 %v1893
      %v1922 = vpop.f32.mrf.mxu0
      %v1923 = vadd.f32 0.0, %v1922
      %v1924 = vpop.f32.mrf.mxu0
      %v1925 = vadd.f32 0.0, %v1924
      %1926 = vdwg.mxu0
      %v1928 = vsel %vm435, %v1865, 0
      %v1931 = vsel %vm435, %v1866, 0
      %v1934 = vsel %vm435, %v1867, 0
      %v1937 = vsel %vm435, %v1868, 0
      %v1940 = vsel %vm1282, %v1864, 0
      %1942 = vmatpush.bf16.msra.mxu0 0
      %1943 = vmatpush.bf16.msra.mxu0 0
      %1944 = vmatpush.bf16.msra.mxu0 0
      %1945 = vmatpush.bf16.msra.mxu0 0
      %1946 = vmatpush.bf16.msra.mxu0 0
      %1947 = vmatpush.bf16.msra.mxu0 0
      %1948 = vmatpush.bf16.msra.mxu0 0
      %1949 = vmatpush.bf16.msra.mxu0 %v1940
      %1950 = vmatmul.bf16.gmra.mxu0 %v1928
      %v1951 = vpop.f32.mrf.mxu0
      %v1952 = vadd.f32 %v1908, %v1951
      %v1953 = vpop.f32.mrf.mxu0
      %v1954 = vadd.f32 %v1910, %v1953
      %1955 = vmatmul.bf16.gmra.mxu0 %v1931
      %v1956 = vpop.f32.mrf.mxu0
      %v1957 = vadd.f32 %v1913, %v1956
      %v1958 = vpop.f32.mrf.mxu0
      %v1959 = vadd.f32 %v1915, %v1958
      %1960 = vmatmul.bf16.gmra.mxu0 %v1934
      %v1961 = vpop.f32.mrf.mxu0
      %v1962 = vadd.f32 %v1918, %v1961
      %v1963 = vpop.f32.mrf.mxu0
      %v1964 = vadd.f32 %v1920, %v1963
      %1965 = vmatmul.bf16.gmra.mxu0 %v1937
      %v1966 = vpop.f32.mrf.mxu0
      %v1967 = vadd.f32 %v1923, %v1966
      %v1968 = vpop.f32.mrf.mxu0
      %v1969 = vadd.f32 %v1925, %v1968
      %1970 = vdwg.mxu0
      %v1971 = vld [vmem:[#allocation3 + $0x2] sm:$0xff]
      %v1972 = vld [vmem:[#allocation3 + $0x12] sm:$0xff]
      %v1973 = vld [vmem:[#allocation3 + $0x22] sm:$0xff]
      %v1974 = vld [vmem:[#allocation3 + $0x32] sm:$0xff]
      %v1975 = vld [vmem:[#allocation3 + $0x42] sm:$0xff]
      %v1976 = vld [vmem:[#allocation3 + $0x52] sm:$0xff]
      %v1977 = vld [vmem:[#allocation3 + $0x62] sm:$0xff]
      %v1978 = vld [vmem:[#allocation3 + $0x72] sm:$0xff]
      %s1979 = scalar_lea.vmem %s3, 8
      %v1980 = vld [vmem:[%s1979] sm:$0xf]
      %v1981 = vpack.c.bf16 %v1972, %v1971
      %v1982 = vpack.c.bf16 %v1974, %v1973
      %v1983 = vpack.c.bf16 %v1976, %v1975
      %v1984 = vpack.c.bf16 %v1978, %v1977
      %v1986 = vsel %vm435, %v1981, 0
      %v1989 = vsel %vm435, %v1982, 0
      %v1992 = vsel %vm435, %v1983, 0
      %v1995 = vsel %vm435, %v1984, 0
      %v1998 = vsel %vm1282, %v1980, 0
      %2000 = vmatpush.bf16.msra.mxu0 0
      %2001 = vmatpush.bf16.msra.mxu0 0
      %2002 = vmatpush.bf16.msra.mxu0 0
      %2003 = vmatpush.bf16.msra.mxu0 0
      %2004 = vmatpush.bf16.msra.mxu0 0
      %2005 = vmatpush.bf16.msra.mxu0 0
      %2006 = vmatpush.bf16.msra.mxu0 0
      %2007 = vmatpush.bf16.msra.mxu0 %v1998
      %2008 = vmatmul.bf16.gmra.mxu0 %v1986
      %v2009 = vpop.f32.mrf.mxu0
      %v2010 = vadd.f32 0.0, %v2009
      %v2011 = vpop.f32.mrf.mxu0
      %v2012 = vadd.f32 0.0, %v2011
      %2013 = vmatmul.bf16.gmra.mxu0 %v1989
      %v2014 = vpop.f32.mrf.mxu0
      %v2015 = vadd.f32 0.0, %v2014
      %v2016 = vpop.f32.mrf.mxu0
      %v2017 = vadd.f32 0.0, %v2016
      %2018 = vmatmul.bf16.gmra.mxu0 %v1992
      %v2019 = vpop.f32.mrf.mxu0
      %v2020 = vadd.f32 0.0, %v2019
      %v2021 = vpop.f32.mrf.mxu0
      %v2022 = vadd.f32 0.0, %v2021
      %2023 = vmatmul.bf16.gmra.mxu0 %v1995
      %v2024 = vpop.f32.mrf.mxu0
      %v2025 = vadd.f32 0.0, %v2024
      %v2026 = vpop.f32.mrf.mxu0
      %v2027 = vadd.f32 0.0, %v2026
      %2028 = vdwg.mxu0
      %v2029 = vadd.f32 %v1952, %v2010
      %v2030 = vadd.f32 %v1954, %v2012
      %v2031 = vadd.f32 %v1957, %v2015
      %v2032 = vadd.f32 %v1959, %v2017
      %v2033 = vadd.f32 %v1962, %v2020
      %v2034 = vadd.f32 %v1964, %v2022
      %v2035 = vadd.f32 %v1967, %v2025
      %v2036 = vadd.f32 %v1969, %v2027
      %v2037 = vld [vmem:[%s1234] sm:$0xff]
      %v2038 = vld [vmem:[%s1234 + $0x10] sm:$0xff]
      %v2039 = vld [vmem:[%s1234 + $0x20] sm:$0xff]
      %v2040 = vld [vmem:[%s1234 + $0x30] sm:$0xff]
      %v2041 = vld [vmem:[%s1234 + $0x40] sm:$0xff]
      %v2042 = vld [vmem:[%s1234 + $0x50] sm:$0xff]
      %v2043 = vld [vmem:[%s1234 + $0x60] sm:$0xff]
      %v2044 = vld [vmem:[%s1234 + $0x70] sm:$0xff]
      %s2045 = scalar_lea.vmem %s3, 12
      %v2046 = vld [vmem:[%s2045] sm:$0xf]
      %v2047 = vpack.c.bf16 %v2038, %v2037
      %v2048 = vpack.c.bf16 %v2040, %v2039
      %v2049 = vpack.c.bf16 %v2042, %v2041
      %v2050 = vpack.c.bf16 %v2044, %v2043
      %v2052 = vsel %vm435, %v2047, 0
      %v2055 = vsel %vm435, %v2048, 0
      %v2058 = vsel %vm435, %v2049, 0
      %v2061 = vsel %vm435, %v2050, 0
      %v2064 = vsel %vm1282, %v2046, 0
      %2066 = vmatpush.bf16.msra.mxu0 0
      %2067 = vmatpush.bf16.msra.mxu0 0
      %2068 = vmatpush.bf16.msra.mxu0 0
      %2069 = vmatpush.bf16.msra.mxu0 0
      %2070 = vmatpush.bf16.msra.mxu0 0
      %2071 = vmatpush.bf16.msra.mxu0 0
      %2072 = vmatpush.bf16.msra.mxu0 0
      %2073 = vmatpush.bf16.msra.mxu0 %v2064
      %2074 = vmatmul.bf16.gmra.mxu0 %v2052
      %v2075 = vpop.f32.mrf.mxu0
      %v2076 = vadd.f32 0.0, %v2075
      %v2077 = vpop.f32.mrf.mxu0
      %v2078 = vadd.f32 0.0, %v2077
      %2079 = vmatmul.bf16.gmra.mxu0 %v2055
      %v2080 = vpop.f32.mrf.mxu0
      %v2081 = vadd.f32 0.0, %v2080
      %v2082 = vpop.f32.mrf.mxu0
      %v2083 = vadd.f32 0.0, %v2082
      %2084 = vmatmul.bf16.gmra.mxu0 %v2058
      %v2085 = vpop.f32.mrf.mxu0
      %v2086 = vadd.f32 0.0, %v2085
      %v2087 = vpop.f32.mrf.mxu0
      %v2088 = vadd.f32 0.0, %v2087
      %2089 = vmatmul.bf16.gmra.mxu0 %v2061
      %v2090 = vpop.f32.mrf.mxu0
      %v2091 = vadd.f32 0.0, %v2090
      %v2092 = vpop.f32.mrf.mxu0
      %v2093 = vadd.f32 0.0, %v2092
      %2094 = vdwg.mxu0
      %v2095 = vadd.f32 %v2029, %v2076
      %v2096 = vadd.f32 %v2030, %v2078
      %v2097 = vadd.f32 %v2031, %v2081
      %v2098 = vadd.f32 %v2032, %v2083
      %v2099 = vadd.f32 %v2033, %v2086
      %v2100 = vadd.f32 %v2034, %v2088
      %v2101 = vadd.f32 %v2035, %v2091
      %v2102 = vadd.f32 %v2036, %v2093
      %v2103 = vld [vmem:[%s1234 + $0x1] sm:$0xff]
      %v2104 = vld [vmem:[%s1234 + $0x11] sm:$0xff]
      %v2105 = vld [vmem:[%s1234 + $0x21] sm:$0xff]
      %v2106 = vld [vmem:[%s1234 + $0x31] sm:$0xff]
      %v2107 = vld [vmem:[%s1234 + $0x41] sm:$0xff]
      %v2108 = vld [vmem:[%s1234 + $0x51] sm:$0xff]
      %v2109 = vld [vmem:[%s1234 + $0x61] sm:$0xff]
      %v2110 = vld [vmem:[%s1234 + $0x71] sm:$0xff]
      %s2111 = scalar_lea.vmem %s3, 16
      %v2112 = vld [vmem:[%s2111] sm:$0xf]
      %v2113 = vpack.c.bf16 %v2104, %v2103
      %v2114 = vpack.c.bf16 %v2106, %v2105
      %v2115 = vpack.c.bf16 %v2108, %v2107
      %v2116 = vpack.c.bf16 %v2110, %v2109
      %v2118 = vsel %vm435, %v2113, 0
      %v2121 = vsel %vm435, %v2114, 0
      %v2124 = vsel %vm435, %v2115, 0
      %v2127 = vsel %vm435, %v2116, 0
      %v2130 = vsel %vm1282, %v2112, 0
      %2132 = vmatpush.bf16.msra.mxu0 0
      %2133 = vmatpush.bf16.msra.mxu0 0
      %2134 = vmatpush.bf16.msra.mxu0 0
      %2135 = vmatpush.bf16.msra.mxu0 0
      %2136 = vmatpush.bf16.msra.mxu0 0
      %2137 = vmatpush.bf16.msra.mxu0 0
      %2138 = vmatpush.bf16.msra.mxu0 0
      %2139 = vmatpush.bf16.msra.mxu0 %v2130
      %2140 = vmatmul.bf16.gmra.mxu0 %v2118
      %v2141 = vpop.f32.mrf.mxu0
      %v2142 = vadd.f32 0.0, %v2141
      %v2143 = vpop.f32.mrf.mxu0
      %v2144 = vadd.f32 0.0, %v2143
      %2145 = vmatmul.bf16.gmra.mxu0 %v2121
      %v2146 = vpop.f32.mrf.mxu0
      %v2147 = vadd.f32 0.0, %v2146
      %v2148 = vpop.f32.mrf.mxu0
      %v2149 = vadd.f32 0.0, %v2148
      %2150 = vmatmul.bf16.gmra.mxu0 %v2124
      %v2151 = vpop.f32.mrf.mxu0
      %v2152 = vadd.f32 0.0, %v2151
      %v2153 = vpop.f32.mrf.mxu0
      %v2154 = vadd.f32 0.0, %v2153
      %2155 = vmatmul.bf16.gmra.mxu0 %v2127
      %v2156 = vpop.f32.mrf.mxu0
      %v2157 = vadd.f32 0.0, %v2156
      %v2158 = vpop.f32.mrf.mxu0
      %v2159 = vadd.f32 0.0, %v2158
      %2160 = vdwg.mxu0
      %v2161 = vadd.f32 %v2095, %v2142
      %v2162 = vadd.f32 %v2096, %v2144
      %v2163 = vadd.f32 %v2097, %v2147
      %v2164 = vadd.f32 %v2098, %v2149
      %v2165 = vadd.f32 %v2099, %v2152
      %v2166 = vadd.f32 %v2100, %v2154
      %v2167 = vadd.f32 %v2101, %v2157
      %v2168 = vadd.f32 %v2102, %v2159
      %v2169 = vld [vmem:[%s1234 + $0x2] sm:$0xff]
      %v2170 = vld [vmem:[%s1234 + $0x12] sm:$0xff]
      %v2171 = vld [vmem:[%s1234 + $0x22] sm:$0xff]
      %v2172 = vld [vmem:[%s1234 + $0x32] sm:$0xff]
      %v2173 = vld [vmem:[%s1234 + $0x42] sm:$0xff]
      %v2174 = vld [vmem:[%s1234 + $0x52] sm:$0xff]
      %v2175 = vld [vmem:[%s1234 + $0x62] sm:$0xff]
      %v2176 = vld [vmem:[%s1234 + $0x72] sm:$0xff]
      %s2177 = scalar_lea.vmem %s3, 20
      %v2178 = vld [vmem:[%s2177] sm:$0xf]
      %v2179 = vpack.c.bf16 %v2170, %v2169
      %v2180 = vpack.c.bf16 %v2172, %v2171
      %v2181 = vpack.c.bf16 %v2174, %v2173
      %v2182 = vpack.c.bf16 %v2176, %v2175
      %v2184 = vsel %vm435, %v2179, 0
      %v2187 = vsel %vm435, %v2180, 0
      %v2190 = vsel %vm435, %v2181, 0
      %v2193 = vsel %vm435, %v2182, 0
      %v2196 = vsel %vm1282, %v2178, 0
      %2198 = vmatpush.bf16.msra.mxu0 0
      %2199 = vmatpush.bf16.msra.mxu0 0
      %2200 = vmatpush.bf16.msra.mxu0 0
      %2201 = vmatpush.bf16.msra.mxu0 0
      %2202 = vmatpush.bf16.msra.mxu0 0
      %2203 = vmatpush.bf16.msra.mxu0 0
      %2204 = vmatpush.bf16.msra.mxu0 0
      %2205 = vmatpush.bf16.msra.mxu0 %v2196
      %2206 = vmatmul.bf16.gmra.mxu0 %v2184
      %v2207 = vpop.f32.mrf.mxu0
      %v2208 = vadd.f32 0.0, %v2207
      %v2209 = vpop.f32.mrf.mxu0
      %v2210 = vadd.f32 0.0, %v2209
      %2211 = vmatmul.bf16.gmra.mxu0 %v2187
      %v2212 = vpop.f32.mrf.mxu0
      %v2213 = vadd.f32 0.0, %v2212
      %v2214 = vpop.f32.mrf.mxu0
      %v2215 = vadd.f32 0.0, %v2214
      %2216 = vmatmul.bf16.gmra.mxu0 %v2190
      %v2217 = vpop.f32.mrf.mxu0
      %v2218 = vadd.f32 0.0, %v2217
      %v2219 = vpop.f32.mrf.mxu0
      %v2220 = vadd.f32 0.0, %v2219
      %2221 = vmatmul.bf16.gmra.mxu0 %v2193
      %v2222 = vpop.f32.mrf.mxu0
      %v2223 = vadd.f32 0.0, %v2222
      %v2224 = vpop.f32.mrf.mxu0
      %v2225 = vadd.f32 0.0, %v2224
      %2226 = vdwg.mxu0
      %v2227 = vadd.f32 %v2161, %v2208
      %v2228 = vadd.f32 %v2162, %v2210
      %v2229 = vadd.f32 %v2163, %v2213
      %v2230 = vadd.f32 %v2164, %v2215
      %v2231 = vadd.f32 %v2165, %v2218
      %v2232 = vadd.f32 %v2166, %v2220
      %v2233 = vadd.f32 %v2167, %v2223
      %v2234 = vadd.f32 %v2168, %v2225
      %v2235 = vld [vmem:[%s1623] sm:$0xff]
      %v2236 = vld [vmem:[%s1623 + $0x10] sm:$0xff]
      %v2237 = vld [vmem:[%s1623 + $0x20] sm:$0xff]
      %v2238 = vld [vmem:[%s1623 + $0x30] sm:$0xff]
      %v2239 = vld [vmem:[%s1623 + $0x40] sm:$0xff]
      %v2240 = vld [vmem:[%s1623 + $0x50] sm:$0xff]
      %v2241 = vld [vmem:[%s1623 + $0x60] sm:$0xff]
      %v2242 = vld [vmem:[%s1623 + $0x70] sm:$0xff]
      %s2243 = scalar_lea.vmem %s3, 24
      %v2244 = vld [vmem:[%s2243] sm:$0xf]
      %v2245 = vpack.c.bf16 %v2236, %v2235
      %v2246 = vpack.c.bf16 %v2238, %v2237
      %v2247 = vpack.c.bf16 %v2240, %v2239
      %v2248 = vpack.c.bf16 %v2242, %v2241
      %v2250 = vsel %vm435, %v2245, 0
      %v2253 = vsel %vm435, %v2246, 0
      %v2256 = vsel %vm435, %v2247, 0
      %v2259 = vsel %vm435, %v2248, 0
      %v2262 = vsel %vm1282, %v2244, 0
      %2264 = vmatpush.bf16.msra.mxu0 0
      %2265 = vmatpush.bf16.msra.mxu0 0
      %2266 = vmatpush.bf16.msra.mxu0 0
      %2267 = vmatpush.bf16.msra.mxu0 0
      %2268 = vmatpush.bf16.msra.mxu0 0
      %2269 = vmatpush.bf16.msra.mxu0 0
      %2270 = vmatpush.bf16.msra.mxu0 0
      %2271 = vmatpush.bf16.msra.mxu0 %v2262
      %2272 = vmatmul.bf16.gmra.mxu0 %v2250
      %v2273 = vpop.f32.mrf.mxu0
      %v2274 = vadd.f32 0.0, %v2273
      %v2275 = vpop.f32.mrf.mxu0
      %v2276 = vadd.f32 0.0, %v2275
      %2277 = vmatmul.bf16.gmra.mxu0 %v2253
      %v2278 = vpop.f32.mrf.mxu0
      %v2279 = vadd.f32 0.0, %v2278
      %v2280 = vpop.f32.mrf.mxu0
      %v2281 = vadd.f32 0.0, %v2280
      %2282 = vmatmul.bf16.gmra.mxu0 %v2256
      %v2283 = vpop.f32.mrf.mxu0
      %v2284 = vadd.f32 0.0, %v2283
      %v2285 = vpop.f32.mrf.mxu0
      %v2286 = vadd.f32 0.0, %v2285
      %2287 = vmatmul.bf16.gmra.mxu0 %v2259
      %v2288 = vpop.f32.mrf.mxu0
      %v2289 = vadd.f32 0.0, %v2288
      %v2290 = vpop.f32.mrf.mxu0
      %v2291 = vadd.f32 0.0, %v2290
      %2292 = vdwg.mxu0
      %v2293 = vadd.f32 %v2227, %v2274
      %v2294 = vadd.f32 %v2228, %v2276
      %v2295 = vadd.f32 %v2229, %v2279
      %v2296 = vadd.f32 %v2230, %v2281
      %v2297 = vadd.f32 %v2231, %v2284
      %v2298 = vadd.f32 %v2232, %v2286
      %v2299 = vadd.f32 %v2233, %v2289
      %v2300 = vadd.f32 %v2234, %v2291
      %v2301 = vld [vmem:[%s1623 + $0x1] sm:$0xff]
      %v2302 = vld [vmem:[%s1623 + $0x11] sm:$0xff]
      %v2303 = vld [vmem:[%s1623 + $0x21] sm:$0xff]
      %v2304 = vld [vmem:[%s1623 + $0x31] sm:$0xff]
      %v2305 = vld [vmem:[%s1623 + $0x41] sm:$0xff]
      %v2306 = vld [vmem:[%s1623 + $0x51] sm:$0xff]
      %v2307 = vld [vmem:[%s1623 + $0x61] sm:$0xff]
      %v2308 = vld [vmem:[%s1623 + $0x71] sm:$0xff]
      %s2309 = scalar_lea.vmem %s3, 28
      %v2310 = vld [vmem:[%s2309] sm:$0xf]
      %v2311 = vpack.c.bf16 %v2302, %v2301
      %v2312 = vpack.c.bf16 %v2304, %v2303
      %v2313 = vpack.c.bf16 %v2306, %v2305
      %v2314 = vpack.c.bf16 %v2308, %v2307
      %v2316 = vsel %vm435, %v2311, 0
      %v2319 = vsel %vm435, %v2312, 0
      %v2322 = vsel %vm435, %v2313, 0
      %v2325 = vsel %vm435, %v2314, 0
      %v2328 = vsel %vm1282, %v2310, 0
      %2330 = vmatpush.bf16.msra.mxu0 0
      %2331 = vmatpush.bf16.msra.mxu0 0
      %2332 = vmatpush.bf16.msra.mxu0 0
      %2333 = vmatpush.bf16.msra.mxu0 0
      %2334 = vmatpush.bf16.msra.mxu0 0
      %2335 = vmatpush.bf16.msra.mxu0 0
      %2336 = vmatpush.bf16.msra.mxu0 0
      %2337 = vmatpush.bf16.msra.mxu0 %v2328
      %2338 = vmatmul.bf16.gmra.mxu0 %v2316
      %v2339 = vpop.f32.mrf.mxu0
      %v2340 = vadd.f32 0.0, %v2339
      %v2341 = vpop.f32.mrf.mxu0
      %v2342 = vadd.f32 0.0, %v2341
      %2343 = vmatmul.bf16.gmra.mxu0 %v2319
      %v2344 = vpop.f32.mrf.mxu0
      %v2345 = vadd.f32 0.0, %v2344
      %v2346 = vpop.f32.mrf.mxu0
      %v2347 = vadd.f32 0.0, %v2346
      %2348 = vmatmul.bf16.gmra.mxu0 %v2322
      %v2349 = vpop.f32.mrf.mxu0
      %v2350 = vadd.f32 0.0, %v2349
      %v2351 = vpop.f32.mrf.mxu0
      %v2352 = vadd.f32 0.0, %v2351
      %2353 = vmatmul.bf16.gmra.mxu0 %v2325
      %v2354 = vpop.f32.mrf.mxu0
      %v2355 = vadd.f32 0.0, %v2354
      %v2356 = vpop.f32.mrf.mxu0
      %v2357 = vadd.f32 0.0, %v2356
      %2358 = vdwg.mxu0
      %v2359 = vadd.f32 %v2293, %v2340
      %v2360 = vadd.f32 %v2294, %v2342
      %v2361 = vadd.f32 %v2295, %v2345
      %v2362 = vadd.f32 %v2296, %v2347
      %v2363 = vadd.f32 %v2297, %v2350
      %v2364 = vadd.f32 %v2298, %v2352
      %v2365 = vadd.f32 %v2299, %v2355
      %v2366 = vadd.f32 %v2300, %v2357
      %v2367 = vld [vmem:[%s1623 + $0x2] sm:$0xff]
      %v2368 = vld [vmem:[%s1623 + $0x12] sm:$0xff]
      %v2369 = vld [vmem:[%s1623 + $0x22] sm:$0xff]
      %v2370 = vld [vmem:[%s1623 + $0x32] sm:$0xff]
      %v2371 = vld [vmem:[%s1623 + $0x42] sm:$0xff]
      %v2372 = vld [vmem:[%s1623 + $0x52] sm:$0xff]
      %v2373 = vld [vmem:[%s1623 + $0x62] sm:$0xff]
      %v2374 = vld [vmem:[%s1623 + $0x72] sm:$0xff]
      %s2375 = scalar_lea.vmem %s3, 32
      %v2376 = vld [vmem:[%s2375] sm:$0xf]
      %v2377 = vpack.c.bf16 %v2368, %v2367
      %v2378 = vpack.c.bf16 %v2370, %v2369
      %v2379 = vpack.c.bf16 %v2372, %v2371
      %v2380 = vpack.c.bf16 %v2374, %v2373
      %v2382 = vsel %vm435, %v2377, 0
      %v2385 = vsel %vm435, %v2378, 0
      %v2388 = vsel %vm435, %v2379, 0
      %v2391 = vsel %vm435, %v2380, 0
      %v2394 = vsel %vm1282, %v2376, 0
      %2396 = vmatpush.bf16.msra.mxu0 0
      %2397 = vmatpush.bf16.msra.mxu0 0
      %2398 = vmatpush.bf16.msra.mxu0 0
      %2399 = vmatpush.bf16.msra.mxu0 0
      %2400 = vmatpush.bf16.msra.mxu0 0
      %2401 = vmatpush.bf16.msra.mxu0 0
      %2402 = vmatpush.bf16.msra.mxu0 0
      %2403 = vmatpush.bf16.msra.mxu0 %v2394
      %2404 = vmatmul.bf16.gmra.mxu0 %v2382
      %v2405 = vpop.f32.mrf.mxu0
      %v2406 = vadd.f32 0.0, %v2405
      %v2407 = vpop.f32.mrf.mxu0
      %v2408 = vadd.f32 0.0, %v2407
      %2409 = vmatmul.bf16.gmra.mxu0 %v2385
      %v2410 = vpop.f32.mrf.mxu0
      %v2411 = vadd.f32 0.0, %v2410
      %v2412 = vpop.f32.mrf.mxu0
      %v2413 = vadd.f32 0.0, %v2412
      %2414 = vmatmul.bf16.gmra.mxu0 %v2388
      %v2415 = vpop.f32.mrf.mxu0
      %v2416 = vadd.f32 0.0, %v2415
      %v2417 = vpop.f32.mrf.mxu0
      %v2418 = vadd.f32 0.0, %v2417
      %2419 = vmatmul.bf16.gmra.mxu0 %v2391
      %v2420 = vpop.f32.mrf.mxu0
      %v2421 = vadd.f32 0.0, %v2420
      %v2422 = vpop.f32.mrf.mxu0
      %v2423 = vadd.f32 0.0, %v2422
      %2424 = vdwg.mxu0
      %v2425 = vadd.f32 %v2359, %v2406
      %v2426 = vadd.f32 %v2360, %v2408
      %v2427 = vadd.f32 %v2361, %v2411
      %v2428 = vadd.f32 %v2362, %v2413
      %v2429 = vadd.f32 %v2363, %v2416
      %v2430 = vadd.f32 %v2364, %v2418
      %v2431 = vadd.f32 %v2365, %v2421
      %v2432 = vadd.f32 %v2366, %v2423
      %v2433 = vperm.slane %v1847, 0
      %v2434 = vadd.f32 %v2425, %v2433
      %v2435 = vadd.f32 %v2426, %v2433
      %v2436 = vadd.f32 %v2427, %v2433
      %v2437 = vadd.f32 %v2428, %v2433
      %v2438 = vadd.f32 %v2429, %v2433
      %v2439 = vadd.f32 %v2430, %v2433
      %v2440 = vadd.f32 %v2431, %v2433
      %v2441 = vadd.f32 %v2432, %v2433
      %v2442 = vmax.f32 %v2434, 0.0
      %v2443 = vmax.f32 %v2435, 0.0
      %v2444 = vmax.f32 %v2436, 0.0
      %v2445 = vmax.f32 %v2437, 0.0
      %v2446 = vmax.f32 %v2438, 0.0
      %v2447 = vmax.f32 %v2439, 0.0
      %v2448 = vmax.f32 %v2440, 0.0
      %v2449 = vmax.f32 %v2441, 0.0
      %v2450 = vld [vmem:[%s9 + $0x3] sm:$0x1]
      %2451 = vst.msk [vmem:[%s1234 + $0x1] sm:$0xff] %vm435, %v2442
      %2452 = vst.msk [vmem:[%s1234 + $0x11] sm:$0xff] %vm435, %v2443
      %2453 = vst.msk [vmem:[%s1234 + $0x21] sm:$0xff] %vm435, %v2444
      %2454 = vst.msk [vmem:[%s1234 + $0x31] sm:$0xff] %vm435, %v2445
      %2455 = vst.msk [vmem:[%s1234 + $0x41] sm:$0xff] %vm435, %v2446
      %2456 = vst.msk [vmem:[%s1234 + $0x51] sm:$0xff] %vm435, %v2447
      %2457 = vst.msk [vmem:[%s1234 + $0x61] sm:$0xff] %vm435, %v2448
      %2458 = vst.msk [vmem:[%s1234 + $0x71] sm:$0xff] %vm435, %v2449
      %v2459 = vld [vmem:[#allocation3] sm:$0xff]
      %v2460 = vld [vmem:[#allocation3 + $0x10] sm:$0xff]
      %v2461 = vld [vmem:[#allocation3 + $0x20] sm:$0xff]
      %v2462 = vld [vmem:[#allocation3 + $0x30] sm:$0xff]
      %v2463 = vld [vmem:[#allocation3 + $0x40] sm:$0xff]
      %v2464 = vld [vmem:[#allocation3 + $0x50] sm:$0xff]
      %v2465 = vld [vmem:[#allocation3 + $0x60] sm:$0xff]
      %v2466 = vld [vmem:[#allocation3 + $0x70] sm:$0xff]
      %v2467 = vld [vmem:[%s4] sm:$0xf]
      %v2468 = vpack.c.bf16 %v2460, %v2459
      %v2469 = vpack.c.bf16 %v2462, %v2461
      %v2470 = vpack.c.bf16 %v2464, %v2463
      %v2471 = vpack.c.bf16 %v2466, %v2465
      %v2472 = vld [vmem:[#allocation3 + $0x1] sm:$0xff]
      %v2473 = vld [vmem:[#allocation3 + $0x11] sm:$0xff]
      %v2474 = vld [vmem:[#allocation3 + $0x21] sm:$0xff]
      %v2475 = vld [vmem:[#allocation3 + $0x31] sm:$0xff]
      %v2476 = vld [vmem:[#allocation3 + $0x41] sm:$0xff]
      %v2477 = vld [vmem:[#allocation3 + $0x51] sm:$0xff]
      %v2478 = vld [vmem:[#allocation3 + $0x61] sm:$0xff]
      %v2479 = vld [vmem:[#allocation3 + $0x71] sm:$0xff]
      %s2480 = scalar_lea.vmem %s4, 4
      %v2481 = vld [vmem:[%s2480] sm:$0xf]
      %v2482 = vpack.c.bf16 %v2473, %v2472
      %v2483 = vpack.c.bf16 %v2475, %v2474
      %v2484 = vpack.c.bf16 %v2477, %v2476
      %v2485 = vpack.c.bf16 %v2479, %v2478
      %v2487 = vsel %vm435, %v2482, 0
      %v2490 = vsel %vm435, %v2483, 0
      %v2493 = vsel %vm435, %v2484, 0
      %v2496 = vsel %vm435, %v2485, 0
      %v2499 = vsel %vm1282, %v2481, 0
      %2501 = vmatpush.bf16.msra.mxu0 0
      %2502 = vmatpush.bf16.msra.mxu0 0
      %2503 = vmatpush.bf16.msra.mxu0 0
      %2504 = vmatpush.bf16.msra.mxu0 0
      %2505 = vmatpush.bf16.msra.mxu0 0
      %2506 = vmatpush.bf16.msra.mxu0 0
      %2507 = vmatpush.bf16.msra.mxu0 0
      %2508 = vmatpush.bf16.msra.mxu0 %v2499
      %2509 = vmatmul.bf16.gmra.mxu0 %v2487
      %v2510 = vpop.f32.mrf.mxu0
      %v2511 = vadd.f32 0.0, %v2510
      %v2512 = vpop.f32.mrf.mxu0
      %v2513 = vadd.f32 0.0, %v2512
      %2514 = vmatmul.bf16.gmra.mxu0 %v2490
      %v2515 = vpop.f32.mrf.mxu0
      %v2516 = vadd.f32 0.0, %v2515
      %v2517 = vpop.f32.mrf.mxu0
      %v2518 = vadd.f32 0.0, %v2517
      %2519 = vmatmul.bf16.gmra.mxu0 %v2493
      %v2520 = vpop.f32.mrf.mxu0
      %v2521 = vadd.f32 0.0, %v2520
      %v2522 = vpop.f32.mrf.mxu0
      %v2523 = vadd.f32 0.0, %v2522
      %2524 = vmatmul.bf16.gmra.mxu0 %v2496
      %v2525 = vpop.f32.mrf.mxu0
      %v2526 = vadd.f32 0.0, %v2525
      %v2527 = vpop.f32.mrf.mxu0
      %v2528 = vadd.f32 0.0, %v2527
      %2529 = vdwg.mxu0
      %v2531 = vsel %vm435, %v2468, 0
      %v2534 = vsel %vm435, %v2469, 0
      %v2537 = vsel %vm435, %v2470, 0
      %v2540 = vsel %vm435, %v2471, 0
      %v2543 = vsel %vm1282, %v2467, 0
      %2545 = vmatpush.bf16.msra.mxu0 0
      %2546 = vmatpush.bf16.msra.mxu0 0
      %2547 = vmatpush.bf16.msra.mxu0 0
      %2548 = vmatpush.bf16.msra.mxu0 0
      %2549 = vmatpush.bf16.msra.mxu0 0
      %2550 = vmatpush.bf16.msra.mxu0 0
      %2551 = vmatpush.bf16.msra.mxu0 0
      %2552 = vmatpush.bf16.msra.mxu0 %v2543
      %2553 = vmatmul.bf16.gmra.mxu0 %v2531
      %v2554 = vpop.f32.mrf.mxu0
      %v2555 = vadd.f32 %v2511, %v2554
      %v2556 = vpop.f32.mrf.mxu0
      %v2557 = vadd.f32 %v2513, %v2556
      %2558 = vmatmul.bf16.gmra.mxu0 %v2534
      %v2559 = vpop.f32.mrf.mxu0
      %v2560 = vadd.f32 %v2516, %v2559
      %v2561 = vpop.f32.mrf.mxu0
      %v2562 = vadd.f32 %v2518, %v2561
      %2563 = vmatmul.bf16.gmra.mxu0 %v2537
      %v2564 = vpop.f32.mrf.mxu0
      %v2565 = vadd.f32 %v2521, %v2564
      %v2566 = vpop.f32.mrf.mxu0
      %v2567 = vadd.f32 %v2523, %v2566
      %2568 = vmatmul.bf16.gmra.mxu0 %v2540
      %v2569 = vpop.f32.mrf.mxu0
      %v2570 = vadd.f32 %v2526, %v2569
      %v2571 = vpop.f32.mrf.mxu0
      %v2572 = vadd.f32 %v2528, %v2571
      %2573 = vdwg.mxu0
      %v2574 = vld [vmem:[#allocation3 + $0x2] sm:$0xff]
      %v2575 = vld [vmem:[#allocation3 + $0x12] sm:$0xff]
      %v2576 = vld [vmem:[#allocation3 + $0x22] sm:$0xff]
      %v2577 = vld [vmem:[#allocation3 + $0x32] sm:$0xff]
      %v2578 = vld [vmem:[#allocation3 + $0x42] sm:$0xff]
      %v2579 = vld [vmem:[#allocation3 + $0x52] sm:$0xff]
      %v2580 = vld [vmem:[#allocation3 + $0x62] sm:$0xff]
      %v2581 = vld [vmem:[#allocation3 + $0x72] sm:$0xff]
      %s2582 = scalar_lea.vmem %s4, 8
      %v2583 = vld [vmem:[%s2582] sm:$0xf]
      %v2584 = vpack.c.bf16 %v2575, %v2574
      %v2585 = vpack.c.bf16 %v2577, %v2576
      %v2586 = vpack.c.bf16 %v2579, %v2578
      %v2587 = vpack.c.bf16 %v2581, %v2580
      %v2589 = vsel %vm435, %v2584, 0
      %v2592 = vsel %vm435, %v2585, 0
      %v2595 = vsel %vm435, %v2586, 0
      %v2598 = vsel %vm435, %v2587, 0
      %v2601 = vsel %vm1282, %v2583, 0
      %2603 = vmatpush.bf16.msra.mxu0 0
      %2604 = vmatpush.bf16.msra.mxu0 0
      %2605 = vmatpush.bf16.msra.mxu0 0
      %2606 = vmatpush.bf16.msra.mxu0 0
      %2607 = vmatpush.bf16.msra.mxu0 0
      %2608 = vmatpush.bf16.msra.mxu0 0
      %2609 = vmatpush.bf16.msra.mxu0 0
      %2610 = vmatpush.bf16.msra.mxu0 %v2601
      %2611 = vmatmul.bf16.gmra.mxu0 %v2589
      %v2612 = vpop.f32.mrf.mxu0
      %v2613 = vadd.f32 0.0, %v2612
      %v2614 = vpop.f32.mrf.mxu0
      %v2615 = vadd.f32 0.0, %v2614
      %2616 = vmatmul.bf16.gmra.mxu0 %v2592
      %v2617 = vpop.f32.mrf.mxu0
      %v2618 = vadd.f32 0.0, %v2617
      %v2619 = vpop.f32.mrf.mxu0
      %v2620 = vadd.f32 0.0, %v2619
      %2621 = vmatmul.bf16.gmra.mxu0 %v2595
      %v2622 = vpop.f32.mrf.mxu0
      %v2623 = vadd.f32 0.0, %v2622
      %v2624 = vpop.f32.mrf.mxu0
      %v2625 = vadd.f32 0.0, %v2624
      %2626 = vmatmul.bf16.gmra.mxu0 %v2598
      %v2627 = vpop.f32.mrf.mxu0
      %v2628 = vadd.f32 0.0, %v2627
      %v2629 = vpop.f32.mrf.mxu0
      %v2630 = vadd.f32 0.0, %v2629
      %2631 = vdwg.mxu0
      %v2632 = vadd.f32 %v2555, %v2613
      %v2633 = vadd.f32 %v2557, %v2615
      %v2634 = vadd.f32 %v2560, %v2618
      %v2635 = vadd.f32 %v2562, %v2620
      %v2636 = vadd.f32 %v2565, %v2623
      %v2637 = vadd.f32 %v2567, %v2625
      %v2638 = vadd.f32 %v2570, %v2628
      %v2639 = vadd.f32 %v2572, %v2630
      %v2640 = vld [vmem:[%s1234] sm:$0xff]
      %v2641 = vld [vmem:[%s1234 + $0x10] sm:$0xff]
      %v2642 = vld [vmem:[%s1234 + $0x20] sm:$0xff]
      %v2643 = vld [vmem:[%s1234 + $0x30] sm:$0xff]
      %v2644 = vld [vmem:[%s1234 + $0x40] sm:$0xff]
      %v2645 = vld [vmem:[%s1234 + $0x50] sm:$0xff]
      %v2646 = vld [vmem:[%s1234 + $0x60] sm:$0xff]
      %v2647 = vld [vmem:[%s1234 + $0x70] sm:$0xff]
      %s2648 = scalar_lea.vmem %s4, 12
      %v2649 = vld [vmem:[%s2648] sm:$0xf]
      %v2650 = vpack.c.bf16 %v2641, %v2640
      %v2651 = vpack.c.bf16 %v2643, %v2642
      %v2652 = vpack.c.bf16 %v2645, %v2644
      %v2653 = vpack.c.bf16 %v2647, %v2646
      %v2655 = vsel %vm435, %v2650, 0
      %v2658 = vsel %vm435, %v2651, 0
      %v2661 = vsel %vm435, %v2652, 0
      %v2664 = vsel %vm435, %v2653, 0
      %v2667 = vsel %vm1282, %v2649, 0
      %2669 = vmatpush.bf16.msra.mxu0 0
      %2670 = vmatpush.bf16.msra.mxu0 0
      %2671 = vmatpush.bf16.msra.mxu0 0
      %2672 = vmatpush.bf16.msra.mxu0 0
      %2673 = vmatpush.bf16.msra.mxu0 0
      %2674 = vmatpush.bf16.msra.mxu0 0
      %2675 = vmatpush.bf16.msra.mxu0 0
      %2676 = vmatpush.bf16.msra.mxu0 %v2667
      %2677 = vmatmul.bf16.gmra.mxu0 %v2655
      %v2678 = vpop.f32.mrf.mxu0
      %v2679 = vadd.f32 0.0, %v2678
      %v2680 = vpop.f32.mrf.mxu0
      %v2681 = vadd.f32 0.0, %v2680
      %2682 = vmatmul.bf16.gmra.mxu0 %v2658
      %v2683 = vpop.f32.mrf.mxu0
      %v2684 = vadd.f32 0.0, %v2683
      %v2685 = vpop.f32.mrf.mxu0
      %v2686 = vadd.f32 0.0, %v2685
      %2687 = vmatmul.bf16.gmra.mxu0 %v2661
      %v2688 = vpop.f32.mrf.mxu0
      %v2689 = vadd.f32 0.0, %v2688
      %v2690 = vpop.f32.mrf.mxu0
      %v2691 = vadd.f32 0.0, %v2690
      %2692 = vmatmul.bf16.gmra.mxu0 %v2664
      %v2693 = vpop.f32.mrf.mxu0
      %v2694 = vadd.f32 0.0, %v2693
      %v2695 = vpop.f32.mrf.mxu0
      %v2696 = vadd.f32 0.0, %v2695
      %2697 = vdwg.mxu0
      %v2698 = vadd.f32 %v2632, %v2679
      %v2699 = vadd.f32 %v2633, %v2681
      %v2700 = vadd.f32 %v2634, %v2684
      %v2701 = vadd.f32 %v2635, %v2686
      %v2702 = vadd.f32 %v2636, %v2689
      %v2703 = vadd.f32 %v2637, %v2691
      %v2704 = vadd.f32 %v2638, %v2694
      %v2705 = vadd.f32 %v2639, %v2696
      %v2706 = vld [vmem:[%s1234 + $0x1] sm:$0xff]
      %v2707 = vld [vmem:[%s1234 + $0x11] sm:$0xff]
      %v2708 = vld [vmem:[%s1234 + $0x21] sm:$0xff]
      %v2709 = vld [vmem:[%s1234 + $0x31] sm:$0xff]
      %v2710 = vld [vmem:[%s1234 + $0x41] sm:$0xff]
      %v2711 = vld [vmem:[%s1234 + $0x51] sm:$0xff]
      %v2712 = vld [vmem:[%s1234 + $0x61] sm:$0xff]
      %v2713 = vld [vmem:[%s1234 + $0x71] sm:$0xff]
      %s2714 = scalar_lea.vmem %s4, 16
      %v2715 = vld [vmem:[%s2714] sm:$0xf]
      %v2716 = vpack.c.bf16 %v2707, %v2706
      %v2717 = vpack.c.bf16 %v2709, %v2708
      %v2718 = vpack.c.bf16 %v2711, %v2710
      %v2719 = vpack.c.bf16 %v2713, %v2712
      %v2721 = vsel %vm435, %v2716, 0
      %v2724 = vsel %vm435, %v2717, 0
      %v2727 = vsel %vm435, %v2718, 0
      %v2730 = vsel %vm435, %v2719, 0
      %v2733 = vsel %vm1282, %v2715, 0
      %2735 = vmatpush.bf16.msra.mxu0 0
      %2736 = vmatpush.bf16.msra.mxu0 0
      %2737 = vmatpush.bf16.msra.mxu0 0
      %2738 = vmatpush.bf16.msra.mxu0 0
      %2739 = vmatpush.bf16.msra.mxu0 0
      %2740 = vmatpush.bf16.msra.mxu0 0
      %2741 = vmatpush.bf16.msra.mxu0 0
      %2742 = vmatpush.bf16.msra.mxu0 %v2733
      %2743 = vmatmul.bf16.gmra.mxu0 %v2721
      %v2744 = vpop.f32.mrf.mxu0
      %v2745 = vadd.f32 0.0, %v2744
      %v2746 = vpop.f32.mrf.mxu0
      %v2747 = vadd.f32 0.0, %v2746
      %2748 = vmatmul.bf16.gmra.mxu0 %v2724
      %v2749 = vpop.f32.mrf.mxu0
      %v2750 = vadd.f32 0.0, %v2749
      %v2751 = vpop.f32.mrf.mxu0
      %v2752 = vadd.f32 0.0, %v2751
      %2753 = vmatmul.bf16.gmra.mxu0 %v2727
      %v2754 = vpop.f32.mrf.mxu0
      %v2755 = vadd.f32 0.0, %v2754
      %v2756 = vpop.f32.mrf.mxu0
      %v2757 = vadd.f32 0.0, %v2756
      %2758 = vmatmul.bf16.gmra.mxu0 %v2730
      %v2759 = vpop.f32.mrf.mxu0
      %v2760 = vadd.f32 0.0, %v2759
      %v2761 = vpop.f32.mrf.mxu0
      %v2762 = vadd.f32 0.0, %v2761
      %2763 = vdwg.mxu0
      %v2764 = vadd.f32 %v2698, %v2745
      %v2765 = vadd.f32 %v2699, %v2747
      %v2766 = vadd.f32 %v2700, %v2750
      %v2767 = vadd.f32 %v2701, %v2752
      %v2768 = vadd.f32 %v2702, %v2755
      %v2769 = vadd.f32 %v2703, %v2757
      %v2770 = vadd.f32 %v2704, %v2760
      %v2771 = vadd.f32 %v2705, %v2762
      %v2772 = vld [vmem:[%s1234 + $0x2] sm:$0xff]
      %v2773 = vld [vmem:[%s1234 + $0x12] sm:$0xff]
      %v2774 = vld [vmem:[%s1234 + $0x22] sm:$0xff]
      %v2775 = vld [vmem:[%s1234 + $0x32] sm:$0xff]
      %v2776 = vld [vmem:[%s1234 + $0x42] sm:$0xff]
      %v2777 = vld [vmem:[%s1234 + $0x52] sm:$0xff]
      %v2778 = vld [vmem:[%s1234 + $0x62] sm:$0xff]
      %v2779 = vld [vmem:[%s1234 + $0x72] sm:$0xff]
      %s2780 = scalar_lea.vmem %s4, 20
      %v2781 = vld [vmem:[%s2780] sm:$0xf]
      %v2782 = vpack.c.bf16 %v2773, %v2772
      %v2783 = vpack.c.bf16 %v2775, %v2774
      %v2784 = vpack.c.bf16 %v2777, %v2776
      %v2785 = vpack.c.bf16 %v2779, %v2778
      %v2787 = vsel %vm435, %v2782, 0
      %v2790 = vsel %vm435, %v2783, 0
      %v2793 = vsel %vm435, %v2784, 0
      %v2796 = vsel %vm435, %v2785, 0
      %v2799 = vsel %vm1282, %v2781, 0
      %2801 = vmatpush.bf16.msra.mxu0 0
      %2802 = vmatpush.bf16.msra.mxu0 0
      %2803 = vmatpush.bf16.msra.mxu0 0
      %2804 = vmatpush.bf16.msra.mxu0 0
      %2805 = vmatpush.bf16.msra.mxu0 0
      %2806 = vmatpush.bf16.msra.mxu0 0
      %2807 = vmatpush.bf16.msra.mxu0 0
      %2808 = vmatpush.bf16.msra.mxu0 %v2799
      %2809 = vmatmul.bf16.gmra.mxu0 %v2787
      %v2810 = vpop.f32.mrf.mxu0
      %v2811 = vadd.f32 0.0, %v2810
      %v2812 = vpop.f32.mrf.mxu0
      %v2813 = vadd.f32 0.0, %v2812
      %2814 = vmatmul.bf16.gmra.mxu0 %v2790
      %v2815 = vpop.f32.mrf.mxu0
      %v2816 = vadd.f32 0.0, %v2815
      %v2817 = vpop.f32.mrf.mxu0
      %v2818 = vadd.f32 0.0, %v2817
      %2819 = vmatmul.bf16.gmra.mxu0 %v2793
      %v2820 = vpop.f32.mrf.mxu0
      %v2821 = vadd.f32 0.0, %v2820
      %v2822 = vpop.f32.mrf.mxu0
      %v2823 = vadd.f32 0.0, %v2822
      %2824 = vmatmul.bf16.gmra.mxu0 %v2796
      %v2825 = vpop.f32.mrf.mxu0
      %v2826 = vadd.f32 0.0, %v2825
      %v2827 = vpop.f32.mrf.mxu0
      %v2828 = vadd.f32 0.0, %v2827
      %2829 = vdwg.mxu0
      %v2830 = vadd.f32 %v2764, %v2811
      %v2831 = vadd.f32 %v2765, %v2813
      %v2832 = vadd.f32 %v2766, %v2816
      %v2833 = vadd.f32 %v2767, %v2818
      %v2834 = vadd.f32 %v2768, %v2821
      %v2835 = vadd.f32 %v2769, %v2823
      %v2836 = vadd.f32 %v2770, %v2826
      %v2837 = vadd.f32 %v2771, %v2828
      %v2838 = vld [vmem:[%s1623] sm:$0xff]
      %v2839 = vld [vmem:[%s1623 + $0x10] sm:$0xff]
      %v2840 = vld [vmem:[%s1623 + $0x20] sm:$0xff]
      %v2841 = vld [vmem:[%s1623 + $0x30] sm:$0xff]
      %v2842 = vld [vmem:[%s1623 + $0x40] sm:$0xff]
      %v2843 = vld [vmem:[%s1623 + $0x50] sm:$0xff]
      %v2844 = vld [vmem:[%s1623 + $0x60] sm:$0xff]
      %v2845 = vld [vmem:[%s1623 + $0x70] sm:$0xff]
      %s2846 = scalar_lea.vmem %s4, 24
      %v2847 = vld [vmem:[%s2846] sm:$0xf]
      %v2848 = vpack.c.bf16 %v2839, %v2838
      %v2849 = vpack.c.bf16 %v2841, %v2840
      %v2850 = vpack.c.bf16 %v2843, %v2842
      %v2851 = vpack.c.bf16 %v2845, %v2844
      %v2853 = vsel %vm435, %v2848, 0
      %v2856 = vsel %vm435, %v2849, 0
      %v2859 = vsel %vm435, %v2850, 0
      %v2862 = vsel %vm435, %v2851, 0
      %v2865 = vsel %vm1282, %v2847, 0
      %2867 = vmatpush.bf16.msra.mxu0 0
      %2868 = vmatpush.bf16.msra.mxu0 0
      %2869 = vmatpush.bf16.msra.mxu0 0
      %2870 = vmatpush.bf16.msra.mxu0 0
      %2871 = vmatpush.bf16.msra.mxu0 0
      %2872 = vmatpush.bf16.msra.mxu0 0
      %2873 = vmatpush.bf16.msra.mxu0 0
      %2874 = vmatpush.bf16.msra.mxu0 %v2865
      %2875 = vmatmul.bf16.gmra.mxu0 %v2853
      %v2876 = vpop.f32.mrf.mxu0
      %v2877 = vadd.f32 0.0, %v2876
      %v2878 = vpop.f32.mrf.mxu0
      %v2879 = vadd.f32 0.0, %v2878
      %2880 = vmatmul.bf16.gmra.mxu0 %v2856
      %v2881 = vpop.f32.mrf.mxu0
      %v2882 = vadd.f32 0.0, %v2881
      %v2883 = vpop.f32.mrf.mxu0
      %v2884 = vadd.f32 0.0, %v2883
      %2885 = vmatmul.bf16.gmra.mxu0 %v2859
      %v2886 = vpop.f32.mrf.mxu0
      %v2887 = vadd.f32 0.0, %v2886
      %v2888 = vpop.f32.mrf.mxu0
      %v2889 = vadd.f32 0.0, %v2888
      %2890 = vmatmul.bf16.gmra.mxu0 %v2862
      %v2891 = vpop.f32.mrf.mxu0
      %v2892 = vadd.f32 0.0, %v2891
      %v2893 = vpop.f32.mrf.mxu0
      %v2894 = vadd.f32 0.0, %v2893
      %2895 = vdwg.mxu0
      %v2896 = vadd.f32 %v2830, %v2877
      %v2897 = vadd.f32 %v2831, %v2879
      %v2898 = vadd.f32 %v2832, %v2882
      %v2899 = vadd.f32 %v2833, %v2884
      %v2900 = vadd.f32 %v2834, %v2887
      %v2901 = vadd.f32 %v2835, %v2889
      %v2902 = vadd.f32 %v2836, %v2892
      %v2903 = vadd.f32 %v2837, %v2894
      %v2904 = vld [vmem:[%s1623 + $0x1] sm:$0xff]
      %v2905 = vld [vmem:[%s1623 + $0x11] sm:$0xff]
      %v2906 = vld [vmem:[%s1623 + $0x21] sm:$0xff]
      %v2907 = vld [vmem:[%s1623 + $0x31] sm:$0xff]
      %v2908 = vld [vmem:[%s1623 + $0x41] sm:$0xff]
      %v2909 = vld [vmem:[%s1623 + $0x51] sm:$0xff]
      %v2910 = vld [vmem:[%s1623 + $0x61] sm:$0xff]
      %v2911 = vld [vmem:[%s1623 + $0x71] sm:$0xff]
      %s2912 = scalar_lea.vmem %s4, 28
      %v2913 = vld [vmem:[%s2912] sm:$0xf]
      %v2914 = vpack.c.bf16 %v2905, %v2904
      %v2915 = vpack.c.bf16 %v2907, %v2906
      %v2916 = vpack.c.bf16 %v2909, %v2908
      %v2917 = vpack.c.bf16 %v2911, %v2910
      %v2919 = vsel %vm435, %v2914, 0
      %v2922 = vsel %vm435, %v2915, 0
      %v2925 = vsel %vm435, %v2916, 0
      %v2928 = vsel %vm435, %v2917, 0
      %v2931 = vsel %vm1282, %v2913, 0
      %2933 = vmatpush.bf16.msra.mxu0 0
      %2934 = vmatpush.bf16.msra.mxu0 0
      %2935 = vmatpush.bf16.msra.mxu0 0
      %2936 = vmatpush.bf16.msra.mxu0 0
      %2937 = vmatpush.bf16.msra.mxu0 0
      %2938 = vmatpush.bf16.msra.mxu0 0
      %2939 = vmatpush.bf16.msra.mxu0 0
      %2940 = vmatpush.bf16.msra.mxu0 %v2931
      %2941 = vmatmul.bf16.gmra.mxu0 %v2919
      %v2942 = vpop.f32.mrf.mxu0
      %v2943 = vadd.f32 0.0, %v2942
      %v2944 = vpop.f32.mrf.mxu0
      %v2945 = vadd.f32 0.0, %v2944
      %2946 = vmatmul.bf16.gmra.mxu0 %v2922
      %v2947 = vpop.f32.mrf.mxu0
      %v2948 = vadd.f32 0.0, %v2947
      %v2949 = vpop.f32.mrf.mxu0
      %v2950 = vadd.f32 0.0, %v2949
      %2951 = vmatmul.bf16.gmra.mxu0 %v2925
      %v2952 = vpop.f32.mrf.mxu0
      %v2953 = vadd.f32 0.0, %v2952
      %v2954 = vpop.f32.mrf.mxu0
      %v2955 = vadd.f32 0.0, %v2954
      %2956 = vmatmul.bf16.gmra.mxu0 %v2928
      %v2957 = vpop.f32.mrf.mxu0
      %v2958 = vadd.f32 0.0, %v2957
      %v2959 = vpop.f32.mrf.mxu0
      %v2960 = vadd.f32 0.0, %v2959
      %2961 = vdwg.mxu0
      %v2962 = vadd.f32 %v2896, %v2943
      %v2963 = vadd.f32 %v2897, %v2945
      %v2964 = vadd.f32 %v2898, %v2948
      %v2965 = vadd.f32 %v2899, %v2950
      %v2966 = vadd.f32 %v2900, %v2953
      %v2967 = vadd.f32 %v2901, %v2955
      %v2968 = vadd.f32 %v2902, %v2958
      %v2969 = vadd.f32 %v2903, %v2960
      %v2970 = vld [vmem:[%s1623 + $0x2] sm:$0xff]
      %v2971 = vld [vmem:[%s1623 + $0x12] sm:$0xff]
      %v2972 = vld [vmem:[%s1623 + $0x22] sm:$0xff]
      %v2973 = vld [vmem:[%s1623 + $0x32] sm:$0xff]
      %v2974 = vld [vmem:[%s1623 + $0x42] sm:$0xff]
      %v2975 = vld [vmem:[%s1623 + $0x52] sm:$0xff]
      %v2976 = vld [vmem:[%s1623 + $0x62] sm:$0xff]
      %v2977 = vld [vmem:[%s1623 + $0x72] sm:$0xff]
      %s2978 = scalar_lea.vmem %s4, 32
      %v2979 = vld [vmem:[%s2978] sm:$0xf]
      %v2980 = vpack.c.bf16 %v2971, %v2970
      %v2981 = vpack.c.bf16 %v2973, %v2972
      %v2982 = vpack.c.bf16 %v2975, %v2974
      %v2983 = vpack.c.bf16 %v2977, %v2976
      %v2985 = vsel %vm435, %v2980, 0
      %v2988 = vsel %vm435, %v2981, 0
      %v2991 = vsel %vm435, %v2982, 0
      %v2994 = vsel %vm435, %v2983, 0
      %v2997 = vsel %vm1282, %v2979, 0
      %2999 = vmatpush.bf16.msra.mxu0 0
      %3000 = vmatpush.bf16.msra.mxu0 0
      %3001 = vmatpush.bf16.msra.mxu0 0
      %3002 = vmatpush.bf16.msra.mxu0 0
      %3003 = vmatpush.bf16.msra.mxu0 0
      %3004 = vmatpush.bf16.msra.mxu0 0
      %3005 = vmatpush.bf16.msra.mxu0 0
      %3006 = vmatpush.bf16.msra.mxu0 %v2997
      %3007 = vmatmul.bf16.gmra.mxu0 %v2985
      %v3008 = vpop.f32.mrf.mxu0
      %v3009 = vadd.f32 0.0, %v3008
      %v3010 = vpop.f32.mrf.mxu0
      %v3011 = vadd.f32 0.0, %v3010
      %3012 = vmatmul.bf16.gmra.mxu0 %v2988
      %v3013 = vpop.f32.mrf.mxu0
      %v3014 = vadd.f32 0.0, %v3013
      %v3015 = vpop.f32.mrf.mxu0
      %v3016 = vadd.f32 0.0, %v3015
      %3017 = vmatmul.bf16.gmra.mxu0 %v2991
      %v3018 = vpop.f32.mrf.mxu0
      %v3019 = vadd.f32 0.0, %v3018
      %v3020 = vpop.f32.mrf.mxu0
      %v3021 = vadd.f32 0.0, %v3020
      %3022 = vmatmul.bf16.gmra.mxu0 %v2994
      %v3023 = vpop.f32.mrf.mxu0
      %v3024 = vadd.f32 0.0, %v3023
      %v3025 = vpop.f32.mrf.mxu0
      %v3026 = vadd.f32 0.0, %v3025
      %3027 = vdwg.mxu0
      %v3028 = vadd.f32 %v2962, %v3009
      %v3029 = vadd.f32 %v2963, %v3011
      %v3030 = vadd.f32 %v2964, %v3014
      %v3031 = vadd.f32 %v2965, %v3016
      %v3032 = vadd.f32 %v2966, %v3019
      %v3033 = vadd.f32 %v2967, %v3021
      %v3034 = vadd.f32 %v2968, %v3024
      %v3035 = vadd.f32 %v2969, %v3026
      %v3036 = vperm.slane %v2450, 0
      %v3037 = vadd.f32 %v3028, %v3036
      %v3038 = vadd.f32 %v3029, %v3036
      %v3039 = vadd.f32 %v3030, %v3036
      %v3040 = vadd.f32 %v3031, %v3036
      %v3041 = vadd.f32 %v3032, %v3036
      %v3042 = vadd.f32 %v3033, %v3036
      %v3043 = vadd.f32 %v3034, %v3036
      %v3044 = vadd.f32 %v3035, %v3036
      %v3045 = vadd.f32 %v3037, %v1839
      %v3046 = vadd.f32 %v3038, %v1840
      %v3047 = vadd.f32 %v3039, %v1841
      %v3048 = vadd.f32 %v3040, %v1842
      %v3049 = vadd.f32 %v3041, %v1843
      %v3050 = vadd.f32 %v3042, %v1844
      %v3051 = vadd.f32 %v3043, %v1845
      %v3052 = vadd.f32 %v3044, %v1846
      %v3053 = vmax.f32 %v3045, 0.0
      %v3054 = vmax.f32 %v3046, 0.0
      %v3055 = vmax.f32 %v3047, 0.0
      %v3056 = vmax.f32 %v3048, 0.0
      %v3057 = vmax.f32 %v3049, 0.0
      %v3058 = vmax.f32 %v3050, 0.0
      %v3059 = vmax.f32 %v3051, 0.0
      %v3060 = vmax.f32 %v3052, 0.0
      %v3061 = vld [vmem:[%s6] sm:$0xf]
      %v3062 = vpack.c.bf16 %v3054, %v3053
      %v3063 = vpack.c.bf16 %v3056, %v3055
      %v3064 = vpack.c.bf16 %v3058, %v3057
      %v3065 = vpack.c.bf16 %v3060, %v3059
      %v3066 = vld [vmem:[%s7] sm:$0xf]
      %v3067 = vpack.c.bf16 %v1840, %v1839
      %v3068 = vpack.c.bf16 %v1842, %v1841
      %v3069 = vpack.c.bf16 %v1844, %v1843
      %v3070 = vpack.c.bf16 %v1846, %v1845
      %v3072 = vsel %vm435, %v3067, 0
      %v3075 = vsel %vm435, %v3068, 0
      %v3078 = vsel %vm435, %v3069, 0
      %v3081 = vsel %vm435, %v3070, 0
      %v3084 = vsel %vm1282, %v3066, 0
      %3086 = vmatpush.bf16.msra.mxu0 0
      %3087 = vmatpush.bf16.msra.mxu0 0
      %3088 = vmatpush.bf16.msra.mxu0 0
      %3089 = vmatpush.bf16.msra.mxu0 0
      %3090 = vmatpush.bf16.msra.mxu0 0
      %3091 = vmatpush.bf16.msra.mxu0 0
      %3092 = vmatpush.bf16.msra.mxu0 0
      %3093 = vmatpush.bf16.msra.mxu0 %v3084
      %3094 = vmatmul.bf16.gmra.mxu0 %v3072
      %v3095 = vpop.f32.mrf.mxu0
      %v3096 = vadd.f32 0.0, %v3095
      %v3097 = vpop.f32.mrf.mxu0
      %v3098 = vadd.f32 0.0, %v3097
      %3099 = vmatmul.bf16.gmra.mxu0 %v3075
      %v3100 = vpop.f32.mrf.mxu0
      %v3101 = vadd.f32 0.0, %v3100
      %v3102 = vpop.f32.mrf.mxu0
      %v3103 = vadd.f32 0.0, %v3102
      %3104 = vmatmul.bf16.gmra.mxu0 %v3078
      %v3105 = vpop.f32.mrf.mxu0
      %v3106 = vadd.f32 0.0, %v3105
      %v3107 = vpop.f32.mrf.mxu0
      %v3108 = vadd.f32 0.0, %v3107
      %3109 = vmatmul.bf16.gmra.mxu0 %v3081
      %v3110 = vpop.f32.mrf.mxu0
      %v3111 = vadd.f32 0.0, %v3110
      %v3112 = vpop.f32.mrf.mxu0
      %v3113 = vadd.f32 0.0, %v3112
      %3114 = vdwg.mxu0
      %v3116 = vsel %vm435, %v3062, 0
      %v3119 = vsel %vm435, %v3063, 0
      %v3122 = vsel %vm435, %v3064, 0
      %v3125 = vsel %vm435, %v3065, 0
      %v3128 = vsel %vm1282, %v3061, 0
      %3130 = vmatpush.bf16.msra.mxu0 0
      %3131 = vmatpush.bf16.msra.mxu0 0
      %3132 = vmatpush.bf16.msra.mxu0 0
      %3133 = vmatpush.bf16.msra.mxu0 0
      %3134 = vmatpush.bf16.msra.mxu0 0
      %3135 = vmatpush.bf16.msra.mxu0 0
      %3136 = vmatpush.bf16.msra.mxu0 0
      %3137 = vmatpush.bf16.msra.mxu0 %v3128
      %3138 = vmatmul.bf16.gmra.mxu0 %v3116
      %v3139 = vpop.f32.mrf.mxu0
      %v3140 = vadd.f32 %v3096, %v3139
      %v3141 = vpop.f32.mrf.mxu0
      %v3142 = vadd.f32 %v3098, %v3141
      %3143 = vmatmul.bf16.gmra.mxu0 %v3119
      %v3144 = vpop.f32.mrf.mxu0
      %v3145 = vadd.f32 %v3101, %v3144
      %v3146 = vpop.f32.mrf.mxu0
      %v3147 = vadd.f32 %v3103, %v3146
      %3148 = vmatmul.bf16.gmra.mxu0 %v3122
      %v3149 = vpop.f32.mrf.mxu0
      %v3150 = vadd.f32 %v3106, %v3149
      %v3151 = vpop.f32.mrf.mxu0
      %v3152 = vadd.f32 %v3108, %v3151
      %3153 = vmatmul.bf16.gmra.mxu0 %v3125
      %v3154 = vpop.f32.mrf.mxu0
      %v3155 = vadd.f32 %v3111, %v3154
      %v3156 = vpop.f32.mrf.mxu0
      %v3157 = vadd.f32 %v3113, %v3156
      %3158 = vdwg.mxu0
      %v3159 = vld [vmem:[%s9 + $0x5] sm:$0x1]
      %v3160 = vperm.slane %v3159, 0
      %v3161 = vadd.f32 %v3140, %v3160
      %v3162 = vadd.f32 %v3142, %v3160
      %v3163 = vadd.f32 %v3145, %v3160
      %v3164 = vadd.f32 %v3147, %v3160
      %v3165 = vadd.f32 %v3150, %v3160
      %v3166 = vadd.f32 %v3152, %v3160
      %v3167 = vadd.f32 %v3155, %v3160
      %v3168 = vadd.f32 %v3157, %v3160
      %v3169 = vld [vmem:[%s8] sm:$0x3]
      %v3171 = vsel %vm603, %v3169, 0
      %3173 = vmatpush.bf16.msra.mxu0 0
      %3174 = vmatpush.bf16.msra.mxu0 0
      %3175 = vmatpush.bf16.msra.mxu0 0
      %3176 = vmatpush.bf16.msra.mxu0 0
      %3177 = vmatpush.bf16.msra.mxu0 0
      %3178 = vmatpush.bf16.msra.mxu0 0
      %3179 = vmatpush.bf16.msra.mxu0 0
      %3180 = vmatpush.bf16.msra.mxu0 %v3171
      %3181 = vmatmul.bf16.gmra.mxu0 %v592
      %v3182 = vpop.f32.mrf.mxu0
      %v3183 = vadd.f32 0.0, %v3182
      %v3184 = vpop.f32.mrf.mxu0
      %v3185 = vadd.f32 0.0, %v3184
      %3186 = vmatmul.bf16.gmra.mxu0 %v595
      %v3187 = vpop.f32.mrf.mxu0
      %v3188 = vadd.f32 0.0, %v3187
      %v3189 = vpop.f32.mrf.mxu0
      %v3190 = vadd.f32 0.0, %v3189
      %3191 = vmatmul.bf16.gmra.mxu0 %v598
      %v3192 = vpop.f32.mrf.mxu0
      %v3193 = vadd.f32 0.0, %v3192
      %v3194 = vpop.f32.mrf.mxu0
      %v3195 = vadd.f32 0.0, %v3194
      %3196 = vmatmul.bf16.gmra.mxu0 %v601
      %v3197 = vpop.f32.mrf.mxu0
      %v3198 = vadd.f32 0.0, %v3197
      %v3199 = vpop.f32.mrf.mxu0
      %v3200 = vadd.f32 0.0, %v3199
      %3201 = vdwg.mxu0
      %v3202 = vadd.f32 %v3161, %v3183
      %v3203 = vadd.f32 %v3162, %v3185
      %v3204 = vadd.f32 %v3163, %v3188
      %v3205 = vadd.f32 %v3164, %v3190
      %v3206 = vadd.f32 %v3165, %v3193
      %v3207 = vadd.f32 %v3166, %v3195
      %v3208 = vadd.f32 %v3167, %v3198
      %v3209 = vadd.f32 %v3168, %v3200
      %v3210 = vmax.f32 %v3202, 0.0
      %v3211 = vmax.f32 %v3203, 0.0
      %v3212 = vmax.f32 %v3204, 0.0
      %v3213 = vmax.f32 %v3205, 0.0
      %v3214 = vmax.f32 %v3206, 0.0
      %v3215 = vmax.f32 %v3207, 0.0
      %v3216 = vmax.f32 %v3208, 0.0
      %v3217 = vmax.f32 %v3209, 0.0
      %3218 = vst.msk [vmem:[%s359] sm:$0xff] %vm435, %v3210
      %3219 = vst.msk [vmem:[%s359 + $0x8] sm:$0xff] %vm435, %v3211
      %3220 = vst.msk [vmem:[%s359 + $0x10] sm:$0xff] %vm435, %v3212
      %3221 = vst.msk [vmem:[%s359 + $0x18] sm:$0xff] %vm435, %v3213
      %3222 = vst.msk [vmem:[%s359 + $0x20] sm:$0xff] %vm435, %v3214
      %3223 = vst.msk [vmem:[%s359 + $0x28] sm:$0xff] %vm435, %v3215
      %3224 = vst.msk [vmem:[%s359 + $0x30] sm:$0xff] %vm435, %v3216
      %3225 = vst.msk [vmem:[%s359 + $0x38] sm:$0xff] %vm435, %v3217
      %p3226 = scmp.lt.s32.totalorder %s21, 1
      %s3227 = scalar_select %p3226, %s21, 1
      %s3228 = smul.addr %s3227, 8
      %s3229 = smul.addr %s3228, 8
      %s3230 = scalar_lea.vmem %s10, %s3229
      // Predicated region
      $region61: #{tree_forward.1} parent=59 // pred_check
        %p3231 = pneg %p254
      $region62: #{tree_forward.1} parent=59 // pred_check_branch
        %3233 = sbr.rel (%p3231) target = $region64
      $region63: #{tree_forward.1} parent=59 // pred_region
        _
      $region64: #{tree_forward.1} parent=59 // pred_fallthru
        _
    $region60: #{tree_forward.1} parent=5 // pred_fallthru
      _
    %p3234 = scmp.le.s32.totalorder 2, %s16
    // Predicated region
    $region65: #{tree_forward.1} parent=5 // pred_check
      %p3235 = pneg %p3234
    $region66: #{tree_forward.1} parent=5 // pred_check_branch
      %3237 = sbr.rel (%p3235) target = $region68
    $region67: #{tree_forward.1} parent=5 // pred_region
      %s3238 = ssub.s32 %s16, 2
      // Predicated region
      $region69: #{tree_forward.1} parent=67 // pred_check
        %p3239 = pneg %p260
      $region70: #{tree_forward.1} parent=67 // pred_check_branch
        %3241 = sbr.rel (%p3239) target = $region72
      $region71: #{tree_forward.1} parent=67 // pred_region
        %p3242 = scmp.lt.s32.totalorder %s22, 1
        %s3243 = scalar_select %p3242, %s22, 1
        %s3244 = smul.addr %s3243, 8
        %s3245 = smul.addr %s3244, 8
        %s3246 = scalar_lea.vmem %s10, %s3245
      $region72: #{tree_forward.1} parent=67 // pred_fallthru
        _
    $region68: #{tree_forward.1} parent=5 // pred_fallthru
      _
  $region6: #{tree_forward.1} parent=0 // loop_footer
    %s20 = sadd.s32 1, %s16
  $region7: #{tree_forward.1} parent=0 // loop_footer_branch
    %15 = sbr.rel target = $region3
  $region8: #{tree_forward.1} parent=0 // loop_exit
    _

</llo_original>
